<compile_context>
chip_gen: v5e
topology: v5e:2x2
jax: 0.10.0
libtpu: 0.0.40
codegen_flags: <defaults>
</compile_context>

<pallas_src>
import jax
import jax.numpy as jnp
from jax import lax
from jax.experimental import pallas as pl
from jax.experimental.pallas import tpu as pltpu

# ----------------------------- small config ---------------------------------
B = 2               # batch
T = 16              # num frames
D_MOTION = 12       # dataset.motion_dim
D_MASK = 1          # config.d_mask
D_ENC_H = 32        # config.d_encoder_h
D_MODEL = 32        # config.d_model
D_DEC_H = 32        # config.d_decoder_h
D_HEAD = 8          # config.d_head
N_HEAD = 4          # config.n_head
D_PFF = 64          # config.d_pff_inner
N_LAYER = 2         # config.n_layer
CONTEXT_FRAMES = 4  # config.context_frames
LN_EPS = 1e-5

HD = N_HEAD * D_HEAD          # 32
D_OUT_PAD = 128               # lane-dense output width (sliced to D_MOTION outside)
NEG_INF = -1e30

# Rows per grid step.  BATCH_CHUNK = B -> single grid step (single-TC v5e/v6e).
BATCH_CHUNK = B
R_CHUNK = BATCH_CHUNK * T     # activation-slab rows per step

# ---------------- packed per-frame row slab (R, ROW_W) columns ----------------
ROW_W = 64
COL_DM = D_MOTION             # data-mask column (12)
COL_KP = 16                   # keyframe positional embedding columns [16:48)
ENC_IN_W = 16                 # [motion | dm | 0-pad] fed to the encoder matmul

# ------------- packed weight/const slab (SLAB_ROWS x 128 lanes, f32) ----------
OFF_ENC1 = 0                       # (ENC_IN_W, D_ENC_H): rows 0..11 Wm, row 12 Wmask
OFF_ENC2 = OFF_ENC1 + ENC_IN_W     # (D_ENC_H, D_MODEL)
OFF_LAYER = OFF_ENC2 + D_ENC_H     # per-layer block start
QKV_OFF = 0                        # (D_MODEL, 3*HD)  columns [q(scaled) | k | v]
WO_OFF = QKV_OFF + D_MODEL         # (HD, D_MODEL)
PW1_OFF = WO_OFF + HD              # (D_MODEL, D_PFF)
PW2_OFF = PW1_OFF + D_MODEL        # (D_PFF, D_MODEL)
LAYER_ROWS = PW2_OFF + D_PFF       # 160 rows per layer
OFF_DEC1 = OFF_LAYER + N_LAYER * LAYER_ROWS   # (D_MODEL, D_DEC_H)
OFF_DEC2 = OFF_DEC1 + D_MODEL                 # (D_DEC_H, D_OUT_PAD), zero-padded
OFF_VEC = OFF_DEC2 + D_DEC_H                  # bias / LN / PReLU rows

# vec rows (relative to OFF_VEC)
VR_ENC_B1 = 0
VR_ENC_B2 = 1
VR_ALN_G = 2
VR_ALN_B = VR_ALN_G + N_LAYER
VR_PLN_G = VR_ALN_B + N_LAYER
VR_PLN_B = VR_PLN_G + N_LAYER
VR_PB1 = VR_PLN_B + N_LAYER
VR_PB2 = VR_PB1 + N_LAYER
VR_FLN_G = VR_PB2 + N_LAYER
VR_FLN_B = VR_FLN_G + 1
VR_DEC_B1 = VR_FLN_B + 1
VR_DEC_B2 = VR_DEC_B1 + 1
VR_PRELU = VR_DEC_B2 + 1
N_VEC = VR_PRELU + 1
N_VEC_PAD = 24                     # keep following row offsets 8-aligned
# PReLU slope lanes inside the VR_PRELU row
PR_ENC1, PR_ENC2, PR_KF, PR_RP, PR_DEC = 0, 1, 2, 3, 4

OFF_ECON = OFF_VEC + N_VEC_PAD     # (R_CHUNK, D_HEAD*T): econ[r, d*T+j] = e[r%T, j, d]
OFF_AMASK = OFF_ECON + R_CHUNK     # (R_CHUNK, R_CHUNK) additive mask (incl. cross-batch)
SLAB_ROWS = ((OFF_AMASK + R_CHUNK + 7) // 8) * 8


# ------------------------------- kernel -------------------------------------
def context_transformer_kernel(row_ref, slab_ref, out_ref):
    f32 = jnp.float32

    def mm(a, b):
        return jnp.dot(a, b, preferred_element_type=f32)

    def mm_t(a, b):  # a @ b.T (contract last dims), no explicit transpose
        return lax.dot_general(a, b, (((1,), (1,)), ((), ())),
                               preferred_element_type=f32)

    vec = slab_ref[OFF_VEC:OFF_VEC + N_VEC_PAD, :]                 # (24, 128)

    def vrow(i, width):                                            # (1, width)
        return vec[i:i + 1, :width]

    def alpha(lane):                                               # (1, 1) PReLU slope
        return vec[VR_PRELU:VR_PRELU + 1, lane:lane + 1]

    def prelu(x, a):
        return jnp.where(x >= 0, x, a * x)

    def layer_norm(x, g, b):
        mu = jnp.mean(x, axis=-1, keepdims=True)
        var = jnp.mean((x - mu) ** 2, axis=-1, keepdims=True)
        return (x - mu) * lax.rsqrt(var + LN_EPS) * g + b

    rows = row_ref[...]                                            # (R, ROW_W)
    dm = rows[:, COL_DM:COL_DM + 1]                                # (R, 1) keyframe mask
    # encoder input = [motion*dm | dm | 0]; dm is binary so dm*dm == dm.
    enc_in = rows[:, :ENC_IN_W] * dm
    h = mm(enc_in, slab_ref[OFF_ENC1:OFF_ENC1 + ENC_IN_W, :D_ENC_H])
    h = prelu(h + vrow(VR_ENC_B1, D_ENC_H), alpha(PR_ENC1))
    x = mm(h, slab_ref[OFF_ENC2:OFF_ENC2 + D_ENC_H, :D_MODEL])
    x = prelu(x + vrow(VR_ENC_B2, D_MODEL), alpha(PR_ENC2))
    # keyframe positional embedding (constant, precomputed in the wrapper)
    x = x + rows[:, COL_KP:COL_KP + D_MODEL]

    # relative-position table and additive attention mask (hoisted loads)
    econ = slab_ref[OFF_ECON:OFF_ECON + R_CHUNK, :]                # (R, Dh*T = 128)
    amask = slab_ref[OFF_AMASK:OFF_AMASK + R_CHUNK, :R_CHUNK]      # (R, R)

    for l in range(N_LAYER):
        base = OFF_LAYER + l * LAYER_ROWS
        # ---- RelMultiHeadedAttention (pre-LN, residual) ----
        hn = layer_norm(x, vrow(VR_ALN_G + l, D_MODEL), vrow(VR_ALN_B + l, D_MODEL))
        # one fused QKV matmul for all heads; softmax scale folded into q columns
        qkv = mm(hn, slab_ref[base + QKV_OFF:base + QKV_OFF + D_MODEL, :3 * HD])
        att_heads = []
        for hh in range(N_HEAD):
            qh = qkv[:, hh * D_HEAD:(hh + 1) * D_HEAD]             # (R, Dh), scaled
            kh = qkv[:, HD + hh * D_HEAD:HD + (hh + 1) * D_HEAD]
            vh = qkv[:, 2 * HD + hh * D_HEAD:2 * HD + (hh + 1) * D_HEAD]
            s = mm_t(qh, kh)                                       # (R, R) content
            # rel[r, j] = sum_d qh[r, d] * e[r % T, j, d]  (8 VPU FMA steps)
            rel = qh[:, 0:1] * econ[:, :T]
            for d in range(1, D_HEAD):
                rel = rel + qh[:, d:d + 1] * econ[:, d * T:(d + 1) * T]
            # additive mask zeroes cross-batch blocks and disallowed key frames
            s = s + jnp.tile(rel, (1, BATCH_CHUNK)) + amask
            s = s - jnp.max(s, axis=-1, keepdims=True)
            p = jnp.exp(s)
            p = p * pl.reciprocal(jnp.sum(p, axis=-1, keepdims=True), approx=True)
            att_heads.append(mm(p, vh))                            # (R, Dh)
        att = jnp.concatenate(att_heads, axis=-1)                  # (R, HD)
        x = x + mm(att, slab_ref[base + WO_OFF:base + WO_OFF + HD, :D_MODEL])

        # ---- PositionwiseFeedForward (pre-LN, residual, ReLU) ----
        hn = layer_norm(x, vrow(VR_PLN_G + l, D_MODEL), vrow(VR_PLN_B + l, D_MODEL))
        hf = mm(hn, slab_ref[base + PW1_OFF:base + PW1_OFF + D_MODEL, :D_PFF])
        hf = jnp.maximum(hf + vrow(VR_PB1 + l, D_PFF), 0.0)
        x = (x + mm(hf, slab_ref[base + PW2_OFF:base + PW2_OFF + D_PFF, :D_MODEL])
             + vrow(VR_PB2 + l, D_MODEL))

    # --- final layer norm (pre_lnorm=True) ---
    x = layer_norm(x, vrow(VR_FLN_G, D_MODEL), vrow(VR_FLN_B, D_MODEL))

    # --- decoder: Linear -> PReLU -> Linear (128-lane padded, lane-dense store) ---
    hdec = mm(x, slab_ref[OFF_DEC1:OFF_DEC1 + D_MODEL, :D_DEC_H])
    hdec = prelu(hdec + vrow(VR_DEC_B1, D_DEC_H), alpha(PR_DEC))
    out = mm(hdec, slab_ref[OFF_DEC2:OFF_DEC2 + D_DEC_H, :]) + vec[VR_DEC_B2:VR_DEC_B2 + 1, :]
    out_ref[...] = out.astype(out_ref.dtype)


# ------------------------------ parameters ----------------------------------
def init_params(key):
    def w(k, shape, scale=0.1):
        return (scale * jax.random.normal(k, shape)).astype(jnp.float32)

    ks = iter(jax.random.split(key, 32))
    p = {}
    # encoder
    p["enc_w1m"] = w(next(ks), (D_MOTION, D_ENC_H))
    p["enc_w1d"] = w(next(ks), (D_MASK, D_ENC_H))
    p["enc_b1"] = w(next(ks), (1, D_ENC_H), 0.05)
    p["enc_w2"] = w(next(ks), (D_ENC_H, D_MODEL))
    p["enc_b2"] = w(next(ks), (1, D_MODEL), 0.05)
    # keyframe_pos_layer
    p["kf_w1"] = w(next(ks), (2, D_MODEL))
    p["kf_b1"] = w(next(ks), (1, D_MODEL), 0.05)
    p["kf_w2"] = w(next(ks), (D_MODEL, D_MODEL))
    p["kf_b2"] = w(next(ks), (1, D_MODEL), 0.05)
    # rel_pos_layer
    p["rp_w1"] = w(next(ks), (1, D_HEAD))
    p["rp_b1"] = w(next(ks), (1, D_HEAD), 0.05)
    p["rp_w2"] = w(next(ks), (D_HEAD, D_HEAD))
    p["rp_b2"] = w(next(ks), (1, D_HEAD), 0.05)
    # attention stacks
    p["aln_g"] = jnp.ones((N_LAYER, 1, D_MODEL), jnp.float32)
    p["aln_b"] = jnp.zeros((N_LAYER, 1, D_MODEL), jnp.float32)
    p["wq"] = w(next(ks), (N_LAYER, D_MODEL, HD))
    p["wk"] = w(next(ks), (N_LAYER, D_MODEL, HD))
    p["wv"] = w(next(ks), (N_LAYER, D_MODEL, HD))
    p["wo"] = w(next(ks), (N_LAYER, HD, D_MODEL))
    # feed-forward stacks
    p["pln_g"] = jnp.ones((N_LAYER, 1, D_MODEL), jnp.float32)
    p["pln_b"] = jnp.zeros((N_LAYER, 1, D_MODEL), jnp.float32)
    p["pw1"] = w(next(ks), (N_LAYER, D_MODEL, D_PFF))
    p["pb1"] = w(next(ks), (N_LAYER, 1, D_PFF), 0.05)
    p["pw2"] = w(next(ks), (N_LAYER, D_PFF, D_MODEL))
    p["pb2"] = w(next(ks), (N_LAYER, 1, D_MODEL), 0.05)
    # final layer norm
    p["fln_g"] = jnp.ones((1, D_MODEL), jnp.float32)
    p["fln_b"] = jnp.zeros((1, D_MODEL), jnp.float32)
    # decoder
    p["dec_w1"] = w(next(ks), (D_MODEL, D_DEC_H))
    p["dec_b1"] = w(next(ks), (1, D_DEC_H), 0.05)
    p["dec_w2"] = w(next(ks), (D_DEC_H, D_MOTION))
    p["dec_b2"] = w(next(ks), (1, D_MOTION), 0.05)
    # PReLU slopes (nn.PReLU default 0.25): enc0, enc1, kf, relpos, dec
    p["prelu"] = jnp.full((5,), 0.25, jnp.float32)
    return p


# --------------------------- wrapper-side prep --------------------------------
def _prelu(x, a):
    return jnp.where(x >= 0, x, a * x)


def make_constants():
    # data mask (train=False -> no midway targets); values are exactly 0/1
    dm = jnp.zeros((T, D_MASK), jnp.float32)
    dm = dm.at[:CONTEXT_FRAMES, :].set(1.0)
    dm = dm.at[-1, :].set(1.0)
    # keyframe position indices (T, 2)
    t = jnp.arange(T, dtype=jnp.float32)
    kf_idx = jnp.stack([t - (CONTEXT_FRAMES - 1), -(t - (T - 1))], axis=-1)
    # relative offsets rel[i, j] = j - i  (TODO(synk): reconstructed rel-shift sign)
    relpos = t[None, :] - t[:, None]
    # attendable key frames: context frames + last frame
    allowed = jnp.zeros((T,), jnp.bool_).at[:CONTEXT_FRAMES].set(True).at[T - 1].set(True)
    return dm, kf_idx, relpos, allowed


def precompute_embeddings(params, kf_idx, relpos):
    # keyframe positional embedding (T, D_MODEL) — constant wrt motion
    kp = _prelu(kf_idx @ params["kf_w1"] + params["kf_b1"], params["prelu"][PR_KF])
    kp = kp @ params["kf_w2"] + params["kf_b2"]
    # relative positional embedding expanded to e[i, j, :] = rel_pos_layer(j - i)
    e1 = relpos[:, :, None] * params["rp_w1"][0][None, None, :] + params["rp_b1"][0]
    e1 = _prelu(e1, params["prelu"][PR_RP])
    e = e1 @ params["rp_w2"] + params["rp_b2"][0]                 # (T, T, D_HEAD)
    return kp, e


def build_rel_table(e):
    # econ[r, d*T + j] = e[r % T, j, d]  (lane-dense D_HEAD*T = 128 columns)
    econ = jnp.transpose(e, (0, 2, 1)).reshape(T, D_HEAD * T)
    return jnp.tile(econ, (BATCH_CHUNK, 1))


def build_attention_mask(allowed):
    # additive mask over the (R_CHUNK, R_CHUNK) flattened score matrix:
    # 0 where same-batch AND attendable key frame, -1e30 elsewhere
    same_batch = jnp.kron(jnp.eye(BATCH_CHUNK, dtype=jnp.float32),
                          jnp.ones((T, T), jnp.float32)) > 0.5
    allowed_col = jnp.tile(allowed, (BATCH_CHUNK,))
    return jnp.where(same_batch & allowed_col[None, :], 0.0, NEG_INF).astype(jnp.float32)


def build_slab(params, econ_chunk, amask_chunk):
    slab = jnp.zeros((SLAB_ROWS, 128), jnp.float32)
    # encoder first linear padded to the 16-wide packed input
    w1p = jnp.zeros((ENC_IN_W, D_ENC_H), jnp.float32)
    w1p = w1p.at[:D_MOTION].set(params["enc_w1m"])
    w1p = w1p.at[D_MOTION].set(params["enc_w1d"][0])
    slab = slab.at[OFF_ENC1:OFF_ENC1 + ENC_IN_W, :D_ENC_H].set(w1p)
    slab = slab.at[OFF_ENC2:OFF_ENC2 + D_ENC_H, :D_MODEL].set(params["enc_w2"])

    scale = 1.0 / (D_HEAD ** 0.5)
    for l in range(N_LAYER):
        base = OFF_LAYER + l * LAYER_ROWS
        wqkv = jnp.concatenate(
            [params["wq"][l] * scale, params["wk"][l], params["wv"][l]], axis=-1)
        slab = slab.at[base + QKV_OFF:base + QKV_OFF + D_MODEL, :3 * HD].set(wqkv)
        slab = slab.at[base + WO_OFF:base + WO_OFF + HD, :D_MODEL].set(params["wo"][l])
        slab = slab.at[base + PW1_OFF:base + PW1_OFF + D_MODEL, :D_PFF].set(params["pw1"][l])
        slab = slab.at[base + PW2_OFF:base + PW2_OFF + D_PFF, :D_MODEL].set(params["pw2"][l])

    slab = slab.at[OFF_DEC1:OFF_DEC1 + D_MODEL, :D_DEC_H].set(params["dec_w1"])
    slab = slab.at[OFF_DEC2:OFF_DEC2 + D_DEC_H, :D_MOTION].set(params["dec_w2"])

    v = OFF_VEC
    slab = slab.at[v + VR_ENC_B1, :D_ENC_H].set(params["enc_b1"][0])
    slab = slab.at[v + VR_ENC_B2, :D_MODEL].set(params["enc_b2"][0])
    for l in range(N_LAYER):
        slab = slab.at[v + VR_ALN_G + l, :D_MODEL].set(params["aln_g"][l, 0])
        slab = slab.at[v + VR_ALN_B + l, :D_MODEL].set(params["aln_b"][l, 0])
        slab = slab.at[v + VR_PLN_G + l, :D_MODEL].set(params["pln_g"][l, 0])
        slab = slab.at[v + VR_PLN_B + l, :D_MODEL].set(params["pln_b"][l, 0])
        slab = slab.at[v + VR_PB1 + l, :D_PFF].set(params["pb1"][l, 0])
        slab = slab.at[v + VR_PB2 + l, :D_MODEL].set(params["pb2"][l, 0])
    slab = slab.at[v + VR_FLN_G, :D_MODEL].set(params["fln_g"][0])
    slab = slab.at[v + VR_FLN_B, :D_MODEL].set(params["fln_b"][0])
    slab = slab.at[v + VR_DEC_B1, :D_DEC_H].set(params["dec_b1"][0])
    slab = slab.at[v + VR_DEC_B2, :D_MOTION].set(params["dec_b2"][0])
    slab = slab.at[v + VR_PRELU, :5].set(params["prelu"])

    slab = slab.at[OFF_ECON:OFF_ECON + R_CHUNK, :D_HEAD * T].set(econ_chunk)
    slab = slab.at[OFF_AMASK:OFF_AMASK + R_CHUNK, :R_CHUNK].set(amask_chunk)
    return slab


def build_rows(motion, dm, kp):
    rows = jnp.zeros((B * T, ROW_W), jnp.float32)
    rows = rows.at[:, :D_MOTION].set(motion.reshape(B * T, D_MOTION))
    rows = rows.at[:, COL_DM].set(jnp.tile(dm[:, 0], (B,)))
    rows = rows.at[:, COL_KP:COL_KP + D_MODEL].set(jnp.tile(kp, (B, 1)))
    return rows


# ------------------------------ wrapper --------------------------------------
def context_transformer_forward(motion, params):
    dm, kf_idx, relpos, allowed = make_constants()
    kp, e = precompute_embeddings(params, kf_idx, relpos)
    slab = build_slab(params, build_rel_table(e), build_attention_mask(allowed))
    rows = build_rows(motion, dm, kp)

    fn = pl.pallas_call(
        context_transformer_kernel,
        out_shape=jax.ShapeDtypeStruct((B * T, D_OUT_PAD), jnp.float32),
        grid_spec=pltpu.PrefetchScalarGridSpec(
            num_scalar_prefetch=0,
            grid=(B // BATCH_CHUNK,),
            in_specs=[
                pl.BlockSpec((R_CHUNK, ROW_W), lambda i: (i, 0)),     # per-frame rows
                pl.BlockSpec((SLAB_ROWS, 128), lambda i: (0, 0)),     # packed weights/consts
            ],
            out_specs=pl.BlockSpec((R_CHUNK, D_OUT_PAD), lambda i: (i, 0)),
            scratch_shapes=[],
        ),
        compiler_params=pltpu.CompilerParams(dimension_semantics=("arbitrary",)),
    )
    out_pad = fn(rows, slab)
    out_motion = out_pad[:, :D_MOTION].reshape(B, T, D_MOTION)
    midway_targets = []   # train=False
    return {"motion": out_motion}, midway_targets


# -------------------------- pure-JAX reference --------------------------------
def _layer_norm_ref(x, g, b):
    mu = jnp.mean(x, axis=-1, keepdims=True)
    var = jnp.mean((x - mu) ** 2, axis=-1, keepdims=True)
    return (x - mu) / jnp.sqrt(var + LN_EPS) * g + b


def reference_forward(motion, params):
    dm, kf_idx, relpos, allowed = make_constants()
    kp, e = precompute_embeddings(params, kf_idx, relpos)
    scale = 1.0 / (D_HEAD ** 0.5)
    dm_b = jnp.broadcast_to(dm[None], (B, T, D_MASK))
    x_in = jnp.concatenate([motion * dm_b, dm_b], axis=-1)
    w1 = jnp.concatenate([params["enc_w1m"], params["enc_w1d"]], axis=0)
    h = _prelu(x_in @ w1 + params["enc_b1"], params["prelu"][PR_ENC1])
    x = _prelu(h @ params["enc_w2"] + params["enc_b2"], params["prelu"][PR_ENC2])
    x = x + kp[None]
    for l in range(N_LAYER):
        hn = _layer_norm_ref(x, params["aln_g"][l, 0], params["aln_b"][l, 0])
        q = (hn @ params["wq"][l]).reshape(B, T, N_HEAD, D_HEAD) * scale
        k = (hn @ params["wk"][l]).reshape(B, T, N_HEAD, D_HEAD)
        v = (hn @ params["wv"][l]).reshape(B, T, N_HEAD, D_HEAD)
        s = jnp.einsum("bihd,bjhd->bhij", q, k) + jnp.einsum("bihd,ijd->bhij", q, e)
        s = jnp.where(allowed[None, None, None, :], s, NEG_INF)
        p = jax.nn.softmax(s, axis=-1)
        att = jnp.einsum("bhij,bjhd->bihd", p, v).reshape(B, T, HD)
        x = x + att @ params["wo"][l]
        hn = _layer_norm_ref(x, params["pln_g"][l, 0], params["pln_b"][l, 0])
        hf = jnp.maximum(hn @ params["pw1"][l] + params["pb1"][l], 0.0)
        x = x + hf @ params["pw2"][l] + params["pb2"][l]
    x = _layer_norm_ref(x, params["fln_g"][0], params["fln_b"][0])
    hd = _prelu(x @ params["dec_w1"] + params["dec_b1"], params["prelu"][PR_DEC])
    return hd @ params["dec_w2"] + params["dec_b2"]


# -------------------------------- main ---------------------------------------
if __name__ == "__main__":
    key = jax.random.PRNGKey(0)
    k_param, k_data = jax.random.split(key)
    params = init_params(k_param)
    motion = jax.random.normal(k_data, (B, T, D_MOTION), dtype=jnp.float32)

    res, midway = context_transformer_forward(motion, params)
    out = jax.block_until_ready(res["motion"])

    assert out.shape == (B, T, D_MOTION), out.shape
    assert bool(jnp.all(jnp.isfinite(out))), "non-finite output"

    # sanity check against a pure-JAX mirror of the same math (loose tolerance:
    # approx reciprocal / rsqrt inside the kernel are hardware approximations)
    ref = reference_forward(motion, params)
    err = float(jnp.max(jnp.abs(out - ref)))
    assert err < 5e-2, f"mismatch vs pure-JAX reference: max abs err {err}"
    print("KERNEL_OK")
</pallas_src>

<mosaic_0001>
module attributes {stable_mosaic.version = 11 : i64} {
  func.func @context_transformer_kernel(%arg0: i32, %arg1: memref<32x64xf32, #tpu.memory_space<vmem>>, %arg2: memref<520x128xf32, #tpu.memory_space<vmem>>, %arg3: memref<32x128xf32, #tpu.memory_space<vmem>>) attributes {dimension_semantics = [#tpu.dimension_semantics<arbitrary>], iteration_bounds = array<i64: 1>, scalar_prefetch = 0 : i64, scratch_operands = 0 : i64, tpu.core_type = #tpu.core_type<tc>, window_params = [{transform_indices = @transform_0, window_bounds = array<i64: 32, 64>}, {pipeline_mode = #tpu.pipeline_mode<synchronous>, transform_indices = @transform_1, window_bounds = array<i64: 520, 128>}, {transform_indices = @transform_2, window_bounds = array<i64: 32, 128>}]} {
    %c432 = arith.constant 432 : index
    %c0 = arith.constant 0 : index
    %0 = vector.load %arg2[%c432, %c0] : memref<520x128xf32, #tpu.memory_space<vmem>>, vector<24x128xf32>
    %c0_0 = arith.constant 0 : index
    %c0_1 = arith.constant 0 : index
    %1 = vector.load %arg1[%c0_0, %c0_1] : memref<32x64xf32, #tpu.memory_space<vmem>>, vector<32x64xf32>
    %2 = vector.extract_strided_slice %1 {offsets = [0, 12], sizes = [32, 1], strides = [1, 1]} : vector<32x64xf32> to vector<32x1xf32>
    %3 = vector.extract_strided_slice %1 {offsets = [0, 0], sizes = [32, 16], strides = [1, 1]} : vector<32x64xf32> to vector<32x16xf32>
    %4 = vector.broadcast %2 : vector<32x1xf32> to vector<32x16xf32>
    %5 = arith.mulf %3, %4 : vector<32x16xf32>
    %c0_2 = arith.constant 0 : index
    %c0_3 = arith.constant 0 : index
    %6 = vector.load %arg2[%c0_2, %c0_3] : memref<520x128xf32, #tpu.memory_space<vmem>>, vector<16x32xf32>
    %cst = arith.constant dense<0.000000e+00> : vector<32x32xf32>
    %7 = tpu.matmul %5, %6, %cst {dimension_numbers = #tpu.dot_dimension_numbers<[1], [0], [0], [1], [0, 0, 1, 1], [], []>} : vector<32x16xf32>, vector<16x32xf32>, vector<32x32xf32> -> vector<32x32xf32>
    %8 = vector.extract_strided_slice %0 {offsets = [0, 0], sizes = [1, 32], strides = [1, 1]} : vector<24x128xf32> to vector<1x32xf32>
    %9 = vector.broadcast %8 : vector<1x32xf32> to vector<32x32xf32>
    %10 = arith.addf %7, %9 : vector<32x32xf32>
    %11 = vector.extract_strided_slice %0 {offsets = [18, 0], sizes = [1, 1], strides = [1, 1]} : vector<24x128xf32> to vector<1x1xf32>
    %cst_4 = arith.constant 0.000000e+00 : f32
    %12 = vector.broadcast %cst_4 : f32 to vector<32x32xf32>
    %13 = arith.cmpf oge, %10, %12 : vector<32x32xf32>
    %14 = vector.broadcast %11 : vector<1x1xf32> to vector<32x32xf32>
    %15 = arith.mulf %14, %10 : vector<32x32xf32>
    %16 = arith.select %13, %10, %15 : vector<32x32xi1>, vector<32x32xf32>
    %c16 = arith.constant 16 : index
    %c0_5 = arith.constant 0 : index
    %17 = vector.load %arg2[%c16, %c0_5] : memref<520x128xf32, #tpu.memory_space<vmem>>, vector<32x32xf32>
    %cst_6 = arith.constant dense<0.000000e+00> : vector<32x32xf32>
    %18 = tpu.matmul %16, %17, %cst_6 {dimension_numbers = #tpu.dot_dimension_numbers<[1], [0], [0], [1], [0, 0, 1, 1], [], []>} : vector<32x32xf32>, vector<32x32xf32>, vector<32x32xf32> -> vector<32x32xf32>
    %19 = vector.extract_strided_slice %0 {offsets = [1, 0], sizes = [1, 32], strides = [1, 1]} : vector<24x128xf32> to vector<1x32xf32>
    %20 = vector.broadcast %19 : vector<1x32xf32> to vector<32x32xf32>
    %21 = arith.addf %18, %20 : vector<32x32xf32>
    %22 = vector.extract_strided_slice %0 {offsets = [18, 1], sizes = [1, 1], strides = [1, 1]} : vector<24x128xf32> to vector<1x1xf32>
    %cst_7 = arith.constant 0.000000e+00 : f32
    %23 = vector.broadcast %cst_7 : f32 to vector<32x32xf32>
    %24 = arith.cmpf oge, %21, %23 : vector<32x32xf32>
    %25 = vector.broadcast %22 : vector<1x1xf32> to vector<32x32xf32>
    %26 = arith.mulf %25, %21 : vector<32x32xf32>
    %27 = arith.select %24, %21, %26 : vector<32x32xi1>, vector<32x32xf32>
    %28 = vector.extract_strided_slice %1 {offsets = [0, 16], sizes = [32, 32], strides = [1, 1]} : vector<32x64xf32> to vector<32x32xf32>
    %29 = arith.addf %27, %28 : vector<32x32xf32>
    %c456 = arith.constant 456 : index
    %c0_8 = arith.constant 0 : index
    %30 = vector.load %arg2[%c456, %c0_8] : memref<520x128xf32, #tpu.memory_space<vmem>>, vector<32x128xf32>
    %c488 = arith.constant 488 : index
    %c0_9 = arith.constant 0 : index
    %31 = vector.load %arg2[%c488, %c0_9] : memref<520x128xf32, #tpu.memory_space<vmem>>, vector<32x32xf32>
    %32 = vector.extract_strided_slice %0 {offsets = [2, 0], sizes = [1, 32], strides = [1, 1]} : vector<24x128xf32> to vector<1x32xf32>
    %33 = vector.extract_strided_slice %0 {offsets = [4, 0], sizes = [1, 32], strides = [1, 1]} : vector<24x128xf32> to vector<1x32xf32>
    %cst_10 = arith.constant dense<0.000000e+00> : vector<32xf32>
    %34 = vector.multi_reduction <add>, %29, %cst_10 [1] : vector<32x32xf32> to vector<32xf32>
    %35 = vector.shape_cast %34 : vector<32xf32> to vector<32x1xf32>
    %cst_11 = arith.constant 3.200000e+01 : f32
    %36 = vector.broadcast %cst_11 : f32 to vector<32x1xf32>
    %37 = arith.divf %35, %36 : vector<32x1xf32>
    %38 = vector.broadcast %37 : vector<32x1xf32> to vector<32x32xf32>
    %39 = arith.subf %29, %38 : vector<32x32xf32>
    %40 = arith.mulf %39, %39 : vector<32x32xf32>
    %cst_12 = arith.constant dense<0.000000e+00> : vector<32xf32>
    %41 = vector.multi_reduction <add>, %40, %cst_12 [1] : vector<32x32xf32> to vector<32xf32>
    %42 = vector.shape_cast %41 : vector<32xf32> to vector<32x1xf32>
    %cst_13 = arith.constant 3.200000e+01 : f32
    %43 = vector.broadcast %cst_13 : f32 to vector<32x1xf32>
    %44 = arith.divf %42, %43 : vector<32x1xf32>
    %45 = vector.broadcast %37 : vector<32x1xf32> to vector<32x32xf32>
    %46 = arith.subf %29, %45 : vector<32x32xf32>
    %cst_14 = arith.constant 9.99999974E-6 : f32
    %47 = vector.broadcast %cst_14 : f32 to vector<32x1xf32>
    %48 = arith.addf %44, %47 : vector<32x1xf32>
    %49 = math.rsqrt %48 : vector<32x1xf32>
    %50 = vector.broadcast %49 : vector<32x1xf32> to vector<32x32xf32>
    %51 = arith.mulf %46, %50 : vector<32x32xf32>
    %52 = vector.broadcast %32 : vector<1x32xf32> to vector<32x32xf32>
    %53 = arith.mulf %51, %52 : vector<32x32xf32>
    %54 = vector.broadcast %33 : vector<1x32xf32> to vector<32x32xf32>
    %55 = arith.addf %53, %54 : vector<32x32xf32>
    %c48 = arith.constant 48 : index
    %c0_15 = arith.constant 0 : index
    %56 = vector.load %arg2[%c48, %c0_15] : memref<520x128xf32, #tpu.memory_space<vmem>>, vector<32x96xf32>
    %cst_16 = arith.constant dense<0.000000e+00> : vector<32x96xf32>
    %57 = tpu.matmul %55, %56, %cst_16 {dimension_numbers = #tpu.dot_dimension_numbers<[1], [0], [0], [1], [0, 0, 1, 1], [], []>} : vector<32x32xf32>, vector<32x96xf32>, vector<32x96xf32> -> vector<32x96xf32>
    %58 = vector.extract_strided_slice %57 {offsets = [0, 0], sizes = [32, 8], strides = [1, 1]} : vector<32x96xf32> to vector<32x8xf32>
    %59 = vector.extract_strided_slice %57 {offsets = [0, 32], sizes = [32, 8], strides = [1, 1]} : vector<32x96xf32> to vector<32x8xf32>
    %60 = vector.extract_strided_slice %57 {offsets = [0, 64], sizes = [32, 8], strides = [1, 1]} : vector<32x96xf32> to vector<32x8xf32>
    %cst_17 = arith.constant dense<0.000000e+00> : vector<32x32xf32>
    %61 = tpu.matmul %58, %59, %cst_17 {dimension_numbers = #tpu.dot_dimension_numbers<[1], [1], [0], [0], [0, 0, 1, 0], [], []>} : vector<32x8xf32>, vector<32x8xf32>, vector<32x32xf32> -> vector<32x32xf32>
    %62 = vector.extract_strided_slice %58 {offsets = [0, 0], sizes = [32, 1], strides = [1, 1]} : vector<32x8xf32> to vector<32x1xf32>
    %63 = vector.extract_strided_slice %30 {offsets = [0, 0], sizes = [32, 16], strides = [1, 1]} : vector<32x128xf32> to vector<32x16xf32>
    %64 = vector.broadcast %62 : vector<32x1xf32> to vector<32x16xf32>
    %65 = arith.mulf %64, %63 : vector<32x16xf32>
    %66 = vector.extract_strided_slice %58 {offsets = [0, 1], sizes = [32, 1], strides = [1, 1]} : vector<32x8xf32> to vector<32x1xf32>
    %67 = vector.extract_strided_slice %30 {offsets = [0, 16], sizes = [32, 16], strides = [1, 1]} : vector<32x128xf32> to vector<32x16xf32>
    %68 = vector.broadcast %66 : vector<32x1xf32> to vector<32x16xf32>
    %69 = arith.mulf %68, %67 : vector<32x16xf32>
    %70 = arith.addf %65, %69 : vector<32x16xf32>
    %71 = vector.extract_strided_slice %58 {offsets = [0, 2], sizes = [32, 1], strides = [1, 1]} : vector<32x8xf32> to vector<32x1xf32>
    %72 = vector.extract_strided_slice %30 {offsets = [0, 32], sizes = [32, 16], strides = [1, 1]} : vector<32x128xf32> to vector<32x16xf32>
    %73 = vector.broadcast %71 : vector<32x1xf32> to vector<32x16xf32>
    %74 = arith.mulf %73, %72 : vector<32x16xf32>
    %75 = arith.addf %70, %74 : vector<32x16xf32>
    %76 = vector.extract_strided_slice %58 {offsets = [0, 3], sizes = [32, 1], strides = [1, 1]} : vector<32x8xf32> to vector<32x1xf32>
    %77 = vector.extract_strided_slice %30 {offsets = [0, 48], sizes = [32, 16], strides = [1, 1]} : vector<32x128xf32> to vector<32x16xf32>
    %78 = vector.broadcast %76 : vector<32x1xf32> to vector<32x16xf32>
    %79 = arith.mulf %78, %77 : vector<32x16xf32>
    %80 = arith.addf %75, %79 : vector<32x16xf32>
    %81 = vector.extract_strided_slice %58 {offsets = [0, 4], sizes = [32, 1], strides = [1, 1]} : vector<32x8xf32> to vector<32x1xf32>
    %82 = vector.extract_strided_slice %30 {offsets = [0, 64], sizes = [32, 16], strides = [1, 1]} : vector<32x128xf32> to vector<32x16xf32>
    %83 = vector.broadcast %81 : vector<32x1xf32> to vector<32x16xf32>
    %84 = arith.mulf %83, %82 : vector<32x16xf32>
    %85 = arith.addf %80, %84 : vector<32x16xf32>
    %86 = vector.extract_strided_slice %58 {offsets = [0, 5], sizes = [32, 1], strides = [1, 1]} : vector<32x8xf32> to vector<32x1xf32>
    %87 = vector.extract_strided_slice %30 {offsets = [0, 80], sizes = [32, 16], strides = [1, 1]} : vector<32x128xf32> to vector<32x16xf32>
    %88 = vector.broadcast %86 : vector<32x1xf32> to vector<32x16xf32>
    %89 = arith.mulf %88, %87 : vector<32x16xf32>
    %90 = arith.addf %85, %89 : vector<32x16xf32>
    %91 = vector.extract_strided_slice %58 {offsets = [0, 6], sizes = [32, 1], strides = [1, 1]} : vector<32x8xf32> to vector<32x1xf32>
    %92 = vector.extract_strided_slice %30 {offsets = [0, 96], sizes = [32, 16], strides = [1, 1]} : vector<32x128xf32> to vector<32x16xf32>
    %93 = vector.broadcast %91 : vector<32x1xf32> to vector<32x16xf32>
    %94 = arith.mulf %93, %92 : vector<32x16xf32>
    %95 = arith.addf %90, %94 : vector<32x16xf32>
    %96 = vector.extract_strided_slice %58 {offsets = [0, 7], sizes = [32, 1], strides = [1, 1]} : vector<32x8xf32> to vector<32x1xf32>
    %97 = vector.extract_strided_slice %30 {offsets = [0, 112], sizes = [32, 16], strides = [1, 1]} : vector<32x128xf32> to vector<32x16xf32>
    %98 = vector.broadcast %96 : vector<32x1xf32> to vector<32x16xf32>
    %99 = arith.mulf %98, %97 : vector<32x16xf32>
    %100 = arith.addf %95, %99 : vector<32x16xf32>
    %101 = tpu.concatenate %100, %100 in 1 : vector<32x16xf32>, vector<32x16xf32> -> vector<32x32xf32>
    %102 = arith.addf %61, %101 : vector<32x32xf32>
    %103 = arith.addf %102, %31 : vector<32x32xf32>
    %cst_18 = arith.constant dense<0xFF800000> : vector<32xf32>
    %104 = vector.multi_reduction <maximumf>, %103, %cst_18 [1] : vector<32x32xf32> to vector<32xf32>
    %105 = vector.shape_cast %104 : vector<32xf32> to vector<32x1xf32>
    %106 = vector.broadcast %105 : vector<32x1xf32> to vector<32x32xf32>
    %107 = arith.subf %103, %106 : vector<32x32xf32>
    %108 = math.exp %107 : vector<32x32xf32>
    %cst_19 = arith.constant dense<0.000000e+00> : vector<32xf32>
    %109 = vector.multi_reduction <add>, %108, %cst_19 [1] : vector<32x32xf32> to vector<32xf32>
    %110 = vector.shape_cast %109 : vector<32xf32> to vector<32x1xf32>
    %111 = tpu.reciprocal %110 {approx = true} : vector<32x1xf32> -> vector<32x1xf32>
    %112 = vector.broadcast %111 : vector<32x1xf32> to vector<32x32xf32>
    %113 = arith.mulf %108, %112 : vector<32x32xf32>
    %cst_20 = arith.constant dense<0.000000e+00> : vector<32x8xf32>
    %114 = tpu.matmul %113, %60, %cst_20 {dimension_numbers = #tpu.dot_dimension_numbers<[1], [0], [0], [1], [0, 0, 1, 1], [], []>} : vector<32x32xf32>, vector<32x8xf32>, vector<32x8xf32> -> vector<32x8xf32>
    %115 = vector.extract_strided_slice %57 {offsets = [0, 8], sizes = [32, 8], strides = [1, 1]} : vector<32x96xf32> to vector<32x8xf32>
    %116 = vector.extract_strided_slice %57 {offsets = [0, 40], sizes = [32, 8], strides = [1, 1]} : vector<32x96xf32> to vector<32x8xf32>
    %117 = vector.extract_strided_slice %57 {offsets = [0, 72], sizes = [32, 8], strides = [1, 1]} : vector<32x96xf32> to vector<32x8xf32>
    %cst_21 = arith.constant dense<0.000000e+00> : vector<32x32xf32>
    %118 = tpu.matmul %115, %116, %cst_21 {dimension_numbers = #tpu.dot_dimension_numbers<[1], [1], [0], [0], [0, 0, 1, 0], [], []>} : vector<32x8xf32>, vector<32x8xf32>, vector<32x32xf32> -> vector<32x32xf32>
    %119 = vector.extract_strided_slice %115 {offsets = [0, 0], sizes = [32, 1], strides = [1, 1]} : vector<32x8xf32> to vector<32x1xf32>
    %120 = vector.extract_strided_slice %30 {offsets = [0, 0], sizes = [32, 16], strides = [1, 1]} : vector<32x128xf32> to vector<32x16xf32>
    %121 = vector.broadcast %119 : vector<32x1xf32> to vector<32x16xf32>
    %122 = arith.mulf %121, %120 : vector<32x16xf32>
    %123 = vector.extract_strided_slice %115 {offsets = [0, 1], sizes = [32, 1], strides = [1, 1]} : vector<32x8xf32> to vector<32x1xf32>
    %124 = vector.extract_strided_slice %30 {offsets = [0, 16], sizes = [32, 16], strides = [1, 1]} : vector<32x128xf32> to vector<32x16xf32>
    %125 = vector.broadcast %123 : vector<32x1xf32> to vector<32x16xf32>
    %126 = arith.mulf %125, %124 : vector<32x16xf32>
    %127 = arith.addf %122, %126 : vector<32x16xf32>
    %128 = vector.extract_strided_slice %115 {offsets = [0, 2], sizes = [32, 1], strides = [1, 1]} : vector<32x8xf32> to vector<32x1xf32>
    %129 = vector.extract_strided_slice %30 {offsets = [0, 32], sizes = [32, 16], strides = [1, 1]} : vector<32x128xf32> to vector<32x16xf32>
    %130 = vector.broadcast %128 : vector<32x1xf32> to vector<32x16xf32>
    %131 = arith.mulf %130, %129 : vector<32x16xf32>
    %132 = arith.addf %127, %131 : vector<32x16xf32>
    %133 = vector.extract_strided_slice %115 {offsets = [0, 3], sizes = [32, 1], strides = [1, 1]} : vector<32x8xf32> to vector<32x1xf32>
    %134 = vector.extract_strided_slice %30 {offsets = [0, 48], sizes = [32, 16], strides = [1, 1]} : vector<32x128xf32> to vector<32x16xf32>
    %135 = vector.broadcast %133 : vector<32x1xf32> to vector<32x16xf32>
    %136 = arith.mulf %135, %134 : vector<32x16xf32>
    %137 = arith.addf %132, %136 : vector<32x16xf32>
    %138 = vector.extract_strided_slice %115 {offsets = [0, 4], sizes = [32, 1], strides = [1, 1]} : vector<32x8xf32> to vector<32x1xf32>
    %139 = vector.extract_strided_slice %30 {offsets = [0, 64], sizes = [32, 16], strides = [1, 1]} : vector<32x128xf32> to vector<32x16xf32>
    %140 = vector.broadcast %138 : vector<32x1xf32> to vector<32x16xf32>
    %141 = arith.mulf %140, %139 : vector<32x16xf32>
    %142 = arith.addf %137, %141 : vector<32x16xf32>
    %143 = vector.extract_strided_slice %115 {offsets = [0, 5], sizes = [32, 1], strides = [1, 1]} : vector<32x8xf32> to vector<32x1xf32>
    %144 = vector.extract_strided_slice %30 {offsets = [0, 80], sizes = [32, 16], strides = [1, 1]} : vector<32x128xf32> to vector<32x16xf32>
    %145 = vector.broadcast %143 : vector<32x1xf32> to vector<32x16xf32>
    %146 = arith.mulf %145, %144 : vector<32x16xf32>
    %147 = arith.addf %142, %146 : vector<32x16xf32>
    %148 = vector.extract_strided_slice %115 {offsets = [0, 6], sizes = [32, 1], strides = [1, 1]} : vector<32x8xf32> to vector<32x1xf32>
    %149 = vector.extract_strided_slice %30 {offsets = [0, 96], sizes = [32, 16], strides = [1, 1]} : vector<32x128xf32> to vector<32x16xf32>
    %150 = vector.broadcast %148 : vector<32x1xf32> to vector<32x16xf32>
    %151 = arith.mulf %150, %149 : vector<32x16xf32>
    %152 = arith.addf %147, %151 : vector<32x16xf32>
    %153 = vector.extract_strided_slice %115 {offsets = [0, 7], sizes = [32, 1], strides = [1, 1]} : vector<32x8xf32> to vector<32x1xf32>
    %154 = vector.extract_strided_slice %30 {offsets = [0, 112], sizes = [32, 16], strides = [1, 1]} : vector<32x128xf32> to vector<32x16xf32>
    %155 = vector.broadcast %153 : vector<32x1xf32> to vector<32x16xf32>
    %156 = arith.mulf %155, %154 : vector<32x16xf32>
    %157 = arith.addf %152, %156 : vector<32x16xf32>
    %158 = tpu.concatenate %157, %157 in 1 : vector<32x16xf32>, vector<32x16xf32> -> vector<32x32xf32>
    %159 = arith.addf %118, %158 : vector<32x32xf32>
    %160 = arith.addf %159, %31 : vector<32x32xf32>
    %cst_22 = arith.constant dense<0xFF800000> : vector<32xf32>
    %161 = vector.multi_reduction <maximumf>, %160, %cst_22 [1] : vector<32x32xf32> to vector<32xf32>
    %162 = vector.shape_cast %161 : vector<32xf32> to vector<32x1xf32>
    %163 = vector.broadcast %162 : vector<32x1xf32> to vector<32x32xf32>
    %164 = arith.subf %160, %163 : vector<32x32xf32>
    %165 = math.exp %164 : vector<32x32xf32>
    %cst_23 = arith.constant dense<0.000000e+00> : vector<32xf32>
    %166 = vector.multi_reduction <add>, %165, %cst_23 [1] : vector<32x32xf32> to vector<32xf32>
    %167 = vector.shape_cast %166 : vector<32xf32> to vector<32x1xf32>
    %168 = tpu.reciprocal %167 {approx = true} : vector<32x1xf32> -> vector<32x1xf32>
    %169 = vector.broadcast %168 : vector<32x1xf32> to vector<32x32xf32>
    %170 = arith.mulf %165, %169 : vector<32x32xf32>
    %cst_24 = arith.constant dense<0.000000e+00> : vector<32x8xf32>
    %171 = tpu.matmul %170, %117, %cst_24 {dimension_numbers = #tpu.dot_dimension_numbers<[1], [0], [0], [1], [0, 0, 1, 1], [], []>} : vector<32x32xf32>, vector<32x8xf32>, vector<32x8xf32> -> vector<32x8xf32>
    %172 = vector.extract_strided_slice %57 {offsets = [0, 16], sizes = [32, 8], strides = [1, 1]} : vector<32x96xf32> to vector<32x8xf32>
    %173 = vector.extract_strided_slice %57 {offsets = [0, 48], sizes = [32, 8], strides = [1, 1]} : vector<32x96xf32> to vector<32x8xf32>
    %174 = vector.extract_strided_slice %57 {offsets = [0, 80], sizes = [32, 8], strides = [1, 1]} : vector<32x96xf32> to vector<32x8xf32>
    %cst_25 = arith.constant dense<0.000000e+00> : vector<32x32xf32>
    %175 = tpu.matmul %172, %173, %cst_25 {dimension_numbers = #tpu.dot_dimension_numbers<[1], [1], [0], [0], [0, 0, 1, 0], [], []>} : vector<32x8xf32>, vector<32x8xf32>, vector<32x32xf32> -> vector<32x32xf32>
    %176 = vector.extract_strided_slice %172 {offsets = [0, 0], sizes = [32, 1], strides = [1, 1]} : vector<32x8xf32> to vector<32x1xf32>
    %177 = vector.extract_strided_slice %30 {offsets = [0, 0], sizes = [32, 16], strides = [1, 1]} : vector<32x128xf32> to vector<32x16xf32>
    %178 = vector.broadcast %176 : vector<32x1xf32> to vector<32x16xf32>
    %179 = arith.mulf %178, %177 : vector<32x16xf32>
    %180 = vector.extract_strided_slice %172 {offsets = [0, 1], sizes = [32, 1], strides = [1, 1]} : vector<32x8xf32> to vector<32x1xf32>
    %181 = vector.extract_strided_slice %30 {offsets = [0, 16], sizes = [32, 16], strides = [1, 1]} : vector<32x128xf32> to vector<32x16xf32>
    %182 = vector.broadcast %180 : vector<32x1xf32> to vector<32x16xf32>
    %183 = arith.mulf %182, %181 : vector<32x16xf32>
    %184 = arith.addf %179, %183 : vector<32x16xf32>
    %185 = vector.extract_strided_slice %172 {offsets = [0, 2], sizes = [32, 1], strides = [1, 1]} : vector<32x8xf32> to vector<32x1xf32>
    %186 = vector.extract_strided_slice %30 {offsets = [0, 32], sizes = [32, 16], strides = [1, 1]} : vector<32x128xf32> to vector<32x16xf32>
    %187 = vector.broadcast %185 : vector<32x1xf32> to vector<32x16xf32>
    %188 = arith.mulf %187, %186 : vector<32x16xf32>
    %189 = arith.addf %184, %188 : vector<32x16xf32>
    %190 = vector.extract_strided_slice %172 {offsets = [0, 3], sizes = [32, 1], strides = [1, 1]} : vector<32x8xf32> to vector<32x1xf32>
    %191 = vector.extract_strided_slice %30 {offsets = [0, 48], sizes = [32, 16], strides = [1, 1]} : vector<32x128xf32> to vector<32x16xf32>
    %192 = vector.broadcast %190 : vector<32x1xf32> to vector<32x16xf32>
    %193 = arith.mulf %192, %191 : vector<32x16xf32>
    %194 = arith.addf %189, %193 : vector<32x16xf32>
    %195 = vector.extract_strided_slice %172 {offsets = [0, 4], sizes = [32, 1], strides = [1, 1]} : vector<32x8xf32> to vector<32x1xf32>
    %196 = vector.extract_strided_slice %30 {offsets = [0, 64], sizes = [32, 16], strides = [1, 1]} : vector<32x128xf32> to vector<32x16xf32>
    %197 = vector.broadcast %195 : vector<32x1xf32> to vector<32x16xf32>
    %198 = arith.mulf %197, %196 : vector<32x16xf32>
    %199 = arith.addf %194, %198 : vector<32x16xf32>
    %200 = vector.extract_strided_slice %172 {offsets = [0, 5], sizes = [32, 1], strides = [1, 1]} : vector<32x8xf32> to vector<32x1xf32>
    %201 = vector.extract_strided_slice %30 {offsets = [0, 80], sizes = [32, 16], strides = [1, 1]} : vector<32x128xf32> to vector<32x16xf32>
    %202 = vector.broadcast %200 : vector<32x1xf32> to vector<32x16xf32>
    %203 = arith.mulf %202, %201 : vector<32x16xf32>
    %204 = arith.addf %199, %203 : vector<32x16xf32>
    %205 = vector.extract_strided_slice %172 {offsets = [0, 6], sizes = [32, 1], strides = [1, 1]} : vector<32x8xf32> to vector<32x1xf32>
    %206 = vector.extract_strided_slice %30 {offsets = [0, 96], sizes = [32, 16], strides = [1, 1]} : vector<32x128xf32> to vector<32x16xf32>
    %207 = vector.broadcast %205 : vector<32x1xf32> to vector<32x16xf32>
    %208 = arith.mulf %207, %206 : vector<32x16xf32>
    %209 = arith.addf %204, %208 : vector<32x16xf32>
    %210 = vector.extract_strided_slice %172 {offsets = [0, 7], sizes = [32, 1], strides = [1, 1]} : vector<32x8xf32> to vector<32x1xf32>
    %211 = vector.extract_strided_slice %30 {offsets = [0, 112], sizes = [32, 16], strides = [1, 1]} : vector<32x128xf32> to vector<32x16xf32>
    %212 = vector.broadcast %210 : vector<32x1xf32> to vector<32x16xf32>
    %213 = arith.mulf %212, %211 : vector<32x16xf32>
    %214 = arith.addf %209, %213 : vector<32x16xf32>
    %215 = tpu.concatenate %214, %214 in 1 : vector<32x16xf32>, vector<32x16xf32> -> vector<32x32xf32>
    %216 = arith.addf %175, %215 : vector<32x32xf32>
    %217 = arith.addf %216, %31 : vector<32x32xf32>
    %cst_26 = arith.constant dense<0xFF800000> : vector<32xf32>
    %218 = vector.multi_reduction <maximumf>, %217, %cst_26 [1] : vector<32x32xf32> to vector<32xf32>
    %219 = vector.shape_cast %218 : vector<32xf32> to vector<32x1xf32>
    %220 = vector.broadcast %219 : vector<32x1xf32> to vector<32x32xf32>
    %221 = arith.subf %217, %220 : vector<32x32xf32>
    %222 = math.exp %221 : vector<32x32xf32>
    %cst_27 = arith.constant dense<0.000000e+00> : vector<32xf32>
    %223 = vector.multi_reduction <add>, %222, %cst_27 [1] : vector<32x32xf32> to vector<32xf32>
    %224 = vector.shape_cast %223 : vector<32xf32> to vector<32x1xf32>
    %225 = tpu.reciprocal %224 {approx = true} : vector<32x1xf32> -> vector<32x1xf32>
    %226 = vector.broadcast %225 : vector<32x1xf32> to vector<32x32xf32>
    %227 = arith.mulf %222, %226 : vector<32x32xf32>
    %cst_28 = arith.constant dense<0.000000e+00> : vector<32x8xf32>
    %228 = tpu.matmul %227, %174, %cst_28 {dimension_numbers = #tpu.dot_dimension_numbers<[1], [0], [0], [1], [0, 0, 1, 1], [], []>} : vector<32x32xf32>, vector<32x8xf32>, vector<32x8xf32> -> vector<32x8xf32>
    %229 = vector.extract_strided_slice %57 {offsets = [0, 24], sizes = [32, 8], strides = [1, 1]} : vector<32x96xf32> to vector<32x8xf32>
    %230 = vector.extract_strided_slice %57 {offsets = [0, 56], sizes = [32, 8], strides = [1, 1]} : vector<32x96xf32> to vector<32x8xf32>
    %231 = vector.extract_strided_slice %57 {offsets = [0, 88], sizes = [32, 8], strides = [1, 1]} : vector<32x96xf32> to vector<32x8xf32>
    %cst_29 = arith.constant dense<0.000000e+00> : vector<32x32xf32>
    %232 = tpu.matmul %229, %230, %cst_29 {dimension_numbers = #tpu.dot_dimension_numbers<[1], [1], [0], [0], [0, 0, 1, 0], [], []>} : vector<32x8xf32>, vector<32x8xf32>, vector<32x32xf32> -> vector<32x32xf32>
    %233 = vector.extract_strided_slice %229 {offsets = [0, 0], sizes = [32, 1], strides = [1, 1]} : vector<32x8xf32> to vector<32x1xf32>
    %234 = vector.extract_strided_slice %30 {offsets = [0, 0], sizes = [32, 16], strides = [1, 1]} : vector<32x128xf32> to vector<32x16xf32>
    %235 = vector.broadcast %233 : vector<32x1xf32> to vector<32x16xf32>
    %236 = arith.mulf %235, %234 : vector<32x16xf32>
    %237 = vector.extract_strided_slice %229 {offsets = [0, 1], sizes = [32, 1], strides = [1, 1]} : vector<32x8xf32> to vector<32x1xf32>
    %238 = vector.extract_strided_slice %30 {offsets = [0, 16], sizes = [32, 16], strides = [1, 1]} : vector<32x128xf32> to vector<32x16xf32>
    %239 = vector.broadcast %237 : vector<32x1xf32> to vector<32x16xf32>
    %240 = arith.mulf %239, %238 : vector<32x16xf32>
    %241 = arith.addf %236, %240 : vector<32x16xf32>
    %242 = vector.extract_strided_slice %229 {offsets = [0, 2], sizes = [32, 1], strides = [1, 1]} : vector<32x8xf32> to vector<32x1xf32>
    %243 = vector.extract_strided_slice %30 {offsets = [0, 32], sizes = [32, 16], strides = [1, 1]} : vector<32x128xf32> to vector<32x16xf32>
    %244 = vector.broadcast %242 : vector<32x1xf32> to vector<32x16xf32>
    %245 = arith.mulf %244, %243 : vector<32x16xf32>
    %246 = arith.addf %241, %245 : vector<32x16xf32>
    %247 = vector.extract_strided_slice %229 {offsets = [0, 3], sizes = [32, 1], strides = [1, 1]} : vector<32x8xf32> to vector<32x1xf32>
    %248 = vector.extract_strided_slice %30 {offsets = [0, 48], sizes = [32, 16], strides = [1, 1]} : vector<32x128xf32> to vector<32x16xf32>
    %249 = vector.broadcast %247 : vector<32x1xf32> to vector<32x16xf32>
    %250 = arith.mulf %249, %248 : vector<32x16xf32>
    %251 = arith.addf %246, %250 : vector<32x16xf32>
    %252 = vector.extract_strided_slice %229 {offsets = [0, 4], sizes = [32, 1], strides = [1, 1]} : vector<32x8xf32> to vector<32x1xf32>
    %253 = vector.extract_strided_slice %30 {offsets = [0, 64], sizes = [32, 16], strides = [1, 1]} : vector<32x128xf32> to vector<32x16xf32>
    %254 = vector.broadcast %252 : vector<32x1xf32> to vector<32x16xf32>
    %255 = arith.mulf %254, %253 : vector<32x16xf32>
    %256 = arith.addf %251, %255 : vector<32x16xf32>
    %257 = vector.extract_strided_slice %229 {offsets = [0, 5], sizes = [32, 1], strides = [1, 1]} : vector<32x8xf32> to vector<32x1xf32>
    %258 = vector.extract_strided_slice %30 {offsets = [0, 80], sizes = [32, 16], strides = [1, 1]} : vector<32x128xf32> to vector<32x16xf32>
    %259 = vector.broadcast %257 : vector<32x1xf32> to vector<32x16xf32>
    %260 = arith.mulf %259, %258 : vector<32x16xf32>
    %261 = arith.addf %256, %260 : vector<32x16xf32>
    %262 = vector.extract_strided_slice %229 {offsets = [0, 6], sizes = [32, 1], strides = [1, 1]} : vector<32x8xf32> to vector<32x1xf32>
    %263 = vector.extract_strided_slice %30 {offsets = [0, 96], sizes = [32, 16], strides = [1, 1]} : vector<32x128xf32> to vector<32x16xf32>
    %264 = vector.broadcast %262 : vector<32x1xf32> to vector<32x16xf32>
    %265 = arith.mulf %264, %263 : vector<32x16xf32>
    %266 = arith.addf %261, %265 : vector<32x16xf32>
    %267 = vector.extract_strided_slice %229 {offsets = [0, 7], sizes = [32, 1], strides = [1, 1]} : vector<32x8xf32> to vector<32x1xf32>
    %268 = vector.extract_strided_slice %30 {offsets = [0, 112], sizes = [32, 16], strides = [1, 1]} : vector<32x128xf32> to vector<32x16xf32>
    %269 = vector.broadcast %267 : vector<32x1xf32> to vector<32x16xf32>
    %270 = arith.mulf %269, %268 : vector<32x16xf32>
    %271 = arith.addf %266, %270 : vector<32x16xf32>
    %272 = tpu.concatenate %271, %271 in 1 : vector<32x16xf32>, vector<32x16xf32> -> vector<32x32xf32>
    %273 = arith.addf %232, %272 : vector<32x32xf32>
    %274 = arith.addf %273, %31 : vector<32x32xf32>
    %cst_30 = arith.constant dense<0xFF800000> : vector<32xf32>
    %275 = vector.multi_reduction <maximumf>, %274, %cst_30 [1] : vector<32x32xf32> to vector<32xf32>
    %276 = vector.shape_cast %275 : vector<32xf32> to vector<32x1xf32>
    %277 = vector.broadcast %276 : vector<32x1xf32> to vector<32x32xf32>
    %278 = arith.subf %274, %277 : vector<32x32xf32>
    %279 = math.exp %278 : vector<32x32xf32>
    %cst_31 = arith.constant dense<0.000000e+00> : vector<32xf32>
    %280 = vector.multi_reduction <add>, %279, %cst_31 [1] : vector<32x32xf32> to vector<32xf32>
    %281 = vector.shape_cast %280 : vector<32xf32> to vector<32x1xf32>
    %282 = tpu.reciprocal %281 {approx = true} : vector<32x1xf32> -> vector<32x1xf32>
    %283 = vector.broadcast %282 : vector<32x1xf32> to vector<32x32xf32>
    %284 = arith.mulf %279, %283 : vector<32x32xf32>
    %cst_32 = arith.constant dense<0.000000e+00> : vector<32x8xf32>
    %285 = tpu.matmul %284, %231, %cst_32 {dimension_numbers = #tpu.dot_dimension_numbers<[1], [0], [0], [1], [0, 0, 1, 1], [], []>} : vector<32x32xf32>, vector<32x8xf32>, vector<32x8xf32> -> vector<32x8xf32>
    %286 = tpu.concatenate %114, %171, %228, %285 in 1 : vector<32x8xf32>, vector<32x8xf32>, vector<32x8xf32>, vector<32x8xf32> -> vector<32x32xf32>
    %c80 = arith.constant 80 : index
    %c0_33 = arith.constant 0 : index
    %287 = vector.load %arg2[%c80, %c0_33] : memref<520x128xf32, #tpu.memory_space<vmem>>, vector<32x32xf32>
    %cst_34 = arith.constant dense<0.000000e+00> : vector<32x32xf32>
    %288 = tpu.matmul %286, %287, %cst_34 {dimension_numbers = #tpu.dot_dimension_numbers<[1], [0], [0], [1], [0, 0, 1, 1], [], []>} : vector<32x32xf32>, vector<32x32xf32>, vector<32x32xf32> -> vector<32x32xf32>
    %289 = arith.addf %29, %288 : vector<32x32xf32>
    %290 = vector.extract_strided_slice %0 {offsets = [6, 0], sizes = [1, 32], strides = [1, 1]} : vector<24x128xf32> to vector<1x32xf32>
    %291 = vector.extract_strided_slice %0 {offsets = [8, 0], sizes = [1, 32], strides = [1, 1]} : vector<24x128xf32> to vector<1x32xf32>
    %cst_35 = arith.constant dense<0.000000e+00> : vector<32xf32>
    %292 = vector.multi_reduction <add>, %289, %cst_35 [1] : vector<32x32xf32> to vector<32xf32>
    %293 = vector.shape_cast %292 : vector<32xf32> to vector<32x1xf32>
    %cst_36 = arith.constant 3.200000e+01 : f32
    %294 = vector.broadcast %cst_36 : f32 to vector<32x1xf32>
    %295 = arith.divf %293, %294 : vector<32x1xf32>
    %296 = vector.broadcast %295 : vector<32x1xf32> to vector<32x32xf32>
    %297 = arith.subf %289, %296 : vector<32x32xf32>
    %298 = arith.mulf %297, %297 : vector<32x32xf32>
    %cst_37 = arith.constant dense<0.000000e+00> : vector<32xf32>
    %299 = vector.multi_reduction <add>, %298, %cst_37 [1] : vector<32x32xf32> to vector<32xf32>
    %300 = vector.shape_cast %299 : vector<32xf32> to vector<32x1xf32>
    %cst_38 = arith.constant 3.200000e+01 : f32
    %301 = vector.broadcast %cst_38 : f32 to vector<32x1xf32>
    %302 = arith.divf %300, %301 : vector<32x1xf32>
    %303 = vector.broadcast %295 : vector<32x1xf32> to vector<32x32xf32>
    %304 = arith.subf %289, %303 : vector<32x32xf32>
    %cst_39 = arith.constant 9.99999974E-6 : f32
    %305 = vector.broadcast %cst_39 : f32 to vector<32x1xf32>
    %306 = arith.addf %302, %305 : vector<32x1xf32>
    %307 = math.rsqrt %306 : vector<32x1xf32>
    %308 = vector.broadcast %307 : vector<32x1xf32> to vector<32x32xf32>
    %309 = arith.mulf %304, %308 : vector<32x32xf32>
    %310 = vector.broadcast %290 : vector<1x32xf32> to vector<32x32xf32>
    %311 = arith.mulf %309, %310 : vector<32x32xf32>
    %312 = vector.broadcast %291 : vector<1x32xf32> to vector<32x32xf32>
    %313 = arith.addf %311, %312 : vector<32x32xf32>
    %c112 = arith.constant 112 : index
    %c0_40 = arith.constant 0 : index
    %314 = vector.load %arg2[%c112, %c0_40] : memref<520x128xf32, #tpu.memory_space<vmem>>, vector<32x64xf32>
    %cst_41 = arith.constant dense<0.000000e+00> : vector<32x64xf32>
    %315 = tpu.matmul %313, %314, %cst_41 {dimension_numbers = #tpu.dot_dimension_numbers<[1], [0], [0], [1], [0, 0, 1, 1], [], []>} : vector<32x32xf32>, vector<32x64xf32>, vector<32x64xf32> -> vector<32x64xf32>
    %316 = vector.extract_strided_slice %0 {offsets = [10, 0], sizes = [1, 64], strides = [1, 1]} : vector<24x128xf32> to vector<1x64xf32>
    %317 = vector.broadcast %316 : vector<1x64xf32> to vector<32x64xf32>
    %318 = arith.addf %315, %317 : vector<32x64xf32>
    %cst_42 = arith.constant 0.000000e+00 : f32
    %319 = vector.broadcast %cst_42 : f32 to vector<32x64xf32>
    %320 = arith.maximumf %318, %319 : vector<32x64xf32>
    %c144 = arith.constant 144 : index
    %c0_43 = arith.constant 0 : index
    %321 = vector.load %arg2[%c144, %c0_43] : memref<520x128xf32, #tpu.memory_space<vmem>>, vector<64x32xf32>
    %cst_44 = arith.constant dense<0.000000e+00> : vector<32x32xf32>
    %322 = tpu.matmul %320, %321, %cst_44 {dimension_numbers = #tpu.dot_dimension_numbers<[1], [0], [0], [1], [0, 0, 1, 1], [], []>} : vector<32x64xf32>, vector<64x32xf32>, vector<32x32xf32> -> vector<32x32xf32>
    %323 = arith.addf %289, %322 : vector<32x32xf32>
    %324 = vector.extract_strided_slice %0 {offsets = [12, 0], sizes = [1, 32], strides = [1, 1]} : vector<24x128xf32> to vector<1x32xf32>
    %325 = vector.broadcast %324 : vector<1x32xf32> to vector<32x32xf32>
    %326 = arith.addf %323, %325 : vector<32x32xf32>
    %327 = vector.extract_strided_slice %0 {offsets = [3, 0], sizes = [1, 32], strides = [1, 1]} : vector<24x128xf32> to vector<1x32xf32>
    %328 = vector.extract_strided_slice %0 {offsets = [5, 0], sizes = [1, 32], strides = [1, 1]} : vector<24x128xf32> to vector<1x32xf32>
    %cst_45 = arith.constant dense<0.000000e+00> : vector<32xf32>
    %329 = vector.multi_reduction <add>, %326, %cst_45 [1] : vector<32x32xf32> to vector<32xf32>
    %330 = vector.shape_cast %329 : vector<32xf32> to vector<32x1xf32>
    %cst_46 = arith.constant 3.200000e+01 : f32
    %331 = vector.broadcast %cst_46 : f32 to vector<32x1xf32>
    %332 = arith.divf %330, %331 : vector<32x1xf32>
    %333 = vector.broadcast %332 : vector<32x1xf32> to vector<32x32xf32>
    %334 = arith.subf %326, %333 : vector<32x32xf32>
    %335 = arith.mulf %334, %334 : vector<32x32xf32>
    %cst_47 = arith.constant dense<0.000000e+00> : vector<32xf32>
    %336 = vector.multi_reduction <add>, %335, %cst_47 [1] : vector<32x32xf32> to vector<32xf32>
    %337 = vector.shape_cast %336 : vector<32xf32> to vector<32x1xf32>
    %cst_48 = arith.constant 3.200000e+01 : f32
    %338 = vector.broadcast %cst_48 : f32 to vector<32x1xf32>
    %339 = arith.divf %337, %338 : vector<32x1xf32>
    %340 = vector.broadcast %332 : vector<32x1xf32> to vector<32x32xf32>
    %341 = arith.subf %326, %340 : vector<32x32xf32>
    %cst_49 = arith.constant 9.99999974E-6 : f32
    %342 = vector.broadcast %cst_49 : f32 to vector<32x1xf32>
    %343 = arith.addf %339, %342 : vector<32x1xf32>
    %344 = math.rsqrt %343 : vector<32x1xf32>
    %345 = vector.broadcast %344 : vector<32x1xf32> to vector<32x32xf32>
    %346 = arith.mulf %341, %345 : vector<32x32xf32>
    %347 = vector.broadcast %327 : vector<1x32xf32> to vector<32x32xf32>
    %348 = arith.mulf %346, %347 : vector<32x32xf32>
    %349 = vector.broadcast %328 : vector<1x32xf32> to vector<32x32xf32>
    %350 = arith.addf %348, %349 : vector<32x32xf32>
    %c208 = arith.constant 208 : index
    %c0_50 = arith.constant 0 : index
    %351 = vector.load %arg2[%c208, %c0_50] : memref<520x128xf32, #tpu.memory_space<vmem>>, vector<32x96xf32>
    %cst_51 = arith.constant dense<0.000000e+00> : vector<32x96xf32>
    %352 = tpu.matmul %350, %351, %cst_51 {dimension_numbers = #tpu.dot_dimension_numbers<[1], [0], [0], [1], [0, 0, 1, 1], [], []>} : vector<32x32xf32>, vector<32x96xf32>, vector<32x96xf32> -> vector<32x96xf32>
    %353 = vector.extract_strided_slice %352 {offsets = [0, 0], sizes = [32, 8], strides = [1, 1]} : vector<32x96xf32> to vector<32x8xf32>
    %354 = vector.extract_strided_slice %352 {offsets = [0, 32], sizes = [32, 8], strides = [1, 1]} : vector<32x96xf32> to vector<32x8xf32>
    %355 = vector.extract_strided_slice %352 {offsets = [0, 64], sizes = [32, 8], strides = [1, 1]} : vector<32x96xf32> to vector<32x8xf32>
    %cst_52 = arith.constant dense<0.000000e+00> : vector<32x32xf32>
    %356 = tpu.matmul %353, %354, %cst_52 {dimension_numbers = #tpu.dot_dimension_numbers<[1], [1], [0], [0], [0, 0, 1, 0], [], []>} : vector<32x8xf32>, vector<32x8xf32>, vector<32x32xf32> -> vector<32x32xf32>
    %357 = vector.extract_strided_slice %353 {offsets = [0, 0], sizes = [32, 1], strides = [1, 1]} : vector<32x8xf32> to vector<32x1xf32>
    %358 = vector.extract_strided_slice %30 {offsets = [0, 0], sizes = [32, 16], strides = [1, 1]} : vector<32x128xf32> to vector<32x16xf32>
    %359 = vector.broadcast %357 : vector<32x1xf32> to vector<32x16xf32>
    %360 = arith.mulf %359, %358 : vector<32x16xf32>
    %361 = vector.extract_strided_slice %353 {offsets = [0, 1], sizes = [32, 1], strides = [1, 1]} : vector<32x8xf32> to vector<32x1xf32>
    %362 = vector.extract_strided_slice %30 {offsets = [0, 16], sizes = [32, 16], strides = [1, 1]} : vector<32x128xf32> to vector<32x16xf32>
    %363 = vector.broadcast %361 : vector<32x1xf32> to vector<32x16xf32>
    %364 = arith.mulf %363, %362 : vector<32x16xf32>
    %365 = arith.addf %360, %364 : vector<32x16xf32>
    %366 = vector.extract_strided_slice %353 {offsets = [0, 2], sizes = [32, 1], strides = [1, 1]} : vector<32x8xf32> to vector<32x1xf32>
    %367 = vector.extract_strided_slice %30 {offsets = [0, 32], sizes = [32, 16], strides = [1, 1]} : vector<32x128xf32> to vector<32x16xf32>
    %368 = vector.broadcast %366 : vector<32x1xf32> to vector<32x16xf32>
    %369 = arith.mulf %368, %367 : vector<32x16xf32>
    %370 = arith.addf %365, %369 : vector<32x16xf32>
    %371 = vector.extract_strided_slice %353 {offsets = [0, 3], sizes = [32, 1], strides = [1, 1]} : vector<32x8xf32> to vector<32x1xf32>
    %372 = vector.extract_strided_slice %30 {offsets = [0, 48], sizes = [32, 16], strides = [1, 1]} : vector<32x128xf32> to vector<32x16xf32>
    %373 = vector.broadcast %371 : vector<32x1xf32> to vector<32x16xf32>
    %374 = arith.mulf %373, %372 : vector<32x16xf32>
    %375 = arith.addf %370, %374 : vector<32x16xf32>
    %376 = vector.extract_strided_slice %353 {offsets = [0, 4], sizes = [32, 1], strides = [1, 1]} : vector<32x8xf32> to vector<32x1xf32>
    %377 = vector.extract_strided_slice %30 {offsets = [0, 64], sizes = [32, 16], strides = [1, 1]} : vector<32x128xf32> to vector<32x16xf32>
    %378 = vector.broadcast %376 : vector<32x1xf32> to vector<32x16xf32>
    %379 = arith.mulf %378, %377 : vector<32x16xf32>
    %380 = arith.addf %375, %379 : vector<32x16xf32>
    %381 = vector.extract_strided_slice %353 {offsets = [0, 5], sizes = [32, 1], strides = [1, 1]} : vector<32x8xf32> to vector<32x1xf32>
    %382 = vector.extract_strided_slice %30 {offsets = [0, 80], sizes = [32, 16], strides = [1, 1]} : vector<32x128xf32> to vector<32x16xf32>
    %383 = vector.broadcast %381 : vector<32x1xf32> to vector<32x16xf32>
    %384 = arith.mulf %383, %382 : vector<32x16xf32>
    %385 = arith.addf %380, %384 : vector<32x16xf32>
    %386 = vector.extract_strided_slice %353 {offsets = [0, 6], sizes = [32, 1], strides = [1, 1]} : vector<32x8xf32> to vector<32x1xf32>
    %387 = vector.extract_strided_slice %30 {offsets = [0, 96], sizes = [32, 16], strides = [1, 1]} : vector<32x128xf32> to vector<32x16xf32>
    %388 = vector.broadcast %386 : vector<32x1xf32> to vector<32x16xf32>
    %389 = arith.mulf %388, %387 : vector<32x16xf32>
    %390 = arith.addf %385, %389 : vector<32x16xf32>
    %391 = vector.extract_strided_slice %353 {offsets = [0, 7], sizes = [32, 1], strides = [1, 1]} : vector<32x8xf32> to vector<32x1xf32>
    %392 = vector.extract_strided_slice %30 {offsets = [0, 112], sizes = [32, 16], strides = [1, 1]} : vector<32x128xf32> to vector<32x16xf32>
    %393 = vector.broadcast %391 : vector<32x1xf32> to vector<32x16xf32>
    %394 = arith.mulf %393, %392 : vector<32x16xf32>
    %395 = arith.addf %390, %394 : vector<32x16xf32>
    %396 = tpu.concatenate %395, %395 in 1 : vector<32x16xf32>, vector<32x16xf32> -> vector<32x32xf32>
    %397 = arith.addf %356, %396 : vector<32x32xf32>
    %398 = arith.addf %397, %31 : vector<32x32xf32>
    %cst_53 = arith.constant dense<0xFF800000> : vector<32xf32>
    %399 = vector.multi_reduction <maximumf>, %398, %cst_53 [1] : vector<32x32xf32> to vector<32xf32>
    %400 = vector.shape_cast %399 : vector<32xf32> to vector<32x1xf32>
    %401 = vector.broadcast %400 : vector<32x1xf32> to vector<32x32xf32>
    %402 = arith.subf %398, %401 : vector<32x32xf32>
    %403 = math.exp %402 : vector<32x32xf32>
    %cst_54 = arith.constant dense<0.000000e+00> : vector<32xf32>
    %404 = vector.multi_reduction <add>, %403, %cst_54 [1] : vector<32x32xf32> to vector<32xf32>
    %405 = vector.shape_cast %404 : vector<32xf32> to vector<32x1xf32>
    %406 = tpu.reciprocal %405 {approx = true} : vector<32x1xf32> -> vector<32x1xf32>
    %407 = vector.broadcast %406 : vector<32x1xf32> to vector<32x32xf32>
    %408 = arith.mulf %403, %407 : vector<32x32xf32>
    %cst_55 = arith.constant dense<0.000000e+00> : vector<32x8xf32>
    %409 = tpu.matmul %408, %355, %cst_55 {dimension_numbers = #tpu.dot_dimension_numbers<[1], [0], [0], [1], [0, 0, 1, 1], [], []>} : vector<32x32xf32>, vector<32x8xf32>, vector<32x8xf32> -> vector<32x8xf32>
    %410 = vector.extract_strided_slice %352 {offsets = [0, 8], sizes = [32, 8], strides = [1, 1]} : vector<32x96xf32> to vector<32x8xf32>
    %411 = vector.extract_strided_slice %352 {offsets = [0, 40], sizes = [32, 8], strides = [1, 1]} : vector<32x96xf32> to vector<32x8xf32>
    %412 = vector.extract_strided_slice %352 {offsets = [0, 72], sizes = [32, 8], strides = [1, 1]} : vector<32x96xf32> to vector<32x8xf32>
    %cst_56 = arith.constant dense<0.000000e+00> : vector<32x32xf32>
    %413 = tpu.matmul %410, %411, %cst_56 {dimension_numbers = #tpu.dot_dimension_numbers<[1], [1], [0], [0], [0, 0, 1, 0], [], []>} : vector<32x8xf32>, vector<32x8xf32>, vector<32x32xf32> -> vector<32x32xf32>
    %414 = vector.extract_strided_slice %410 {offsets = [0, 0], sizes = [32, 1], strides = [1, 1]} : vector<32x8xf32> to vector<32x1xf32>
    %415 = vector.extract_strided_slice %30 {offsets = [0, 0], sizes = [32, 16], strides = [1, 1]} : vector<32x128xf32> to vector<32x16xf32>
    %416 = vector.broadcast %414 : vector<32x1xf32> to vector<32x16xf32>
    %417 = arith.mulf %416, %415 : vector<32x16xf32>
    %418 = vector.extract_strided_slice %410 {offsets = [0, 1], sizes = [32, 1], strides = [1, 1]} : vector<32x8xf32> to vector<32x1xf32>
    %419 = vector.extract_strided_slice %30 {offsets = [0, 16], sizes = [32, 16], strides = [1, 1]} : vector<32x128xf32> to vector<32x16xf32>
    %420 = vector.broadcast %418 : vector<32x1xf32> to vector<32x16xf32>
    %421 = arith.mulf %420, %419 : vector<32x16xf32>
    %422 = arith.addf %417, %421 : vector<32x16xf32>
    %423 = vector.extract_strided_slice %410 {offsets = [0, 2], sizes = [32, 1], strides = [1, 1]} : vector<32x8xf32> to vector<32x1xf32>
    %424 = vector.extract_strided_slice %30 {offsets = [0, 32], sizes = [32, 16], strides = [1, 1]} : vector<32x128xf32> to vector<32x16xf32>
    %425 = vector.broadcast %423 : vector<32x1xf32> to vector<32x16xf32>
    %426 = arith.mulf %425, %424 : vector<32x16xf32>
    %427 = arith.addf %422, %426 : vector<32x16xf32>
    %428 = vector.extract_strided_slice %410 {offsets = [0, 3], sizes = [32, 1], strides = [1, 1]} : vector<32x8xf32> to vector<32x1xf32>
    %429 = vector.extract_strided_slice %30 {offsets = [0, 48], sizes = [32, 16], strides = [1, 1]} : vector<32x128xf32> to vector<32x16xf32>
    %430 = vector.broadcast %428 : vector<32x1xf32> to vector<32x16xf32>
    %431 = arith.mulf %430, %429 : vector<32x16xf32>
    %432 = arith.addf %427, %431 : vector<32x16xf32>
    %433 = vector.extract_strided_slice %410 {offsets = [0, 4], sizes = [32, 1], strides = [1, 1]} : vector<32x8xf32> to vector<32x1xf32>
    %434 = vector.extract_strided_slice %30 {offsets = [0, 64], sizes = [32, 16], strides = [1, 1]} : vector<32x128xf32> to vector<32x16xf32>
    %435 = vector.broadcast %433 : vector<32x1xf32> to vector<32x16xf32>
    %436 = arith.mulf %435, %434 : vector<32x16xf32>
    %437 = arith.addf %432, %436 : vector<32x16xf32>
    %438 = vector.extract_strided_slice %410 {offsets = [0, 5], sizes = [32, 1], strides = [1, 1]} : vector<32x8xf32> to vector<32x1xf32>
    %439 = vector.extract_strided_slice %30 {offsets = [0, 80], sizes = [32, 16], strides = [1, 1]} : vector<32x128xf32> to vector<32x16xf32>
    %440 = vector.broadcast %438 : vector<32x1xf32> to vector<32x16xf32>
    %441 = arith.mulf %440, %439 : vector<32x16xf32>
    %442 = arith.addf %437, %441 : vector<32x16xf32>
    %443 = vector.extract_strided_slice %410 {offsets = [0, 6], sizes = [32, 1], strides = [1, 1]} : vector<32x8xf32> to vector<32x1xf32>
    %444 = vector.extract_strided_slice %30 {offsets = [0, 96], sizes = [32, 16], strides = [1, 1]} : vector<32x128xf32> to vector<32x16xf32>
    %445 = vector.broadcast %443 : vector<32x1xf32> to vector<32x16xf32>
    %446 = arith.mulf %445, %444 : vector<32x16xf32>
    %447 = arith.addf %442, %446 : vector<32x16xf32>
    %448 = vector.extract_strided_slice %410 {offsets = [0, 7], sizes = [32, 1], strides = [1, 1]} : vector<32x8xf32> to vector<32x1xf32>
    %449 = vector.extract_strided_slice %30 {offsets = [0, 112], sizes = [32, 16], strides = [1, 1]} : vector<32x128xf32> to vector<32x16xf32>
    %450 = vector.broadcast %448 : vector<32x1xf32> to vector<32x16xf32>
    %451 = arith.mulf %450, %449 : vector<32x16xf32>
    %452 = arith.addf %447, %451 : vector<32x16xf32>
    %453 = tpu.concatenate %452, %452 in 1 : vector<32x16xf32>, vector<32x16xf32> -> vector<32x32xf32>
    %454 = arith.addf %413, %453 : vector<32x32xf32>
    %455 = arith.addf %454, %31 : vector<32x32xf32>
    %cst_57 = arith.constant dense<0xFF800000> : vector<32xf32>
    %456 = vector.multi_reduction <maximumf>, %455, %cst_57 [1] : vector<32x32xf32> to vector<32xf32>
    %457 = vector.shape_cast %456 : vector<32xf32> to vector<32x1xf32>
    %458 = vector.broadcast %457 : vector<32x1xf32> to vector<32x32xf32>
    %459 = arith.subf %455, %458 : vector<32x32xf32>
    %460 = math.exp %459 : vector<32x32xf32>
    %cst_58 = arith.constant dense<0.000000e+00> : vector<32xf32>
    %461 = vector.multi_reduction <add>, %460, %cst_58 [1] : vector<32x32xf32> to vector<32xf32>
    %462 = vector.shape_cast %461 : vector<32xf32> to vector<32x1xf32>
    %463 = tpu.reciprocal %462 {approx = true} : vector<32x1xf32> -> vector<32x1xf32>
    %464 = vector.broadcast %463 : vector<32x1xf32> to vector<32x32xf32>
    %465 = arith.mulf %460, %464 : vector<32x32xf32>
    %cst_59 = arith.constant dense<0.000000e+00> : vector<32x8xf32>
    %466 = tpu.matmul %465, %412, %cst_59 {dimension_numbers = #tpu.dot_dimension_numbers<[1], [0], [0], [1], [0, 0, 1, 1], [], []>} : vector<32x32xf32>, vector<32x8xf32>, vector<32x8xf32> -> vector<32x8xf32>
    %467 = vector.extract_strided_slice %352 {offsets = [0, 16], sizes = [32, 8], strides = [1, 1]} : vector<32x96xf32> to vector<32x8xf32>
    %468 = vector.extract_strided_slice %352 {offsets = [0, 48], sizes = [32, 8], strides = [1, 1]} : vector<32x96xf32> to vector<32x8xf32>
    %469 = vector.extract_strided_slice %352 {offsets = [0, 80], sizes = [32, 8], strides = [1, 1]} : vector<32x96xf32> to vector<32x8xf32>
    %cst_60 = arith.constant dense<0.000000e+00> : vector<32x32xf32>
    %470 = tpu.matmul %467, %468, %cst_60 {dimension_numbers = #tpu.dot_dimension_numbers<[1], [1], [0], [0], [0, 0, 1, 0], [], []>} : vector<32x8xf32>, vector<32x8xf32>, vector<32x32xf32> -> vector<32x32xf32>
    %471 = vector.extract_strided_slice %467 {offsets = [0, 0], sizes = [32, 1], strides = [1, 1]} : vector<32x8xf32> to vector<32x1xf32>
    %472 = vector.extract_strided_slice %30 {offsets = [0, 0], sizes = [32, 16], strides = [1, 1]} : vector<32x128xf32> to vector<32x16xf32>
    %473 = vector.broadcast %471 : vector<32x1xf32> to vector<32x16xf32>
    %474 = arith.mulf %473, %472 : vector<32x16xf32>
    %475 = vector.extract_strided_slice %467 {offsets = [0, 1], sizes = [32, 1], strides = [1, 1]} : vector<32x8xf32> to vector<32x1xf32>
    %476 = vector.extract_strided_slice %30 {offsets = [0, 16], sizes = [32, 16], strides = [1, 1]} : vector<32x128xf32> to vector<32x16xf32>
    %477 = vector.broadcast %475 : vector<32x1xf32> to vector<32x16xf32>
    %478 = arith.mulf %477, %476 : vector<32x16xf32>
    %479 = arith.addf %474, %478 : vector<32x16xf32>
    %480 = vector.extract_strided_slice %467 {offsets = [0, 2], sizes = [32, 1], strides = [1, 1]} : vector<32x8xf32> to vector<32x1xf32>
    %481 = vector.extract_strided_slice %30 {offsets = [0, 32], sizes = [32, 16], strides = [1, 1]} : vector<32x128xf32> to vector<32x16xf32>
    %482 = vector.broadcast %480 : vector<32x1xf32> to vector<32x16xf32>
    %483 = arith.mulf %482, %481 : vector<32x16xf32>
    %484 = arith.addf %479, %483 : vector<32x16xf32>
    %485 = vector.extract_strided_slice %467 {offsets = [0, 3], sizes = [32, 1], strides = [1, 1]} : vector<32x8xf32> to vector<32x1xf32>
    %486 = vector.extract_strided_slice %30 {offsets = [0, 48], sizes = [32, 16], strides = [1, 1]} : vector<32x128xf32> to vector<32x16xf32>
    %487 = vector.broadcast %485 : vector<32x1xf32> to vector<32x16xf32>
    %488 = arith.mulf %487, %486 : vector<32x16xf32>
    %489 = arith.addf %484, %488 : vector<32x16xf32>
    %490 = vector.extract_strided_slice %467 {offsets = [0, 4], sizes = [32, 1], strides = [1, 1]} : vector<32x8xf32> to vector<32x1xf32>
    %491 = vector.extract_strided_slice %30 {offsets = [0, 64], sizes = [32, 16], strides = [1, 1]} : vector<32x128xf32> to vector<32x16xf32>
    %492 = vector.broadcast %490 : vector<32x1xf32> to vector<32x16xf32>
    %493 = arith.mulf %492, %491 : vector<32x16xf32>
    %494 = arith.addf %489, %493 : vector<32x16xf32>
    %495 = vector.extract_strided_slice %467 {offsets = [0, 5], sizes = [32, 1], strides = [1, 1]} : vector<32x8xf32> to vector<32x1xf32>
    %496 = vector.extract_strided_slice %30 {offsets = [0, 80], sizes = [32, 16], strides = [1, 1]} : vector<32x128xf32> to vector<32x16xf32>
    %497 = vector.broadcast %495 : vector<32x1xf32> to vector<32x16xf32>
    %498 = arith.mulf %497, %496 : vector<32x16xf32>
    %499 = arith.addf %494, %498 : vector<32x16xf32>
    %500 = vector.extract_strided_slice %467 {offsets = [0, 6], sizes = [32, 1], strides = [1, 1]} : vector<32x8xf32> to vector<32x1xf32>
    %501 = vector.extract_strided_slice %30 {offsets = [0, 96], sizes = [32, 16], strides = [1, 1]} : vector<32x128xf32> to vector<32x16xf32>
    %502 = vector.broadcast %500 : vector<32x1xf32> to vector<32x16xf32>
    %503 = arith.mulf %502, %501 : vector<32x16xf32>
    %504 = arith.addf %499, %503 : vector<32x16xf32>
    %505 = vector.extract_strided_slice %467 {offsets = [0, 7], sizes = [32, 1], strides = [1, 1]} : vector<32x8xf32> to vector<32x1xf32>
    %506 = vector.extract_strided_slice %30 {offsets = [0, 112], sizes = [32, 16], strides = [1, 1]} : vector<32x128xf32> to vector<32x16xf32>
    %507 = vector.broadcast %505 : vector<32x1xf32> to vector<32x16xf32>
    %508 = arith.mulf %507, %506 : vector<32x16xf32>
    %509 = arith.addf %504, %508 : vector<32x16xf32>
    %510 = tpu.concatenate %509, %509 in 1 : vector<32x16xf32>, vector<32x16xf32> -> vector<32x32xf32>
    %511 = arith.addf %470, %510 : vector<32x32xf32>
    %512 = arith.addf %511, %31 : vector<32x32xf32>
    %cst_61 = arith.constant dense<0xFF800000> : vector<32xf32>
    %513 = vector.multi_reduction <maximumf>, %512, %cst_61 [1] : vector<32x32xf32> to vector<32xf32>
    %514 = vector.shape_cast %513 : vector<32xf32> to vector<32x1xf32>
    %515 = vector.broadcast %514 : vector<32x1xf32> to vector<32x32xf32>
    %516 = arith.subf %512, %515 : vector<32x32xf32>
    %517 = math.exp %516 : vector<32x32xf32>
    %cst_62 = arith.constant dense<0.000000e+00> : vector<32xf32>
    %518 = vector.multi_reduction <add>, %517, %cst_62 [1] : vector<32x32xf32> to vector<32xf32>
    %519 = vector.shape_cast %518 : vector<32xf32> to vector<32x1xf32>
    %520 = tpu.reciprocal %519 {approx = true} : vector<32x1xf32> -> vector<32x1xf32>
    %521 = vector.broadcast %520 : vector<32x1xf32> to vector<32x32xf32>
    %522 = arith.mulf %517, %521 : vector<32x32xf32>
    %cst_63 = arith.constant dense<0.000000e+00> : vector<32x8xf32>
    %523 = tpu.matmul %522, %469, %cst_63 {dimension_numbers = #tpu.dot_dimension_numbers<[1], [0], [0], [1], [0, 0, 1, 1], [], []>} : vector<32x32xf32>, vector<32x8xf32>, vector<32x8xf32> -> vector<32x8xf32>
    %524 = vector.extract_strided_slice %352 {offsets = [0, 24], sizes = [32, 8], strides = [1, 1]} : vector<32x96xf32> to vector<32x8xf32>
    %525 = vector.extract_strided_slice %352 {offsets = [0, 56], sizes = [32, 8], strides = [1, 1]} : vector<32x96xf32> to vector<32x8xf32>
    %526 = vector.extract_strided_slice %352 {offsets = [0, 88], sizes = [32, 8], strides = [1, 1]} : vector<32x96xf32> to vector<32x8xf32>
    %cst_64 = arith.constant dense<0.000000e+00> : vector<32x32xf32>
    %527 = tpu.matmul %524, %525, %cst_64 {dimension_numbers = #tpu.dot_dimension_numbers<[1], [1], [0], [0], [0, 0, 1, 0], [], []>} : vector<32x8xf32>, vector<32x8xf32>, vector<32x32xf32> -> vector<32x32xf32>
    %528 = vector.extract_strided_slice %524 {offsets = [0, 0], sizes = [32, 1], strides = [1, 1]} : vector<32x8xf32> to vector<32x1xf32>
    %529 = vector.extract_strided_slice %30 {offsets = [0, 0], sizes = [32, 16], strides = [1, 1]} : vector<32x128xf32> to vector<32x16xf32>
    %530 = vector.broadcast %528 : vector<32x1xf32> to vector<32x16xf32>
    %531 = arith.mulf %530, %529 : vector<32x16xf32>
    %532 = vector.extract_strided_slice %524 {offsets = [0, 1], sizes = [32, 1], strides = [1, 1]} : vector<32x8xf32> to vector<32x1xf32>
    %533 = vector.extract_strided_slice %30 {offsets = [0, 16], sizes = [32, 16], strides = [1, 1]} : vector<32x128xf32> to vector<32x16xf32>
    %534 = vector.broadcast %532 : vector<32x1xf32> to vector<32x16xf32>
    %535 = arith.mulf %534, %533 : vector<32x16xf32>
    %536 = arith.addf %531, %535 : vector<32x16xf32>
    %537 = vector.extract_strided_slice %524 {offsets = [0, 2], sizes = [32, 1], strides = [1, 1]} : vector<32x8xf32> to vector<32x1xf32>
    %538 = vector.extract_strided_slice %30 {offsets = [0, 32], sizes = [32, 16], strides = [1, 1]} : vector<32x128xf32> to vector<32x16xf32>
    %539 = vector.broadcast %537 : vector<32x1xf32> to vector<32x16xf32>
    %540 = arith.mulf %539, %538 : vector<32x16xf32>
    %541 = arith.addf %536, %540 : vector<32x16xf32>
    %542 = vector.extract_strided_slice %524 {offsets = [0, 3], sizes = [32, 1], strides = [1, 1]} : vector<32x8xf32> to vector<32x1xf32>
    %543 = vector.extract_strided_slice %30 {offsets = [0, 48], sizes = [32, 16], strides = [1, 1]} : vector<32x128xf32> to vector<32x16xf32>
    %544 = vector.broadcast %542 : vector<32x1xf32> to vector<32x16xf32>
    %545 = arith.mulf %544, %543 : vector<32x16xf32>
    %546 = arith.addf %541, %545 : vector<32x16xf32>
    %547 = vector.extract_strided_slice %524 {offsets = [0, 4], sizes = [32, 1], strides = [1, 1]} : vector<32x8xf32> to vector<32x1xf32>
    %548 = vector.extract_strided_slice %30 {offsets = [0, 64], sizes = [32, 16], strides = [1, 1]} : vector<32x128xf32> to vector<32x16xf32>
    %549 = vector.broadcast %547 : vector<32x1xf32> to vector<32x16xf32>
    %550 = arith.mulf %549, %548 : vector<32x16xf32>
    %551 = arith.addf %546, %550 : vector<32x16xf32>
    %552 = vector.extract_strided_slice %524 {offsets = [0, 5], sizes = [32, 1], strides = [1, 1]} : vector<32x8xf32> to vector<32x1xf32>
    %553 = vector.extract_strided_slice %30 {offsets = [0, 80], sizes = [32, 16], strides = [1, 1]} : vector<32x128xf32> to vector<32x16xf32>
    %554 = vector.broadcast %552 : vector<32x1xf32> to vector<32x16xf32>
    %555 = arith.mulf %554, %553 : vector<32x16xf32>
    %556 = arith.addf %551, %555 : vector<32x16xf32>
    %557 = vector.extract_strided_slice %524 {offsets = [0, 6], sizes = [32, 1], strides = [1, 1]} : vector<32x8xf32> to vector<32x1xf32>
    %558 = vector.extract_strided_slice %30 {offsets = [0, 96], sizes = [32, 16], strides = [1, 1]} : vector<32x128xf32> to vector<32x16xf32>
    %559 = vector.broadcast %557 : vector<32x1xf32> to vector<32x16xf32>
    %560 = arith.mulf %559, %558 : vector<32x16xf32>
    %561 = arith.addf %556, %560 : vector<32x16xf32>
    %562 = vector.extract_strided_slice %524 {offsets = [0, 7], sizes = [32, 1], strides = [1, 1]} : vector<32x8xf32> to vector<32x1xf32>
    %563 = vector.extract_strided_slice %30 {offsets = [0, 112], sizes = [32, 16], strides = [1, 1]} : vector<32x128xf32> to vector<32x16xf32>
    %564 = vector.broadcast %562 : vector<32x1xf32> to vector<32x16xf32>
    %565 = arith.mulf %564, %563 : vector<32x16xf32>
    %566 = arith.addf %561, %565 : vector<32x16xf32>
    %567 = tpu.concatenate %566, %566 in 1 : vector<32x16xf32>, vector<32x16xf32> -> vector<32x32xf32>
    %568 = arith.addf %527, %567 : vector<32x32xf32>
    %569 = arith.addf %568, %31 : vector<32x32xf32>
    %cst_65 = arith.constant dense<0xFF800000> : vector<32xf32>
    %570 = vector.multi_reduction <maximumf>, %569, %cst_65 [1] : vector<32x32xf32> to vector<32xf32>
    %571 = vector.shape_cast %570 : vector<32xf32> to vector<32x1xf32>
    %572 = vector.broadcast %571 : vector<32x1xf32> to vector<32x32xf32>
    %573 = arith.subf %569, %572 : vector<32x32xf32>
    %574 = math.exp %573 : vector<32x32xf32>
    %cst_66 = arith.constant dense<0.000000e+00> : vector<32xf32>
    %575 = vector.multi_reduction <add>, %574, %cst_66 [1] : vector<32x32xf32> to vector<32xf32>
    %576 = vector.shape_cast %575 : vector<32xf32> to vector<32x1xf32>
    %577 = tpu.reciprocal %576 {approx = true} : vector<32x1xf32> -> vector<32x1xf32>
    %578 = vector.broadcast %577 : vector<32x1xf32> to vector<32x32xf32>
    %579 = arith.mulf %574, %578 : vector<32x32xf32>
    %cst_67 = arith.constant dense<0.000000e+00> : vector<32x8xf32>
    %580 = tpu.matmul %579, %526, %cst_67 {dimension_numbers = #tpu.dot_dimension_numbers<[1], [0], [0], [1], [0, 0, 1, 1], [], []>} : vector<32x32xf32>, vector<32x8xf32>, vector<32x8xf32> -> vector<32x8xf32>
    %581 = tpu.concatenate %409, %466, %523, %580 in 1 : vector<32x8xf32>, vector<32x8xf32>, vector<32x8xf32>, vector<32x8xf32> -> vector<32x32xf32>
    %c240 = arith.constant 240 : index
    %c0_68 = arith.constant 0 : index
    %582 = vector.load %arg2[%c240, %c0_68] : memref<520x128xf32, #tpu.memory_space<vmem>>, vector<32x32xf32>
    %cst_69 = arith.constant dense<0.000000e+00> : vector<32x32xf32>
    %583 = tpu.matmul %581, %582, %cst_69 {dimension_numbers = #tpu.dot_dimension_numbers<[1], [0], [0], [1], [0, 0, 1, 1], [], []>} : vector<32x32xf32>, vector<32x32xf32>, vector<32x32xf32> -> vector<32x32xf32>
    %584 = arith.addf %326, %583 : vector<32x32xf32>
    %585 = vector.extract_strided_slice %0 {offsets = [7, 0], sizes = [1, 32], strides = [1, 1]} : vector<24x128xf32> to vector<1x32xf32>
    %586 = vector.extract_strided_slice %0 {offsets = [9, 0], sizes = [1, 32], strides = [1, 1]} : vector<24x128xf32> to vector<1x32xf32>
    %cst_70 = arith.constant dense<0.000000e+00> : vector<32xf32>
    %587 = vector.multi_reduction <add>, %584, %cst_70 [1] : vector<32x32xf32> to vector<32xf32>
    %588 = vector.shape_cast %587 : vector<32xf32> to vector<32x1xf32>
    %cst_71 = arith.constant 3.200000e+01 : f32
    %589 = vector.broadcast %cst_71 : f32 to vector<32x1xf32>
    %590 = arith.divf %588, %589 : vector<32x1xf32>
    %591 = vector.broadcast %590 : vector<32x1xf32> to vector<32x32xf32>
    %592 = arith.subf %584, %591 : vector<32x32xf32>
    %593 = arith.mulf %592, %592 : vector<32x32xf32>
    %cst_72 = arith.constant dense<0.000000e+00> : vector<32xf32>
    %594 = vector.multi_reduction <add>, %593, %cst_72 [1] : vector<32x32xf32> to vector<32xf32>
    %595 = vector.shape_cast %594 : vector<32xf32> to vector<32x1xf32>
    %cst_73 = arith.constant 3.200000e+01 : f32
    %596 = vector.broadcast %cst_73 : f32 to vector<32x1xf32>
    %597 = arith.divf %595, %596 : vector<32x1xf32>
    %598 = vector.broadcast %590 : vector<32x1xf32> to vector<32x32xf32>
    %599 = arith.subf %584, %598 : vector<32x32xf32>
    %cst_74 = arith.constant 9.99999974E-6 : f32
    %600 = vector.broadcast %cst_74 : f32 to vector<32x1xf32>
    %601 = arith.addf %597, %600 : vector<32x1xf32>
    %602 = math.rsqrt %601 : vector<32x1xf32>
    %603 = vector.broadcast %602 : vector<32x1xf32> to vector<32x32xf32>
    %604 = arith.mulf %599, %603 : vector<32x32xf32>
    %605 = vector.broadcast %585 : vector<1x32xf32> to vector<32x32xf32>
    %606 = arith.mulf %604, %605 : vector<32x32xf32>
    %607 = vector.broadcast %586 : vector<1x32xf32> to vector<32x32xf32>
    %608 = arith.addf %606, %607 : vector<32x32xf32>
    %c272 = arith.constant 272 : index
    %c0_75 = arith.constant 0 : index
    %609 = vector.load %arg2[%c272, %c0_75] : memref<520x128xf32, #tpu.memory_space<vmem>>, vector<32x64xf32>
    %cst_76 = arith.constant dense<0.000000e+00> : vector<32x64xf32>
    %610 = tpu.matmul %608, %609, %cst_76 {dimension_numbers = #tpu.dot_dimension_numbers<[1], [0], [0], [1], [0, 0, 1, 1], [], []>} : vector<32x32xf32>, vector<32x64xf32>, vector<32x64xf32> -> vector<32x64xf32>
    %611 = vector.extract_strided_slice %0 {offsets = [11, 0], sizes = [1, 64], strides = [1, 1]} : vector<24x128xf32> to vector<1x64xf32>
    %612 = vector.broadcast %611 : vector<1x64xf32> to vector<32x64xf32>
    %613 = arith.addf %610, %612 : vector<32x64xf32>
    %cst_77 = arith.constant 0.000000e+00 : f32
    %614 = vector.broadcast %cst_77 : f32 to vector<32x64xf32>
    %615 = arith.maximumf %613, %614 : vector<32x64xf32>
    %c304 = arith.constant 304 : index
    %c0_78 = arith.constant 0 : index
    %616 = vector.load %arg2[%c304, %c0_78] : memref<520x128xf32, #tpu.memory_space<vmem>>, vector<64x32xf32>
    %cst_79 = arith.constant dense<0.000000e+00> : vector<32x32xf32>
    %617 = tpu.matmul %615, %616, %cst_79 {dimension_numbers = #tpu.dot_dimension_numbers<[1], [0], [0], [1], [0, 0, 1, 1], [], []>} : vector<32x64xf32>, vector<64x32xf32>, vector<32x32xf32> -> vector<32x32xf32>
    %618 = arith.addf %584, %617 : vector<32x32xf32>
    %619 = vector.extract_strided_slice %0 {offsets = [13, 0], sizes = [1, 32], strides = [1, 1]} : vector<24x128xf32> to vector<1x32xf32>
    %620 = vector.broadcast %619 : vector<1x32xf32> to vector<32x32xf32>
    %621 = arith.addf %618, %620 : vector<32x32xf32>
    %622 = vector.extract_strided_slice %0 {offsets = [14, 0], sizes = [1, 32], strides = [1, 1]} : vector<24x128xf32> to vector<1x32xf32>
    %623 = vector.extract_strided_slice %0 {offsets = [15, 0], sizes = [1, 32], strides = [1, 1]} : vector<24x128xf32> to vector<1x32xf32>
    %cst_80 = arith.constant dense<0.000000e+00> : vector<32xf32>
    %624 = vector.multi_reduction <add>, %621, %cst_80 [1] : vector<32x32xf32> to vector<32xf32>
    %625 = vector.shape_cast %624 : vector<32xf32> to vector<32x1xf32>
    %cst_81 = arith.constant 3.200000e+01 : f32
    %626 = vector.broadcast %cst_81 : f32 to vector<32x1xf32>
    %627 = arith.divf %625, %626 : vector<32x1xf32>
    %628 = vector.broadcast %627 : vector<32x1xf32> to vector<32x32xf32>
    %629 = arith.subf %621, %628 : vector<32x32xf32>
    %630 = arith.mulf %629, %629 : vector<32x32xf32>
    %cst_82 = arith.constant dense<0.000000e+00> : vector<32xf32>
    %631 = vector.multi_reduction <add>, %630, %cst_82 [1] : vector<32x32xf32> to vector<32xf32>
    %632 = vector.shape_cast %631 : vector<32xf32> to vector<32x1xf32>
    %cst_83 = arith.constant 3.200000e+01 : f32
    %633 = vector.broadcast %cst_83 : f32 to vector<32x1xf32>
    %634 = arith.divf %632, %633 : vector<32x1xf32>
    %635 = vector.broadcast %627 : vector<32x1xf32> to vector<32x32xf32>
    %636 = arith.subf %621, %635 : vector<32x32xf32>
    %cst_84 = arith.constant 9.99999974E-6 : f32
    %637 = vector.broadcast %cst_84 : f32 to vector<32x1xf32>
    %638 = arith.addf %634, %637 : vector<32x1xf32>
    %639 = math.rsqrt %638 : vector<32x1xf32>
    %640 = vector.broadcast %639 : vector<32x1xf32> to vector<32x32xf32>
    %641 = arith.mulf %636, %640 : vector<32x32xf32>
    %642 = vector.broadcast %622 : vector<1x32xf32> to vector<32x32xf32>
    %643 = arith.mulf %641, %642 : vector<32x32xf32>
    %644 = vector.broadcast %623 : vector<1x32xf32> to vector<32x32xf32>
    %645 = arith.addf %643, %644 : vector<32x32xf32>
    %c368 = arith.constant 368 : index
    %c0_85 = arith.constant 0 : index
    %646 = vector.load %arg2[%c368, %c0_85] : memref<520x128xf32, #tpu.memory_space<vmem>>, vector<32x32xf32>
    %cst_86 = arith.constant dense<0.000000e+00> : vector<32x32xf32>
    %647 = tpu.matmul %645, %646, %cst_86 {dimension_numbers = #tpu.dot_dimension_numbers<[1], [0], [0], [1], [0, 0, 1, 1], [], []>} : vector<32x32xf32>, vector<32x32xf32>, vector<32x32xf32> -> vector<32x32xf32>
    %648 = vector.extract_strided_slice %0 {offsets = [16, 0], sizes = [1, 32], strides = [1, 1]} : vector<24x128xf32> to vector<1x32xf32>
    %649 = vector.broadcast %648 : vector<1x32xf32> to vector<32x32xf32>
    %650 = arith.addf %647, %649 : vector<32x32xf32>
    %651 = vector.extract_strided_slice %0 {offsets = [18, 4], sizes = [1, 1], strides = [1, 1]} : vector<24x128xf32> to vector<1x1xf32>
    %cst_87 = arith.constant 0.000000e+00 : f32
    %652 = vector.broadcast %cst_87 : f32 to vector<32x32xf32>
    %653 = arith.cmpf oge, %650, %652 : vector<32x32xf32>
    %654 = vector.broadcast %651 : vector<1x1xf32> to vector<32x32xf32>
    %655 = arith.mulf %654, %650 : vector<32x32xf32>
    %656 = arith.select %653, %650, %655 : vector<32x32xi1>, vector<32x32xf32>
    %c400 = arith.constant 400 : index
    %c0_88 = arith.constant 0 : index
    %657 = vector.load %arg2[%c400, %c0_88] : memref<520x128xf32, #tpu.memory_space<vmem>>, vector<32x128xf32>
    %cst_89 = arith.constant dense<0.000000e+00> : vector<32x128xf32>
    %658 = tpu.matmul %656, %657, %cst_89 {dimension_numbers = #tpu.dot_dimension_numbers<[1], [0], [0], [1], [0, 0, 1, 1], [], []>} : vector<32x32xf32>, vector<32x128xf32>, vector<32x128xf32> -> vector<32x128xf32>
    %659 = vector.extract_strided_slice %0 {offsets = [17, 0], sizes = [1, 128], strides = [1, 1]} : vector<24x128xf32> to vector<1x128xf32>
    %660 = vector.broadcast %659 : vector<1x128xf32> to vector<32x128xf32>
    %661 = arith.addf %658, %660 : vector<32x128xf32>
    %c0_90 = arith.constant 0 : index
    %c0_91 = arith.constant 0 : index
    %662 = vector.load %arg3[%c0_90, %c0_91] : memref<32x128xf32, #tpu.memory_space<vmem>>, vector<32x128xf32>
    tpu.vector_store %arg3[%c0_90, %c0_91], %661 {strides = array<i32>} : memref<32x128xf32, #tpu.memory_space<vmem>>, vector<32x128xf32>,
    return
  }
  func.func @transform_0(%arg0: i32) -> (i32, i32) {
    %c0_i32 = arith.constant 0 : i32
    %c0_i32_0 = arith.constant 0 : i32
    return %arg0, %c0_i32 : i32, i32
  }
  func.func @transform_1(%arg0: i32) -> (i32, i32) {
    %c0_i32 = arith.constant 0 : i32
    %c0_i32_0 = arith.constant 0 : i32
    %c0_i32_1 = arith.constant 0 : i32
    return %c0_i32, %c0_i32_0 : i32, i32
  }
  func.func @transform_2(%arg0: i32) -> (i32, i32) {
    %c0_i32 = arith.constant 0 : i32
    %c0_i32_0 = arith.constant 0 : i32
    return %arg0, %c0_i32 : i32, i32
  }
}

</mosaic_0001>

<llo_original>
// kernel: tpu_custom_call.1
$region0: #{tpu_custom_call.1}
  #allocation0 [shape = 'u32[]', space=smem, size = 0x4, offset = 0x4, fixed_abs, tag = 'smem constant byte address 0x4 - core index']
  #allocation1 [shape = 'u32[72,128]{1,0:T(1,128)}', space=vmem, size = 0x9000, scoped, tag = 'internal scratch']
  %s0 = inlined_call_operand.hbm [shape: f32[32,64], index: 0, kind: input, shape index: {}]
  %s1 = inlined_call_operand.hbm [shape: f32[520,128], index: 1, kind: input, shape index: {}]
  %s2 = inlined_call_operand.hbm [shape: f32[32,128], index: 2, kind: output, shape index: {}]
  %s3 = sld [smem:[#allocation0]]
  $region26: #{tpu_custom_call.1} parent=0
    _
  %s5 = ssub.s32 1, %s3
  %s6 = scalar_select 0, %s5, %s3
  $region1: #{tpu_custom_call.1} parent=0
    #allocation2 [shape = 'u8[16384]{0}', space=vmem, size = 0x4000, scoped, tag = 'input window, operand 0, single buffered']
    #allocation3 [shape = 's32[1]{0}', space=sflag, size = 0x4, scoped, tag = 'scoped memory for tpu_custom_call.1']
    #allocation4 [shape = 's32[1]{0}', space=sflag, size = 0x4, scoped, tag = 'scoped memory for tpu_custom_call.1']
    #allocation5 [shape = 'u8[266240]{0}', space=vmem, size = 0x41000, scoped, tag = 'input window, operand 1, single buffered']
    #allocation6 [shape = 's32[1]{0}', space=sflag, size = 0x4, scoped, tag = 'scoped memory for tpu_custom_call.1']
    #allocation7 [shape = 'u8[16384]{0}', space=vmem, size = 0x4000, scoped, tag = 'output window, operand 0, single buffered']
    %7 = vsyncpa [#allocation3], 0
    %8 = vsyncpa [#allocation6], 0
    %9 = vsyncpa [#allocation4], 0
    // Predicated region
    $region2: #{tpu_custom_call.1} parent=1 // pred_check
      _
    $region3: #{tpu_custom_call.1} parent=1 // pred_check_branch
      %11 = sbr.rel (0) target = $region5
    $region4: #{tpu_custom_call.1} parent=1 // pred_region
      %13 = vsyncadd [#allocation3], 0
      %s14 = sshll.u32 %s0, 4
      %s15 = int_to_ptr.hbm [resolvable:$true] %s14
      %s16 = sshll.u32 [#allocation2], 4
      %s17 = int_to_ptr.vmem [resolvable:$true] %s16
      %22 = dma.hbm_to_vmem [thread:$0]  %s15, 512, %s17, [#allocation3], 128, 128, 8
    $region5: #{tpu_custom_call.1} parent=1 // pred_fallthru
      _
    // Predicated region
    $region6: #{tpu_custom_call.1} parent=1 // pred_check
      _
    $region7: #{tpu_custom_call.1} parent=1 // pred_check_branch
      %24 = sbr.rel (0) target = $region9
    $region8: #{tpu_custom_call.1} parent=1 // pred_region
      %26 = vsyncadd [#allocation6], 0
      %s27 = sshll.u32 %s1, 4
      %s28 = int_to_ptr.hbm [resolvable:$true] %s27
      %s29 = sshll.u32 [#allocation5], 4
      %s30 = int_to_ptr.vmem [resolvable:$true] %s29
      %35 = dma.hbm_to_vmem [thread:$0]  %s28, 8320, %s30, [#allocation6], 128, 128, 8
    $region9: #{tpu_custom_call.1} parent=1 // pred_fallthru
      _
    // Predicated region
    $region10: #{tpu_custom_call.1} parent=1 // pred_check
      _
    $region11: #{tpu_custom_call.1} parent=1 // pred_check_branch
      %37 = sbr.rel (0) target = $region13
    $region12: #{tpu_custom_call.1} parent=1 // pred_region
      %39 = dma.done [#allocation3], 512
    $region13: #{tpu_custom_call.1} parent=1 // pred_fallthru
      _
    // Predicated region
    $region14: #{tpu_custom_call.1} parent=1 // pred_check
      _
    $region15: #{tpu_custom_call.1} parent=1 // pred_check_branch
      %41 = sbr.rel (0) target = $region17
    $region16: #{tpu_custom_call.1} parent=1 // pred_region
      %43 = dma.done [#allocation6], 8320
    $region17: #{tpu_custom_call.1} parent=1 // pred_fallthru
      _
    %v44 = vld [vmem:[#allocation5 + $0x1b0] sm:$0xff]
    %v45 = vld [vmem:[#allocation5 + $0x1b8] sm:$0xff]
    %v46 = vld [vmem:[#allocation5 + $0x1c0] sm:$0xff]
    %v47 = vld [vmem:[#allocation2] sm:$0xff]
    %v48 = vld [vmem:[#allocation2 + $0x8] sm:$0xff]
    %v49 = vld [vmem:[#allocation2 + $0x10] sm:$0xff]
    %v50 = vld [vmem:[#allocation2 + $0x18] sm:$0xff]
    %52 = vset.pattern.permute.xlu0 12
    %53 = vperm.xlu0 %52, %v47
    %v54 = vpop.permute.xlu0 %53
    %57 = vset.pattern.permute.xlu0 12
    %58 = vperm.xlu0 %57, %v48
    %v59 = vpop.permute.xlu0 %58
    %62 = vset.pattern.permute.xlu0 12
    %63 = vperm.xlu0 %62, %v49
    %v64 = vpop.permute.xlu0 %63
    %67 = vset.pattern.permute.xlu0 12
    %68 = vperm.xlu0 %67, %v50
    %v69 = vpop.permute.xlu0 %68
    %v71 = vmul.f32 %v47, %v54
    %v72 = vmul.f32 %v48, %v59
    %v73 = vmul.f32 %v49, %v64
    %v74 = vmul.f32 %v50, %v69
    %v75 = vld [vmem:[#allocation5] sm:$0xff]
    %v76 = vld [vmem:[#allocation5 + $0x8] sm:$0xff]
    %v77 = vperm.slane %v44, 0
    %vm78 = vcmask 130048
    %v80 = vsel %vm78, %v71, 0
    %v83 = vsel %vm78, %v72, 0
    %v86 = vsel %vm78, %v73, 0
    %v89 = vsel %vm78, %v74, 0
    %91 = vmatpush.msra.mxu0 0.0
    %92 = vmatpush.msra.mxu0 0.0
    %93 = vmatpush.msra.mxu0 0.0
    %94 = vmatpush.msra.mxu0 0.0
    %95 = vmatpush.msra.mxu0 0.0
    %96 = vmatpush.msra.mxu0 0.0
    %97 = vmatpush.msra.mxu0 0.0
    %98 = vmatpush.msra.mxu0 0.0
    %99 = vmatpush.msra.mxu0 0.0
    %100 = vmatpush.msra.mxu0 0.0
    %101 = vmatpush.msra.mxu0 0.0
    %102 = vmatpush.msra.mxu0 0.0
    %103 = vmatpush.msra.mxu0 0.0
    %104 = vmatpush.msra.mxu0 0.0
    %105 = vmatpush.msra.mxu0 %v76
    %106 = vmatpush.msra.mxu0 %v75
    %107 = vmatmul.f32.gmra.mxu0 %v80
    %v108 = vpop.f32.mrf.mxu0
    %v109 = vadd.f32 %v77, %v108
    %110 = vmatmul.f32.gmra.mxu0 %v83
    %v111 = vpop.f32.mrf.mxu0
    %v112 = vadd.f32 %v77, %v111
    %113 = vmatmul.f32.gmra.mxu0 %v86
    %v114 = vpop.f32.mrf.mxu0
    %v115 = vadd.f32 %v77, %v114
    %116 = vmatmul.f32.gmra.mxu0 %v89
    %v117 = vpop.f32.mrf.mxu0
    %v118 = vadd.f32 %v77, %v117
    %119 = vdwg.mxu0
    %vm120 = vcmp.ge.f32.partialorder %v109, 0.0
    %vm121 = vcmp.ge.f32.partialorder %v112, 0.0
    %vm122 = vcmp.ge.f32.partialorder %v115, 0.0
    %vm123 = vcmp.ge.f32.partialorder %v118, 0.0
    %v125 = vrot.slane %v46, 2
    %s126 = vtos %v125
    %v127 = vstv %s126
    %v129 = vmul.f32 %v127, %v109
    %v130 = vmul.f32 %v127, %v112
    %v131 = vmul.f32 %v127, %v115
    %v132 = vmul.f32 %v127, %v118
    %v133 = vsel %vm120, %v109, %v129
    %v134 = vsel %vm121, %v112, %v130
    %v135 = vsel %vm122, %v115, %v131
    %v136 = vsel %vm123, %v118, %v132
    %v137 = vld [vmem:[#allocation5 + $0x10] sm:$0xff]
    %v138 = vld [vmem:[#allocation5 + $0x18] sm:$0xff]
    %v139 = vld [vmem:[#allocation5 + $0x20] sm:$0xff]
    %v140 = vld [vmem:[#allocation5 + $0x28] sm:$0xff]
    %v141 = vperm.slane %v44, 1
    %vm142 = vcmask 261120
    %v144 = vsel %vm142, %v133, 0
    %v147 = vsel %vm142, %v134, 0
    %v150 = vsel %vm142, %v135, 0
    %v153 = vsel %vm142, %v136, 0
    %155 = vmatpush.msra.mxu0 0.0
    %156 = vmatpush.msra.mxu0 0.0
    %157 = vmatpush.msra.mxu0 0.0
    %158 = vmatpush.msra.mxu0 0.0
    %159 = vmatpush.msra.mxu0 0.0
    %160 = vmatpush.msra.mxu0 0.0
    %161 = vmatpush.msra.mxu0 0.0
    %162 = vmatpush.msra.mxu0 0.0
    %163 = vmatpush.msra.mxu0 0.0
    %164 = vmatpush.msra.mxu0 0.0
    %165 = vmatpush.msra.mxu0 0.0
    %166 = vmatpush.msra.mxu0 0.0
    %167 = vmatpush.msra.mxu0 %v140
    %168 = vmatpush.msra.mxu0 %v139
    %169 = vmatpush.msra.mxu0 %v138
    %170 = vmatpush.msra.mxu0 %v137
    %171 = vmatmul.f32.gmra.mxu0 %v144
    %v172 = vpop.f32.mrf.mxu0
    %v173 = vadd.f32 %v141, %v172
    %174 = vmatmul.f32.gmra.mxu0 %v147
    %v175 = vpop.f32.mrf.mxu0
    %v176 = vadd.f32 %v141, %v175
    %177 = vmatmul.f32.gmra.mxu0 %v150
    %v178 = vpop.f32.mrf.mxu0
    %v179 = vadd.f32 %v141, %v178
    %180 = vmatmul.f32.gmra.mxu0 %v153
    %v181 = vpop.f32.mrf.mxu0
    %v182 = vadd.f32 %v141, %v181
    %183 = vdwg.mxu0
    %vm184 = vcmp.ge.f32.partialorder %v173, 0.0
    %vm185 = vcmp.ge.f32.partialorder %v176, 0.0
    %vm186 = vcmp.ge.f32.partialorder %v179, 0.0
    %vm187 = vcmp.ge.f32.partialorder %v182, 0.0
    %188 = vrot.lane.b32.xlu0 %v125, 127
    %v189 = vpop.permute.xlu0 %188
    %s190 = vtos %v189
    %v191 = vstv %s190
    %v193 = vmul.f32 %v191, %v173
    %v194 = vmul.f32 %v191, %v176
    %v195 = vmul.f32 %v191, %v179
    %v196 = vmul.f32 %v191, %v182
    %v197 = vsel %vm184, %v173, %v193
    %v198 = vsel %vm185, %v176, %v194
    %v199 = vsel %vm186, %v179, %v195
    %v200 = vsel %vm187, %v182, %v196
    %201 = vrot.lane.b32.xlu0 %v47, 112
    %v202 = vpop.permute.xlu0 %201
    %203 = vrot.lane.b32.xlu0 %v48, 112
    %v204 = vpop.permute.xlu0 %203
    %205 = vrot.lane.b32.xlu0 %v49, 112
    %v206 = vpop.permute.xlu0 %205
    %207 = vrot.lane.b32.xlu0 %v50, 112
    %v208 = vpop.permute.xlu0 %207
    %v213 = vadd.f32 %v197, %v202
    %v214 = vadd.f32 %v198, %v204
    %v215 = vadd.f32 %v199, %v206
    %v216 = vadd.f32 %v200, %v208
    %v217 = vld [vmem:[#allocation5 + $0x1c8] sm:$0xff]
    %v218 = vld [vmem:[#allocation5 + $0x1d0] sm:$0xff]
    %v219 = vld [vmem:[#allocation5 + $0x1d8] sm:$0xff]
    %v220 = vld [vmem:[#allocation5 + $0x1e0] sm:$0xff]
    %v221 = vld [vmem:[#allocation5 + $0x1e8] sm:$0xff]
    %v222 = vld [vmem:[#allocation5 + $0x1f0] sm:$0xff]
    %v223 = vld [vmem:[#allocation5 + $0x1f8] sm:$0xff]
    %v224 = vld [vmem:[#allocation5 + $0x200] sm:$0xff]
    %v225 = vsel %vm142, %v213, 0.0
    %226 = vadd.xlane.f32.xlu0 %v225
    %v227 = vpop.xlane.xlu0 %226
    %v228 = vsel %vm142, %v214, 0.0
    %229 = vadd.xlane.f32.xlu0 %v228
    %v230 = vpop.xlane.xlu0 %229
    %v231 = vsel %vm142, %v215, 0.0
    %232 = vadd.xlane.f32.xlu0 %v231
    %v233 = vpop.xlane.xlu0 %232
    %v234 = vsel %vm142, %v216, 0.0
    %235 = vadd.xlane.f32.xlu0 %v234
    %v236 = vpop.xlane.xlu0 %235
    %v237 = vrcp.pop 32.0
    %v238 = vmul.f32 32.0, %v237
    %v239 = vsub.f32 1.0, %v238
    %v240 = vmul.f32 %v237, %v239
    %v241 = vadd.f32 %v237, %v240
    %vm242 = vweird.f32 %v237
    %v243 = vsel %vm242, %v237, %v241
    %v244 = vmul.f32 %v227, %v243
    %v245 = vmul.f32 %v230, %v243
    %v246 = vmul.f32 %v233, %v243
    %v247 = vmul.f32 %v236, %v243
    %v248 = vsub.f32 %v213, %v244
    %v249 = vsub.f32 %v214, %v245
    %v250 = vsub.f32 %v215, %v246
    %v251 = vsub.f32 %v216, %v247
    %v252 = vmul.f32 %v248, %v248
    %v253 = vmul.f32 %v249, %v249
    %v254 = vmul.f32 %v250, %v250
    %v255 = vmul.f32 %v251, %v251
    %v256 = vsel %vm142, %v252, 0.0
    %257 = vadd.xlane.f32.xlu0 %v256
    %v258 = vpop.xlane.xlu0 %257
    %v259 = vsel %vm142, %v253, 0.0
    %260 = vadd.xlane.f32.xlu0 %v259
    %v261 = vpop.xlane.xlu0 %260
    %v262 = vsel %vm142, %v254, 0.0
    %263 = vadd.xlane.f32.xlu0 %v262
    %v264 = vpop.xlane.xlu0 %263
    %v265 = vsel %vm142, %v255, 0.0
    %266 = vadd.xlane.f32.xlu0 %v265
    %v267 = vpop.xlane.xlu0 %266
    %v268 = vmul.f32 %v258, %v243
    %v269 = vmul.f32 %v261, %v243
    %v270 = vmul.f32 %v264, %v243
    %v271 = vmul.f32 %v267, %v243
    %v272 = vadd.f32 %v268, 1e-05
    %v273 = vadd.f32 %v269, 1e-05
    %v274 = vadd.f32 %v270, 1e-05
    %v275 = vadd.f32 %v271, 1e-05
    %v276 = vrsqrt.pop %v272
    %v277 = vmul.f32 %v276, %v272
    %v278 = vmul.f32 %v277, %v276
    %v279 = vmul.f32 0.5, %v278
    %v280 = vsub.f32 1.5, %v279
    %v281 = vmul.f32 %v276, %v280
    %vm282 = vweird.f32 %v272
    %vm283 = vweird.f32 %v276
    %vm284 = vmor %vm282, %vm283
    %v285 = vsel %vm284, %v276, %v281
    %v286 = vrsqrt.pop %v273
    %v287 = vmul.f32 %v286, %v273
    %v288 = vmul.f32 %v287, %v286
    %v289 = vmul.f32 0.5, %v288
    %v290 = vsub.f32 1.5, %v289
    %v291 = vmul.f32 %v286, %v290
    %vm292 = vweird.f32 %v273
    %vm293 = vweird.f32 %v286
    %vm294 = vmor %vm292, %vm293
    %v295 = vsel %vm294, %v286, %v291
    %v296 = vrsqrt.pop %v274
    %v297 = vmul.f32 %v296, %v274
    %v298 = vmul.f32 %v297, %v296
    %v299 = vmul.f32 0.5, %v298
    %v300 = vsub.f32 1.5, %v299
    %v301 = vmul.f32 %v296, %v300
    %vm302 = vweird.f32 %v274
    %vm303 = vweird.f32 %v296
    %vm304 = vmor %vm302, %vm303
    %v305 = vsel %vm304, %v296, %v301
    %v306 = vrsqrt.pop %v275
    %v307 = vmul.f32 %v306, %v275
    %v308 = vmul.f32 %v307, %v306
    %v309 = vmul.f32 0.5, %v308
    %v310 = vsub.f32 1.5, %v309
    %v311 = vmul.f32 %v306, %v310
    %vm312 = vweird.f32 %v275
    %vm313 = vweird.f32 %v306
    %vm314 = vmor %vm312, %vm313
    %v315 = vsel %vm314, %v306, %v311
    %v316 = vmul.f32 %v248, %v285
    %v317 = vmul.f32 %v249, %v295
    %v318 = vmul.f32 %v250, %v305
    %v319 = vmul.f32 %v251, %v315
    %v320 = vperm.slane %v44, 2
    %v321 = vmul.f32 %v316, %v320
    %v322 = vmul.f32 %v317, %v320
    %v323 = vmul.f32 %v318, %v320
    %v324 = vmul.f32 %v319, %v320
    %v325 = vperm.slane %v44, 4
    %v326 = vadd.f32 %v321, %v325
    %v327 = vadd.f32 %v322, %v325
    %v328 = vadd.f32 %v323, %v325
    %v329 = vadd.f32 %v324, %v325
    %v330 = vld [vmem:[#allocation5 + $0x30] sm:$0xff]
    %v331 = vld [vmem:[#allocation5 + $0x38] sm:$0xff]
    %v332 = vld [vmem:[#allocation5 + $0x40] sm:$0xff]
    %v333 = vld [vmem:[#allocation5 + $0x48] sm:$0xff]
    %v335 = vsel %vm142, %v326, 0
    %v338 = vsel %vm142, %v327, 0
    %v341 = vsel %vm142, %v328, 0
    %v344 = vsel %vm142, %v329, 0
    %346 = vmatpush.msra.mxu0 0.0
    %347 = vmatpush.msra.mxu0 0.0
    %348 = vmatpush.msra.mxu0 0.0
    %349 = vmatpush.msra.mxu0 0.0
    %350 = vmatpush.msra.mxu0 0.0
    %351 = vmatpush.msra.mxu0 0.0
    %352 = vmatpush.msra.mxu0 0.0
    %353 = vmatpush.msra.mxu0 0.0
    %354 = vmatpush.msra.mxu0 0.0
    %355 = vmatpush.msra.mxu0 0.0
    %356 = vmatpush.msra.mxu0 0.0
    %357 = vmatpush.msra.mxu0 0.0
    %358 = vmatpush.msra.mxu0 %v333
    %359 = vmatpush.msra.mxu0 %v332
    %360 = vmatpush.msra.mxu0 %v331
    %361 = vmatpush.msra.mxu0 %v330
    %362 = vmatmul.f32.gmra.mxu0 %v335
    %v363 = vpop.f32.mrf.mxu0
    %v364 = vadd.f32 0.0, %v363
    %365 = vmatmul.f32.gmra.mxu0 %v338
    %v366 = vpop.f32.mrf.mxu0
    %v367 = vadd.f32 0.0, %v366
    %368 = vmatmul.f32.gmra.mxu0 %v341
    %v369 = vpop.f32.mrf.mxu0
    %v370 = vadd.f32 0.0, %v369
    %371 = vmatmul.f32.gmra.mxu0 %v344
    %v372 = vpop.f32.mrf.mxu0
    %v373 = vadd.f32 0.0, %v372
    %374 = vdwg.mxu0
    %376 = vset.pattern.permute.xlu0 0
    %377 = vperm.xlu0 %376, %v364
    %v378 = vpop.permute.xlu0 %377
    %381 = vset.pattern.permute.xlu0 0
    %382 = vperm.xlu0 %381, %v367
    %v383 = vpop.permute.xlu0 %382
    %386 = vset.pattern.permute.xlu0 0
    %387 = vperm.xlu0 %386, %v370
    %v388 = vpop.permute.xlu0 %387
    %391 = vset.pattern.permute.xlu0 0
    %392 = vperm.xlu0 %391, %v373
    %v393 = vpop.permute.xlu0 %392
    %v395 = vmul.f32 %v378, %v217
    %v396 = vmul.f32 %v383, %v218
    %v397 = vmul.f32 %v388, %v219
    %v398 = vmul.f32 %v393, %v220
    %399 = vset.pattern.permute.xlu0 1
    %400 = vperm.xlu0 %399, %v364
    %v401 = vpop.permute.xlu0 %400
    %403 = vset.pattern.permute.xlu0 1
    %404 = vperm.xlu0 %403, %v367
    %v405 = vpop.permute.xlu0 %404
    %407 = vset.pattern.permute.xlu0 1
    %408 = vperm.xlu0 %407, %v370
    %v409 = vpop.permute.xlu0 %408
    %411 = vset.pattern.permute.xlu0 1
    %412 = vperm.xlu0 %411, %v373
    %v413 = vpop.permute.xlu0 %412
    %v415 = vmul.f32 %v401, %v217
    %v416 = vmul.f32 %v405, %v218
    %v417 = vmul.f32 %v409, %v219
    %v418 = vmul.f32 %v413, %v220
    %423 = vrot.lane.b32.xlu0 %v415, 112
    %v424 = vpop.permute.xlu0 %423
    %425 = vrot.lane.b32.xlu0 %v416, 112
    %v426 = vpop.permute.xlu0 %425
    %427 = vrot.lane.b32.xlu0 %v417, 112
    %v428 = vpop.permute.xlu0 %427
    %429 = vrot.lane.b32.xlu0 %v418, 112
    %v430 = vpop.permute.xlu0 %429
    %v435 = vadd.f32 %v395, %v424
    %v436 = vadd.f32 %v396, %v426
    %v437 = vadd.f32 %v397, %v428
    %v438 = vadd.f32 %v398, %v430
    %439 = vset.pattern.permute.xlu0 2
    %440 = vperm.xlu0 %439, %v364
    %v441 = vpop.permute.xlu0 %440
    %443 = vset.pattern.permute.xlu0 2
    %444 = vperm.xlu0 %443, %v367
    %v445 = vpop.permute.xlu0 %444
    %447 = vset.pattern.permute.xlu0 2
    %448 = vperm.xlu0 %447, %v370
    %v449 = vpop.permute.xlu0 %448
    %451 = vset.pattern.permute.xlu0 2
    %452 = vperm.xlu0 %451, %v373
    %v453 = vpop.permute.xlu0 %452
    %v455 = vmul.f32 %v441, %v217
    %v456 = vmul.f32 %v445, %v218
    %v457 = vmul.f32 %v449, %v219
    %v458 = vmul.f32 %v453, %v220
    %463 = vrot.lane.b32.xlu0 %v455, 96
    %v464 = vpop.permute.xlu0 %463
    %465 = vrot.lane.b32.xlu0 %v456, 96
    %v466 = vpop.permute.xlu0 %465
    %467 = vrot.lane.b32.xlu0 %v457, 96
    %v468 = vpop.permute.xlu0 %467
    %469 = vrot.lane.b32.xlu0 %v458, 96
    %v470 = vpop.permute.xlu0 %469
    %v475 = vadd.f32 %v435, %v464
    %v476 = vadd.f32 %v436, %v466
    %v477 = vadd.f32 %v437, %v468
    %v478 = vadd.f32 %v438, %v470
    %479 = vset.pattern.permute.xlu0 3
    %480 = vperm.xlu0 %479, %v364
    %v481 = vpop.permute.xlu0 %480
    %483 = vset.pattern.permute.xlu0 3
    %484 = vperm.xlu0 %483, %v367
    %v485 = vpop.permute.xlu0 %484
    %487 = vset.pattern.permute.xlu0 3
    %488 = vperm.xlu0 %487, %v370
    %v489 = vpop.permute.xlu0 %488
    %491 = vset.pattern.permute.xlu0 3
    %492 = vperm.xlu0 %491, %v373
    %v493 = vpop.permute.xlu0 %492
    %v495 = vmul.f32 %v481, %v217
    %v496 = vmul.f32 %v485, %v218
    %v497 = vmul.f32 %v489, %v219
    %v498 = vmul.f32 %v493, %v220
    %503 = vrot.lane.b32.xlu0 %v495, 80
    %v504 = vpop.permute.xlu0 %503
    %505 = vrot.lane.b32.xlu0 %v496, 80
    %v506 = vpop.permute.xlu0 %505
    %507 = vrot.lane.b32.xlu0 %v497, 80
    %v508 = vpop.permute.xlu0 %507
    %509 = vrot.lane.b32.xlu0 %v498, 80
    %v510 = vpop.permute.xlu0 %509
    %v515 = vadd.f32 %v475, %v504
    %v516 = vadd.f32 %v476, %v506
    %v517 = vadd.f32 %v477, %v508
    %v518 = vadd.f32 %v478, %v510
    %519 = vset.pattern.permute.xlu0 4
    %520 = vperm.xlu0 %519, %v364
    %v521 = vpop.permute.xlu0 %520
    %523 = vset.pattern.permute.xlu0 4
    %524 = vperm.xlu0 %523, %v367
    %v525 = vpop.permute.xlu0 %524
    %527 = vset.pattern.permute.xlu0 4
    %528 = vperm.xlu0 %527, %v370
    %v529 = vpop.permute.xlu0 %528
    %531 = vset.pattern.permute.xlu0 4
    %532 = vperm.xlu0 %531, %v373
    %v533 = vpop.permute.xlu0 %532
    %v535 = vmul.f32 %v521, %v217
    %v536 = vmul.f32 %v525, %v218
    %v537 = vmul.f32 %v529, %v219
    %v538 = vmul.f32 %v533, %v220
    %543 = vrot.lane.b32.xlu0 %v535, 64
    %v544 = vpop.permute.xlu0 %543
    %545 = vrot.lane.b32.xlu0 %v536, 64
    %v546 = vpop.permute.xlu0 %545
    %547 = vrot.lane.b32.xlu0 %v537, 64
    %v548 = vpop.permute.xlu0 %547
    %549 = vrot.lane.b32.xlu0 %v538, 64
    %v550 = vpop.permute.xlu0 %549
    %v555 = vadd.f32 %v515, %v544
    %v556 = vadd.f32 %v516, %v546
    %v557 = vadd.f32 %v517, %v548
    %v558 = vadd.f32 %v518, %v550
    %559 = vset.pattern.permute.xlu0 5
    %560 = vperm.xlu0 %559, %v364
    %v561 = vpop.permute.xlu0 %560
    %563 = vset.pattern.permute.xlu0 5
    %564 = vperm.xlu0 %563, %v367
    %v565 = vpop.permute.xlu0 %564
    %567 = vset.pattern.permute.xlu0 5
    %568 = vperm.xlu0 %567, %v370
    %v569 = vpop.permute.xlu0 %568
    %571 = vset.pattern.permute.xlu0 5
    %572 = vperm.xlu0 %571, %v373
    %v573 = vpop.permute.xlu0 %572
    %v575 = vmul.f32 %v561, %v217
    %v576 = vmul.f32 %v565, %v218
    %v577 = vmul.f32 %v569, %v219
    %v578 = vmul.f32 %v573, %v220
    %583 = vrot.lane.b32.xlu0 %v575, 48
    %v584 = vpop.permute.xlu0 %583
    %585 = vrot.lane.b32.xlu0 %v576, 48
    %v586 = vpop.permute.xlu0 %585
    %587 = vrot.lane.b32.xlu0 %v577, 48
    %v588 = vpop.permute.xlu0 %587
    %589 = vrot.lane.b32.xlu0 %v578, 48
    %v590 = vpop.permute.xlu0 %589
    %v595 = vadd.f32 %v555, %v584
    %v596 = vadd.f32 %v556, %v586
    %v597 = vadd.f32 %v557, %v588
    %v598 = vadd.f32 %v558, %v590
    %599 = vset.pattern.permute.xlu0 6
    %600 = vperm.xlu0 %599, %v364
    %v601 = vpop.permute.xlu0 %600
    %603 = vset.pattern.permute.xlu0 6
    %604 = vperm.xlu0 %603, %v367
    %v605 = vpop.permute.xlu0 %604
    %607 = vset.pattern.permute.xlu0 6
    %608 = vperm.xlu0 %607, %v370
    %v609 = vpop.permute.xlu0 %608
    %611 = vset.pattern.permute.xlu0 6
    %612 = vperm.xlu0 %611, %v373
    %v613 = vpop.permute.xlu0 %612
    %v615 = vmul.f32 %v601, %v217
    %v616 = vmul.f32 %v605, %v218
    %v617 = vmul.f32 %v609, %v219
    %v618 = vmul.f32 %v613, %v220
    %623 = vrot.lane.b32.xlu0 %v615, 32
    %v624 = vpop.permute.xlu0 %623
    %625 = vrot.lane.b32.xlu0 %v616, 32
    %v626 = vpop.permute.xlu0 %625
    %627 = vrot.lane.b32.xlu0 %v617, 32
    %v628 = vpop.permute.xlu0 %627
    %629 = vrot.lane.b32.xlu0 %v618, 32
    %v630 = vpop.permute.xlu0 %629
    %v635 = vadd.f32 %v595, %v624
    %v636 = vadd.f32 %v596, %v626
    %v637 = vadd.f32 %v597, %v628
    %v638 = vadd.f32 %v598, %v630
    %639 = vset.pattern.permute.xlu0 7
    %640 = vperm.xlu0 %639, %v364
    %v641 = vpop.permute.xlu0 %640
    %643 = vset.pattern.permute.xlu0 7
    %644 = vperm.xlu0 %643, %v367
    %v645 = vpop.permute.xlu0 %644
    %647 = vset.pattern.permute.xlu0 7
    %648 = vperm.xlu0 %647, %v370
    %v649 = vpop.permute.xlu0 %648
    %651 = vset.pattern.permute.xlu0 7
    %652 = vperm.xlu0 %651, %v373
    %v653 = vpop.permute.xlu0 %652
    %v655 = vmul.f32 %v641, %v217
    %v656 = vmul.f32 %v645, %v218
    %v657 = vmul.f32 %v649, %v219
    %v658 = vmul.f32 %v653, %v220
    %663 = vrot.lane.b32.xlu0 %v655, 16
    %v664 = vpop.permute.xlu0 %663
    %665 = vrot.lane.b32.xlu0 %v656, 16
    %v666 = vpop.permute.xlu0 %665
    %667 = vrot.lane.b32.xlu0 %v657, 16
    %v668 = vpop.permute.xlu0 %667
    %669 = vrot.lane.b32.xlu0 %v658, 16
    %v670 = vpop.permute.xlu0 %669
    %v675 = vadd.f32 %v635, %v664
    %v676 = vadd.f32 %v636, %v666
    %v677 = vadd.f32 %v637, %v668
    %v678 = vadd.f32 %v638, %v670
    %683 = vrot.lane.b32.xlu0 %v675, 16
    %v684 = vpop.permute.xlu0 %683
    %685 = vrot.lane.b32.xlu0 %v676, 16
    %v686 = vpop.permute.xlu0 %685
    %687 = vrot.lane.b32.xlu0 %v677, 16
    %v688 = vpop.permute.xlu0 %687
    %689 = vrot.lane.b32.xlu0 %v678, 16
    %v690 = vpop.permute.xlu0 %689
    %v695 = vsel %vm78, %v675, %v684
    %v696 = vsel %vm78, %v676, %v686
    %v697 = vsel %vm78, %v677, %v688
    %v698 = vsel %vm78, %v678, %v690
    %699 = vrot.lane.b32.xlu0 %v364, 96
    %v700 = vpop.permute.xlu0 %699
    %701 = vrot.lane.b32.xlu0 %v367, 96
    %v702 = vpop.permute.xlu0 %701
    %703 = vrot.lane.b32.xlu0 %v370, 96
    %v704 = vpop.permute.xlu0 %703
    %705 = vrot.lane.b32.xlu0 %v373, 96
    %v706 = vpop.permute.xlu0 %705
    %vm707 = vcmask 64512
    %v708 = vsel %vm707, %v364, 0
    %v710 = vsel %vm707, %v367, 0
    %v712 = vsel %vm707, %v370, 0
    %v714 = vsel %vm707, %v373, 0
    %v716 = vsel %vm707, %v700, 0
    %v718 = vsel %vm707, %v702, 0
    %v720 = vsel %vm707, %v704, 0
    %v722 = vsel %vm707, %v706, 0
    %724 = vmatpush.xpose.msra.mxu0 0.0
    %725 = vmatpush.xpose.msra.mxu0 0.0
    %726 = vmatpush.xpose.msra.mxu0 0.0
    %727 = vmatpush.xpose.msra.mxu0 0.0
    %728 = vmatpush.xpose.msra.mxu0 0.0
    %729 = vmatpush.xpose.msra.mxu0 0.0
    %730 = vmatpush.xpose.msra.mxu0 0.0
    %731 = vmatpush.xpose.msra.mxu0 0.0
    %732 = vmatpush.xpose.msra.mxu0 0.0
    %733 = vmatpush.xpose.msra.mxu0 0.0
    %734 = vmatpush.xpose.msra.mxu0 0.0
    %735 = vmatpush.xpose.msra.mxu0 0.0
    %736 = vmatpush.xpose.msra.mxu0 %v722
    %737 = vmatpush.xpose.msra.mxu0 %v720
    %738 = vmatpush.xpose.msra.mxu0 %v718
    %739 = vmatpush.xpose.msra.mxu0 %v716
    %740 = vmatmul.f32.gmra.mxu0 %v708
    %v741 = vpop.f32.mrf.mxu0
    %v742 = vadd.f32 %v695, %v741
    %743 = vmatmul.f32.gmra.mxu0 %v710
    %v744 = vpop.f32.mrf.mxu0
    %v745 = vadd.f32 %v696, %v744
    %746 = vmatmul.f32.gmra.mxu0 %v712
    %v747 = vpop.f32.mrf.mxu0
    %v748 = vadd.f32 %v697, %v747
    %749 = vmatmul.f32.gmra.mxu0 %v714
    %v750 = vpop.f32.mrf.mxu0
    %v751 = vadd.f32 %v698, %v750
    %752 = vdwg.mxu0
    %v753 = vadd.f32 %v742, %v221
    %v754 = vadd.f32 %v745, %v222
    %v755 = vadd.f32 %v748, %v223
    %v756 = vadd.f32 %v751, %v224
    %v757 = vsel %vm142, %v753, -inf
    %758 = vmax.xlane.f32.xlu0 %v757
    %v759 = vpop.xlane.xlu0 %758
    %v760 = vsel %vm142, %v754, -inf
    %761 = vmax.xlane.f32.xlu0 %v760
    %v762 = vpop.xlane.xlu0 %761
    %v763 = vsel %vm142, %v755, -inf
    %764 = vmax.xlane.f32.xlu0 %v763
    %v765 = vpop.xlane.xlu0 %764
    %v766 = vsel %vm142, %v756, -inf
    %767 = vmax.xlane.f32.xlu0 %v766
    %v768 = vpop.xlane.xlu0 %767
    %v769 = vsub.f32 %v753, %v759
    %v770 = vsub.f32 %v754, %v762
    %v771 = vsub.f32 %v755, %v765
    %v772 = vsub.f32 %v756, %v768
    %v773 = vmul.f32 %v769, 1.442695
    %v774 = vpow.pop %v773
    %v775 = vmul.f32 %v770, 1.442695
    %v776 = vpow.pop %v775
    %v777 = vmul.f32 %v771, 1.442695
    %v778 = vpow.pop %v777
    %v779 = vmul.f32 %v772, 1.442695
    %v780 = vpow.pop %v779
    %v781 = vsel %vm142, %v774, 0.0
    %782 = vadd.xlane.f32.xlu0 %v781
    %v783 = vpop.xlane.xlu0 %782
    %v784 = vsel %vm142, %v776, 0.0
    %785 = vadd.xlane.f32.xlu0 %v784
    %v786 = vpop.xlane.xlu0 %785
    %v787 = vsel %vm142, %v778, 0.0
    %788 = vadd.xlane.f32.xlu0 %v787
    %v789 = vpop.xlane.xlu0 %788
    %v790 = vsel %vm142, %v780, 0.0
    %791 = vadd.xlane.f32.xlu0 %v790
    %v792 = vpop.xlane.xlu0 %791
    %v793 = vrcp.pop %v783
    %v794 = vrcp.pop %v786
    %v795 = vrcp.pop %v789
    %v796 = vrcp.pop %v792
    %v797 = vmul.f32 %v774, %v793
    %v798 = vmul.f32 %v776, %v794
    %v799 = vmul.f32 %v778, %v795
    %v800 = vmul.f32 %v780, %v796
    %801 = vrot.lane.b32.xlu0 %v364, 64
    %v802 = vpop.permute.xlu0 %801
    %803 = vrot.lane.b32.xlu0 %v367, 64
    %v804 = vpop.permute.xlu0 %803
    %805 = vrot.lane.b32.xlu0 %v370, 64
    %v806 = vpop.permute.xlu0 %805
    %807 = vrot.lane.b32.xlu0 %v373, 64
    %v808 = vpop.permute.xlu0 %807
    %v814 = vsel %vm142, %v797, 0
    %v817 = vsel %vm142, %v798, 0
    %v820 = vsel %vm142, %v799, 0
    %v823 = vsel %vm142, %v800, 0
    %825 = vmatpush.msra.mxu0 0.0
    %826 = vmatpush.msra.mxu0 0.0
    %827 = vmatpush.msra.mxu0 0.0
    %828 = vmatpush.msra.mxu0 0.0
    %829 = vmatpush.msra.mxu0 0.0
    %830 = vmatpush.msra.mxu0 0.0
    %831 = vmatpush.msra.mxu0 0.0
    %832 = vmatpush.msra.mxu0 0.0
    %833 = vmatpush.msra.mxu0 0.0
    %834 = vmatpush.msra.mxu0 0.0
    %835 = vmatpush.msra.mxu0 0.0
    %836 = vmatpush.msra.mxu0 0.0
    %837 = vmatpush.msra.mxu0 %v808
    %838 = vmatpush.msra.mxu0 %v806
    %839 = vmatpush.msra.mxu0 %v804
    %840 = vmatpush.msra.mxu0 %v802
    %841 = vmatmul.f32.gmra.mxu0 %v814
    %v842 = vpop.f32.mrf.mxu0
    %v843 = vadd.f32 0.0, %v842
    %844 = vmatmul.f32.gmra.mxu0 %v817
    %v845 = vpop.f32.mrf.mxu0
    %v846 = vadd.f32 0.0, %v845
    %847 = vmatmul.f32.gmra.mxu0 %v820
    %v848 = vpop.f32.mrf.mxu0
    %v849 = vadd.f32 0.0, %v848
    %850 = vmatmul.f32.gmra.mxu0 %v823
    %v851 = vpop.f32.mrf.mxu0
    %v852 = vadd.f32 0.0, %v851
    %853 = vdwg.mxu0
    %854 = vset.pattern.permute.xlu0 8
    %855 = vperm.xlu0 %854, %v364
    %v856 = vpop.permute.xlu0 %855
    %858 = vset.pattern.permute.xlu0 8
    %859 = vperm.xlu0 %858, %v367
    %v860 = vpop.permute.xlu0 %859
    %862 = vset.pattern.permute.xlu0 8
    %863 = vperm.xlu0 %862, %v370
    %v864 = vpop.permute.xlu0 %863
    %866 = vset.pattern.permute.xlu0 8
    %867 = vperm.xlu0 %866, %v373
    %v868 = vpop.permute.xlu0 %867
    %v870 = vmul.f32 %v856, %v217
    %v871 = vmul.f32 %v860, %v218
    %v872 = vmul.f32 %v864, %v219
    %v873 = vmul.f32 %v868, %v220
    %874 = vset.pattern.permute.xlu0 9
    %875 = vperm.xlu0 %874, %v364
    %v876 = vpop.permute.xlu0 %875
    %878 = vset.pattern.permute.xlu0 9
    %879 = vperm.xlu0 %878, %v367
    %v880 = vpop.permute.xlu0 %879
    %882 = vset.pattern.permute.xlu0 9
    %883 = vperm.xlu0 %882, %v370
    %v884 = vpop.permute.xlu0 %883
    %886 = vset.pattern.permute.xlu0 9
    %887 = vperm.xlu0 %886, %v373
    %v888 = vpop.permute.xlu0 %887
    %v890 = vmul.f32 %v876, %v217
    %v891 = vmul.f32 %v880, %v218
    %v892 = vmul.f32 %v884, %v219
    %v893 = vmul.f32 %v888, %v220
    %898 = vrot.lane.b32.xlu0 %v890, 112
    %v899 = vpop.permute.xlu0 %898
    %900 = vrot.lane.b32.xlu0 %v891, 112
    %v901 = vpop.permute.xlu0 %900
    %902 = vrot.lane.b32.xlu0 %v892, 112
    %v903 = vpop.permute.xlu0 %902
    %904 = vrot.lane.b32.xlu0 %v893, 112
    %v905 = vpop.permute.xlu0 %904
    %v910 = vadd.f32 %v870, %v899
    %v911 = vadd.f32 %v871, %v901
    %v912 = vadd.f32 %v872, %v903
    %v913 = vadd.f32 %v873, %v905
    %914 = vset.pattern.permute.xlu0 10
    %915 = vperm.xlu0 %914, %v364
    %v916 = vpop.permute.xlu0 %915
    %918 = vset.pattern.permute.xlu0 10
    %919 = vperm.xlu0 %918, %v367
    %v920 = vpop.permute.xlu0 %919
    %922 = vset.pattern.permute.xlu0 10
    %923 = vperm.xlu0 %922, %v370
    %v924 = vpop.permute.xlu0 %923
    %926 = vset.pattern.permute.xlu0 10
    %927 = vperm.xlu0 %926, %v373
    %v928 = vpop.permute.xlu0 %927
    %v930 = vmul.f32 %v916, %v217
    %v931 = vmul.f32 %v920, %v218
    %v932 = vmul.f32 %v924, %v219
    %v933 = vmul.f32 %v928, %v220
    %938 = vrot.lane.b32.xlu0 %v930, 96
    %v939 = vpop.permute.xlu0 %938
    %940 = vrot.lane.b32.xlu0 %v931, 96
    %v941 = vpop.permute.xlu0 %940
    %942 = vrot.lane.b32.xlu0 %v932, 96
    %v943 = vpop.permute.xlu0 %942
    %944 = vrot.lane.b32.xlu0 %v933, 96
    %v945 = vpop.permute.xlu0 %944
    %v950 = vadd.f32 %v910, %v939
    %v951 = vadd.f32 %v911, %v941
    %v952 = vadd.f32 %v912, %v943
    %v953 = vadd.f32 %v913, %v945
    %954 = vset.pattern.permute.xlu0 11
    %955 = vperm.xlu0 %954, %v364
    %v956 = vpop.permute.xlu0 %955
    %958 = vset.pattern.permute.xlu0 11
    %959 = vperm.xlu0 %958, %v367
    %v960 = vpop.permute.xlu0 %959
    %962 = vset.pattern.permute.xlu0 11
    %963 = vperm.xlu0 %962, %v370
    %v964 = vpop.permute.xlu0 %963
    %966 = vset.pattern.permute.xlu0 11
    %967 = vperm.xlu0 %966, %v373
    %v968 = vpop.permute.xlu0 %967
    %v970 = vmul.f32 %v956, %v217
    %v971 = vmul.f32 %v960, %v218
    %v972 = vmul.f32 %v964, %v219
    %v973 = vmul.f32 %v968, %v220
    %978 = vrot.lane.b32.xlu0 %v970, 80
    %v979 = vpop.permute.xlu0 %978
    %980 = vrot.lane.b32.xlu0 %v971, 80
    %v981 = vpop.permute.xlu0 %980
    %982 = vrot.lane.b32.xlu0 %v972, 80
    %v983 = vpop.permute.xlu0 %982
    %984 = vrot.lane.b32.xlu0 %v973, 80
    %v985 = vpop.permute.xlu0 %984
    %v990 = vadd.f32 %v950, %v979
    %v991 = vadd.f32 %v951, %v981
    %v992 = vadd.f32 %v952, %v983
    %v993 = vadd.f32 %v953, %v985
    %994 = vset.pattern.permute.xlu0 12
    %995 = vperm.xlu0 %994, %v364
    %v996 = vpop.permute.xlu0 %995
    %998 = vset.pattern.permute.xlu0 12
    %999 = vperm.xlu0 %998, %v367
    %v1000 = vpop.permute.xlu0 %999
    %1002 = vset.pattern.permute.xlu0 12
    %1003 = vperm.xlu0 %1002, %v370
    %v1004 = vpop.permute.xlu0 %1003
    %1006 = vset.pattern.permute.xlu0 12
    %1007 = vperm.xlu0 %1006, %v373
    %v1008 = vpop.permute.xlu0 %1007
    %v1010 = vmul.f32 %v996, %v217
    %v1011 = vmul.f32 %v1000, %v218
    %v1012 = vmul.f32 %v1004, %v219
    %v1013 = vmul.f32 %v1008, %v220
    %1018 = vrot.lane.b32.xlu0 %v1010, 64
    %v1019 = vpop.permute.xlu0 %1018
    %1020 = vrot.lane.b32.xlu0 %v1011, 64
    %v1021 = vpop.permute.xlu0 %1020
    %1022 = vrot.lane.b32.xlu0 %v1012, 64
    %v1023 = vpop.permute.xlu0 %1022
    %1024 = vrot.lane.b32.xlu0 %v1013, 64
    %v1025 = vpop.permute.xlu0 %1024
    %v1030 = vadd.f32 %v990, %v1019
    %v1031 = vadd.f32 %v991, %v1021
    %v1032 = vadd.f32 %v992, %v1023
    %v1033 = vadd.f32 %v993, %v1025
    %1034 = vset.pattern.permute.xlu0 13
    %1035 = vperm.xlu0 %1034, %v364
    %v1036 = vpop.permute.xlu0 %1035
    %1038 = vset.pattern.permute.xlu0 13
    %1039 = vperm.xlu0 %1038, %v367
    %v1040 = vpop.permute.xlu0 %1039
    %1042 = vset.pattern.permute.xlu0 13
    %1043 = vperm.xlu0 %1042, %v370
    %v1044 = vpop.permute.xlu0 %1043
    %1046 = vset.pattern.permute.xlu0 13
    %1047 = vperm.xlu0 %1046, %v373
    %v1048 = vpop.permute.xlu0 %1047
    %v1050 = vmul.f32 %v1036, %v217
    %v1051 = vmul.f32 %v1040, %v218
    %v1052 = vmul.f32 %v1044, %v219
    %v1053 = vmul.f32 %v1048, %v220
    %1058 = vrot.lane.b32.xlu0 %v1050, 48
    %v1059 = vpop.permute.xlu0 %1058
    %1060 = vrot.lane.b32.xlu0 %v1051, 48
    %v1061 = vpop.permute.xlu0 %1060
    %1062 = vrot.lane.b32.xlu0 %v1052, 48
    %v1063 = vpop.permute.xlu0 %1062
    %1064 = vrot.lane.b32.xlu0 %v1053, 48
    %v1065 = vpop.permute.xlu0 %1064
    %v1070 = vadd.f32 %v1030, %v1059
    %v1071 = vadd.f32 %v1031, %v1061
    %v1072 = vadd.f32 %v1032, %v1063
    %v1073 = vadd.f32 %v1033, %v1065
    %1074 = vset.pattern.permute.xlu0 14
    %1075 = vperm.xlu0 %1074, %v364
    %v1076 = vpop.permute.xlu0 %1075
    %1078 = vset.pattern.permute.xlu0 14
    %1079 = vperm.xlu0 %1078, %v367
    %v1080 = vpop.permute.xlu0 %1079
    %1082 = vset.pattern.permute.xlu0 14
    %1083 = vperm.xlu0 %1082, %v370
    %v1084 = vpop.permute.xlu0 %1083
    %1086 = vset.pattern.permute.xlu0 14
    %1087 = vperm.xlu0 %1086, %v373
    %v1088 = vpop.permute.xlu0 %1087
    %v1090 = vmul.f32 %v1076, %v217
    %v1091 = vmul.f32 %v1080, %v218
    %v1092 = vmul.f32 %v1084, %v219
    %v1093 = vmul.f32 %v1088, %v220
    %1098 = vrot.lane.b32.xlu0 %v1090, 32
    %v1099 = vpop.permute.xlu0 %1098
    %1100 = vrot.lane.b32.xlu0 %v1091, 32
    %v1101 = vpop.permute.xlu0 %1100
    %1102 = vrot.lane.b32.xlu0 %v1092, 32
    %v1103 = vpop.permute.xlu0 %1102
    %1104 = vrot.lane.b32.xlu0 %v1093, 32
    %v1105 = vpop.permute.xlu0 %1104
    %v1110 = vadd.f32 %v1070, %v1099
    %v1111 = vadd.f32 %v1071, %v1101
    %v1112 = vadd.f32 %v1072, %v1103
    %v1113 = vadd.f32 %v1073, %v1105
    %1114 = vset.pattern.permute.xlu0 15
    %1115 = vperm.xlu0 %1114, %v364
    %v1116 = vpop.permute.xlu0 %1115
    %1118 = vset.pattern.permute.xlu0 15
    %1119 = vperm.xlu0 %1118, %v367
    %v1120 = vpop.permute.xlu0 %1119
    %1122 = vset.pattern.permute.xlu0 15
    %1123 = vperm.xlu0 %1122, %v370
    %v1124 = vpop.permute.xlu0 %1123
    %1126 = vset.pattern.permute.xlu0 15
    %1127 = vperm.xlu0 %1126, %v373
    %v1128 = vpop.permute.xlu0 %1127
    %v1130 = vmul.f32 %v1116, %v217
    %v1131 = vmul.f32 %v1120, %v218
    %v1132 = vmul.f32 %v1124, %v219
    %v1133 = vmul.f32 %v1128, %v220
    %1138 = vrot.lane.b32.xlu0 %v1130, 16
    %v1139 = vpop.permute.xlu0 %1138
    %1140 = vrot.lane.b32.xlu0 %v1131, 16
    %v1141 = vpop.permute.xlu0 %1140
    %1142 = vrot.lane.b32.xlu0 %v1132, 16
    %v1143 = vpop.permute.xlu0 %1142
    %1144 = vrot.lane.b32.xlu0 %v1133, 16
    %v1145 = vpop.permute.xlu0 %1144
    %v1150 = vadd.f32 %v1110, %v1139
    %v1151 = vadd.f32 %v1111, %v1141
    %v1152 = vadd.f32 %v1112, %v1143
    %v1153 = vadd.f32 %v1113, %v1145
    %1158 = vrot.lane.b32.xlu0 %v1150, 16
    %v1159 = vpop.permute.xlu0 %1158
    %1160 = vrot.lane.b32.xlu0 %v1151, 16
    %v1161 = vpop.permute.xlu0 %1160
    %1162 = vrot.lane.b32.xlu0 %v1152, 16
    %v1163 = vpop.permute.xlu0 %1162
    %1164 = vrot.lane.b32.xlu0 %v1153, 16
    %v1165 = vpop.permute.xlu0 %1164
    %v1170 = vsel %vm78, %v1150, %v1159
    %v1171 = vsel %vm78, %v1151, %v1161
    %v1172 = vsel %vm78, %v1152, %v1163
    %v1173 = vsel %vm78, %v1153, %v1165
    %1174 = vrot.lane.b32.xlu0 %v364, 120
    %v1175 = vpop.permute.xlu0 %1174
    %1176 = vrot.lane.b32.xlu0 %v367, 120
    %v1177 = vpop.permute.xlu0 %1176
    %1178 = vrot.lane.b32.xlu0 %v370, 120
    %v1179 = vpop.permute.xlu0 %1178
    %1180 = vrot.lane.b32.xlu0 %v373, 120
    %v1181 = vpop.permute.xlu0 %1180
    %1182 = vrot.lane.b32.xlu0 %v364, 88
    %v1183 = vpop.permute.xlu0 %1182
    %1184 = vrot.lane.b32.xlu0 %v367, 88
    %v1185 = vpop.permute.xlu0 %1184
    %1186 = vrot.lane.b32.xlu0 %v370, 88
    %v1187 = vpop.permute.xlu0 %1186
    %1188 = vrot.lane.b32.xlu0 %v373, 88
    %v1189 = vpop.permute.xlu0 %1188
    %v1190 = vsel %vm707, %v1175, 0
    %v1192 = vsel %vm707, %v1177, 0
    %v1194 = vsel %vm707, %v1179, 0
    %v1196 = vsel %vm707, %v1181, 0
    %v1198 = vsel %vm707, %v1183, 0
    %v1200 = vsel %vm707, %v1185, 0
    %v1202 = vsel %vm707, %v1187, 0
    %v1204 = vsel %vm707, %v1189, 0
    %1206 = vmatpush.xpose.msra.mxu0 0.0
    %1207 = vmatpush.xpose.msra.mxu0 0.0
    %1208 = vmatpush.xpose.msra.mxu0 0.0
    %1209 = vmatpush.xpose.msra.mxu0 0.0
    %1210 = vmatpush.xpose.msra.mxu0 0.0
    %1211 = vmatpush.xpose.msra.mxu0 0.0
    %1212 = vmatpush.xpose.msra.mxu0 0.0
    %1213 = vmatpush.xpose.msra.mxu0 0.0
    %1214 = vmatpush.xpose.msra.mxu0 0.0
    %1215 = vmatpush.xpose.msra.mxu0 0.0
    %1216 = vmatpush.xpose.msra.mxu0 0.0
    %1217 = vmatpush.xpose.msra.mxu0 0.0
    %1218 = vmatpush.xpose.msra.mxu0 %v1204
    %1219 = vmatpush.xpose.msra.mxu0 %v1202
    %1220 = vmatpush.xpose.msra.mxu0 %v1200
    %1221 = vmatpush.xpose.msra.mxu0 %v1198
    %1222 = vmatmul.f32.gmra.mxu0 %v1190
    %v1223 = vpop.f32.mrf.mxu0
    %v1224 = vadd.f32 %v1170, %v1223
    %1225 = vmatmul.f32.gmra.mxu0 %v1192
    %v1226 = vpop.f32.mrf.mxu0
    %v1227 = vadd.f32 %v1171, %v1226
    %1228 = vmatmul.f32.gmra.mxu0 %v1194
    %v1229 = vpop.f32.mrf.mxu0
    %v1230 = vadd.f32 %v1172, %v1229
    %1231 = vmatmul.f32.gmra.mxu0 %v1196
    %v1232 = vpop.f32.mrf.mxu0
    %v1233 = vadd.f32 %v1173, %v1232
    %1234 = vdwg.mxu0
    %v1235 = vadd.f32 %v1224, %v221
    %v1236 = vadd.f32 %v1227, %v222
    %v1237 = vadd.f32 %v1230, %v223
    %v1238 = vadd.f32 %v1233, %v224
    %v1239 = vsel %vm142, %v1235, -inf
    %1240 = vmax.xlane.f32.xlu0 %v1239
    %v1241 = vpop.xlane.xlu0 %1240
    %v1242 = vsel %vm142, %v1236, -inf
    %1243 = vmax.xlane.f32.xlu0 %v1242
    %v1244 = vpop.xlane.xlu0 %1243
    %v1245 = vsel %vm142, %v1237, -inf
    %1246 = vmax.xlane.f32.xlu0 %v1245
    %v1247 = vpop.xlane.xlu0 %1246
    %v1248 = vsel %vm142, %v1238, -inf
    %1249 = vmax.xlane.f32.xlu0 %v1248
    %v1250 = vpop.xlane.xlu0 %1249
    %v1251 = vsub.f32 %v1235, %v1241
    %v1252 = vsub.f32 %v1236, %v1244
    %v1253 = vsub.f32 %v1237, %v1247
    %v1254 = vsub.f32 %v1238, %v1250
    %v1255 = vmul.f32 %v1251, 1.442695
    %v1256 = vpow.pop %v1255
    %v1257 = vmul.f32 %v1252, 1.442695
    %v1258 = vpow.pop %v1257
    %v1259 = vmul.f32 %v1253, 1.442695
    %v1260 = vpow.pop %v1259
    %v1261 = vmul.f32 %v1254, 1.442695
    %v1262 = vpow.pop %v1261
    %v1263 = vsel %vm142, %v1256, 0.0
    %1264 = vadd.xlane.f32.xlu0 %v1263
    %v1265 = vpop.xlane.xlu0 %1264
    %v1266 = vsel %vm142, %v1258, 0.0
    %1267 = vadd.xlane.f32.xlu0 %v1266
    %v1268 = vpop.xlane.xlu0 %1267
    %v1269 = vsel %vm142, %v1260, 0.0
    %1270 = vadd.xlane.f32.xlu0 %v1269
    %v1271 = vpop.xlane.xlu0 %1270
    %v1272 = vsel %vm142, %v1262, 0.0
    %1273 = vadd.xlane.f32.xlu0 %v1272
    %v1274 = vpop.xlane.xlu0 %1273
    %v1275 = vrcp.pop %v1265
    %v1276 = vrcp.pop %v1268
    %v1277 = vrcp.pop %v1271
    %v1278 = vrcp.pop %v1274
    %v1279 = vmul.f32 %v1256, %v1275
    %v1280 = vmul.f32 %v1258, %v1276
    %v1281 = vmul.f32 %v1260, %v1277
    %v1282 = vmul.f32 %v1262, %v1278
    %1283 = vrot.lane.b32.xlu0 %v364, 56
    %v1284 = vpop.permute.xlu0 %1283
    %1285 = vrot.lane.b32.xlu0 %v367, 56
    %v1286 = vpop.permute.xlu0 %1285
    %1287 = vrot.lane.b32.xlu0 %v370, 56
    %v1288 = vpop.permute.xlu0 %1287
    %1289 = vrot.lane.b32.xlu0 %v373, 56
    %v1290 = vpop.permute.xlu0 %1289
    %v1296 = vsel %vm142, %v1279, 0
    %v1299 = vsel %vm142, %v1280, 0
    %v1302 = vsel %vm142, %v1281, 0
    %v1305 = vsel %vm142, %v1282, 0
    %1307 = vmatpush.msra.mxu0 0.0
    %1308 = vmatpush.msra.mxu0 0.0
    %1309 = vmatpush.msra.mxu0 0.0
    %1310 = vmatpush.msra.mxu0 0.0
    %1311 = vmatpush.msra.mxu0 0.0
    %1312 = vmatpush.msra.mxu0 0.0
    %1313 = vmatpush.msra.mxu0 0.0
    %1314 = vmatpush.msra.mxu0 0.0
    %1315 = vmatpush.msra.mxu0 0.0
    %1316 = vmatpush.msra.mxu0 0.0
    %1317 = vmatpush.msra.mxu0 0.0
    %1318 = vmatpush.msra.mxu0 0.0
    %1319 = vmatpush.msra.mxu0 %v1290
    %1320 = vmatpush.msra.mxu0 %v1288
    %1321 = vmatpush.msra.mxu0 %v1286
    %1322 = vmatpush.msra.mxu0 %v1284
    %1323 = vmatmul.f32.gmra.mxu0 %v1296
    %v1324 = vpop.f32.mrf.mxu0
    %v1325 = vadd.f32 0.0, %v1324
    %1326 = vmatmul.f32.gmra.mxu0 %v1299
    %v1327 = vpop.f32.mrf.mxu0
    %v1328 = vadd.f32 0.0, %v1327
    %1329 = vmatmul.f32.gmra.mxu0 %v1302
    %v1330 = vpop.f32.mrf.mxu0
    %v1331 = vadd.f32 0.0, %v1330
    %1332 = vmatmul.f32.gmra.mxu0 %v1305
    %v1333 = vpop.f32.mrf.mxu0
    %v1334 = vadd.f32 0.0, %v1333
    %1335 = vdwg.mxu0
    %1336 = vset.pattern.permute.xlu0 16
    %1337 = vperm.xlu0 %1336, %v364
    %v1338 = vpop.permute.xlu0 %1337
    %1340 = vset.pattern.permute.xlu0 16
    %1341 = vperm.xlu0 %1340, %v367
    %v1342 = vpop.permute.xlu0 %1341
    %1344 = vset.pattern.permute.xlu0 16
    %1345 = vperm.xlu0 %1344, %v370
    %v1346 = vpop.permute.xlu0 %1345
    %1348 = vset.pattern.permute.xlu0 16
    %1349 = vperm.xlu0 %1348, %v373
    %v1350 = vpop.permute.xlu0 %1349
    %v1352 = vmul.f32 %v1338, %v217
    %v1353 = vmul.f32 %v1342, %v218
    %v1354 = vmul.f32 %v1346, %v219
    %v1355 = vmul.f32 %v1350, %v220
    %1356 = vset.pattern.permute.xlu0 17
    %1357 = vperm.xlu0 %1356, %v364
    %v1358 = vpop.permute.xlu0 %1357
    %1360 = vset.pattern.permute.xlu0 17
    %1361 = vperm.xlu0 %1360, %v367
    %v1362 = vpop.permute.xlu0 %1361
    %1364 = vset.pattern.permute.xlu0 17
    %1365 = vperm.xlu0 %1364, %v370
    %v1366 = vpop.permute.xlu0 %1365
    %1368 = vset.pattern.permute.xlu0 17
    %1369 = vperm.xlu0 %1368, %v373
    %v1370 = vpop.permute.xlu0 %1369
    %v1372 = vmul.f32 %v1358, %v217
    %v1373 = vmul.f32 %v1362, %v218
    %v1374 = vmul.f32 %v1366, %v219
    %v1375 = vmul.f32 %v1370, %v220
    %1380 = vrot.lane.b32.xlu0 %v1372, 112
    %v1381 = vpop.permute.xlu0 %1380
    %1382 = vrot.lane.b32.xlu0 %v1373, 112
    %v1383 = vpop.permute.xlu0 %1382
    %1384 = vrot.lane.b32.xlu0 %v1374, 112
    %v1385 = vpop.permute.xlu0 %1384
    %1386 = vrot.lane.b32.xlu0 %v1375, 112
    %v1387 = vpop.permute.xlu0 %1386
    %v1392 = vadd.f32 %v1352, %v1381
    %v1393 = vadd.f32 %v1353, %v1383
    %v1394 = vadd.f32 %v1354, %v1385
    %v1395 = vadd.f32 %v1355, %v1387
    %1396 = vset.pattern.permute.xlu0 18
    %1397 = vperm.xlu0 %1396, %v364
    %v1398 = vpop.permute.xlu0 %1397
    %1400 = vset.pattern.permute.xlu0 18
    %1401 = vperm.xlu0 %1400, %v367
    %v1402 = vpop.permute.xlu0 %1401
    %1404 = vset.pattern.permute.xlu0 18
    %1405 = vperm.xlu0 %1404, %v370
    %v1406 = vpop.permute.xlu0 %1405
    %1408 = vset.pattern.permute.xlu0 18
    %1409 = vperm.xlu0 %1408, %v373
    %v1410 = vpop.permute.xlu0 %1409
    %v1412 = vmul.f32 %v1398, %v217
    %v1413 = vmul.f32 %v1402, %v218
    %v1414 = vmul.f32 %v1406, %v219
    %v1415 = vmul.f32 %v1410, %v220
    %1420 = vrot.lane.b32.xlu0 %v1412, 96
    %v1421 = vpop.permute.xlu0 %1420
    %1422 = vrot.lane.b32.xlu0 %v1413, 96
    %v1423 = vpop.permute.xlu0 %1422
    %1424 = vrot.lane.b32.xlu0 %v1414, 96
    %v1425 = vpop.permute.xlu0 %1424
    %1426 = vrot.lane.b32.xlu0 %v1415, 96
    %v1427 = vpop.permute.xlu0 %1426
    %v1432 = vadd.f32 %v1392, %v1421
    %v1433 = vadd.f32 %v1393, %v1423
    %v1434 = vadd.f32 %v1394, %v1425
    %v1435 = vadd.f32 %v1395, %v1427
    %1436 = vset.pattern.permute.xlu0 19
    %1437 = vperm.xlu0 %1436, %v364
    %v1438 = vpop.permute.xlu0 %1437
    %1440 = vset.pattern.permute.xlu0 19
    %1441 = vperm.xlu0 %1440, %v367
    %v1442 = vpop.permute.xlu0 %1441
    %1444 = vset.pattern.permute.xlu0 19
    %1445 = vperm.xlu0 %1444, %v370
    %v1446 = vpop.permute.xlu0 %1445
    %1448 = vset.pattern.permute.xlu0 19
    %1449 = vperm.xlu0 %1448, %v373
    %v1450 = vpop.permute.xlu0 %1449
    %v1452 = vmul.f32 %v1438, %v217
    %v1453 = vmul.f32 %v1442, %v218
    %v1454 = vmul.f32 %v1446, %v219
    %v1455 = vmul.f32 %v1450, %v220
    %1460 = vrot.lane.b32.xlu0 %v1452, 80
    %v1461 = vpop.permute.xlu0 %1460
    %1462 = vrot.lane.b32.xlu0 %v1453, 80
    %v1463 = vpop.permute.xlu0 %1462
    %1464 = vrot.lane.b32.xlu0 %v1454, 80
    %v1465 = vpop.permute.xlu0 %1464
    %1466 = vrot.lane.b32.xlu0 %v1455, 80
    %v1467 = vpop.permute.xlu0 %1466
    %v1472 = vadd.f32 %v1432, %v1461
    %v1473 = vadd.f32 %v1433, %v1463
    %v1474 = vadd.f32 %v1434, %v1465
    %v1475 = vadd.f32 %v1435, %v1467
    %1476 = vset.pattern.permute.xlu0 20
    %1477 = vperm.xlu0 %1476, %v364
    %v1478 = vpop.permute.xlu0 %1477
    %1480 = vset.pattern.permute.xlu0 20
    %1481 = vperm.xlu0 %1480, %v367
    %v1482 = vpop.permute.xlu0 %1481
    %1484 = vset.pattern.permute.xlu0 20
    %1485 = vperm.xlu0 %1484, %v370
    %v1486 = vpop.permute.xlu0 %1485
    %1488 = vset.pattern.permute.xlu0 20
    %1489 = vperm.xlu0 %1488, %v373
    %v1490 = vpop.permute.xlu0 %1489
    %v1492 = vmul.f32 %v1478, %v217
    %v1493 = vmul.f32 %v1482, %v218
    %v1494 = vmul.f32 %v1486, %v219
    %v1495 = vmul.f32 %v1490, %v220
    %1500 = vrot.lane.b32.xlu0 %v1492, 64
    %v1501 = vpop.permute.xlu0 %1500
    %1502 = vrot.lane.b32.xlu0 %v1493, 64
    %v1503 = vpop.permute.xlu0 %1502
    %1504 = vrot.lane.b32.xlu0 %v1494, 64
    %v1505 = vpop.permute.xlu0 %1504
    %1506 = vrot.lane.b32.xlu0 %v1495, 64
    %v1507 = vpop.permute.xlu0 %1506
    %v1512 = vadd.f32 %v1472, %v1501
    %v1513 = vadd.f32 %v1473, %v1503
    %v1514 = vadd.f32 %v1474, %v1505
    %v1515 = vadd.f32 %v1475, %v1507
    %1516 = vset.pattern.permute.xlu0 21
    %1517 = vperm.xlu0 %1516, %v364
    %v1518 = vpop.permute.xlu0 %1517
    %1520 = vset.pattern.permute.xlu0 21
    %1521 = vperm.xlu0 %1520, %v367
    %v1522 = vpop.permute.xlu0 %1521
    %1524 = vset.pattern.permute.xlu0 21
    %1525 = vperm.xlu0 %1524, %v370
    %v1526 = vpop.permute.xlu0 %1525
    %1528 = vset.pattern.permute.xlu0 21
    %1529 = vperm.xlu0 %1528, %v373
    %v1530 = vpop.permute.xlu0 %1529
    %v1532 = vmul.f32 %v1518, %v217
    %v1533 = vmul.f32 %v1522, %v218
    %v1534 = vmul.f32 %v1526, %v219
    %v1535 = vmul.f32 %v1530, %v220
    %1540 = vrot.lane.b32.xlu0 %v1532, 48
    %v1541 = vpop.permute.xlu0 %1540
    %1542 = vrot.lane.b32.xlu0 %v1533, 48
    %v1543 = vpop.permute.xlu0 %1542
    %1544 = vrot.lane.b32.xlu0 %v1534, 48
    %v1545 = vpop.permute.xlu0 %1544
    %1546 = vrot.lane.b32.xlu0 %v1535, 48
    %v1547 = vpop.permute.xlu0 %1546
    %v1552 = vadd.f32 %v1512, %v1541
    %v1553 = vadd.f32 %v1513, %v1543
    %v1554 = vadd.f32 %v1514, %v1545
    %v1555 = vadd.f32 %v1515, %v1547
    %1556 = vset.pattern.permute.xlu0 22
    %1557 = vperm.xlu0 %1556, %v364
    %v1558 = vpop.permute.xlu0 %1557
    %1560 = vset.pattern.permute.xlu0 22
    %1561 = vperm.xlu0 %1560, %v367
    %v1562 = vpop.permute.xlu0 %1561
    %1564 = vset.pattern.permute.xlu0 22
    %1565 = vperm.xlu0 %1564, %v370
    %v1566 = vpop.permute.xlu0 %1565
    %1568 = vset.pattern.permute.xlu0 22
    %1569 = vperm.xlu0 %1568, %v373
    %v1570 = vpop.permute.xlu0 %1569
    %v1572 = vmul.f32 %v1558, %v217
    %v1573 = vmul.f32 %v1562, %v218
    %v1574 = vmul.f32 %v1566, %v219
    %v1575 = vmul.f32 %v1570, %v220
    %1580 = vrot.lane.b32.xlu0 %v1572, 32
    %v1581 = vpop.permute.xlu0 %1580
    %1582 = vrot.lane.b32.xlu0 %v1573, 32
    %v1583 = vpop.permute.xlu0 %1582
    %1584 = vrot.lane.b32.xlu0 %v1574, 32
    %v1585 = vpop.permute.xlu0 %1584
    %1586 = vrot.lane.b32.xlu0 %v1575, 32
    %v1587 = vpop.permute.xlu0 %1586
    %v1592 = vadd.f32 %v1552, %v1581
    %v1593 = vadd.f32 %v1553, %v1583
    %v1594 = vadd.f32 %v1554, %v1585
    %v1595 = vadd.f32 %v1555, %v1587
    %1596 = vset.pattern.permute.xlu0 23
    %1597 = vperm.xlu0 %1596, %v364
    %v1598 = vpop.permute.xlu0 %1597
    %1600 = vset.pattern.permute.xlu0 23
    %1601 = vperm.xlu0 %1600, %v367
    %v1602 = vpop.permute.xlu0 %1601
    %1604 = vset.pattern.permute.xlu0 23
    %1605 = vperm.xlu0 %1604, %v370
    %v1606 = vpop.permute.xlu0 %1605
    %1608 = vset.pattern.permute.xlu0 23
    %1609 = vperm.xlu0 %1608, %v373
    %v1610 = vpop.permute.xlu0 %1609
    %v1612 = vmul.f32 %v1598, %v217
    %v1613 = vmul.f32 %v1602, %v218
    %v1614 = vmul.f32 %v1606, %v219
    %v1615 = vmul.f32 %v1610, %v220
    %1620 = vrot.lane.b32.xlu0 %v1612, 16
    %v1621 = vpop.permute.xlu0 %1620
    %1622 = vrot.lane.b32.xlu0 %v1613, 16
    %v1623 = vpop.permute.xlu0 %1622
    %1624 = vrot.lane.b32.xlu0 %v1614, 16
    %v1625 = vpop.permute.xlu0 %1624
    %1626 = vrot.lane.b32.xlu0 %v1615, 16
    %v1627 = vpop.permute.xlu0 %1626
    %v1632 = vadd.f32 %v1592, %v1621
    %v1633 = vadd.f32 %v1593, %v1623
    %v1634 = vadd.f32 %v1594, %v1625
    %v1635 = vadd.f32 %v1595, %v1627
    %1640 = vrot.lane.b32.xlu0 %v1632, 16
    %v1641 = vpop.permute.xlu0 %1640
    %1642 = vrot.lane.b32.xlu0 %v1633, 16
    %v1643 = vpop.permute.xlu0 %1642
    %1644 = vrot.lane.b32.xlu0 %v1634, 16
    %v1645 = vpop.permute.xlu0 %1644
    %1646 = vrot.lane.b32.xlu0 %v1635, 16
    %v1647 = vpop.permute.xlu0 %1646
    %v1652 = vsel %vm78, %v1632, %v1641
    %v1653 = vsel %vm78, %v1633, %v1643
    %v1654 = vsel %vm78, %v1634, %v1645
    %v1655 = vsel %vm78, %v1635, %v1647
    %1656 = vrot.lane.b32.xlu0 %v364, 112
    %v1657 = vpop.permute.xlu0 %1656
    %1658 = vrot.lane.b32.xlu0 %v367, 112
    %v1659 = vpop.permute.xlu0 %1658
    %1660 = vrot.lane.b32.xlu0 %v370, 112
    %v1661 = vpop.permute.xlu0 %1660
    %1662 = vrot.lane.b32.xlu0 %v373, 112
    %v1663 = vpop.permute.xlu0 %1662
    %1664 = vrot.lane.b32.xlu0 %v364, 80
    %v1665 = vpop.permute.xlu0 %1664
    %1666 = vrot.lane.b32.xlu0 %v367, 80
    %v1667 = vpop.permute.xlu0 %1666
    %1668 = vrot.lane.b32.xlu0 %v370, 80
    %v1669 = vpop.permute.xlu0 %1668
    %1670 = vrot.lane.b32.xlu0 %v373, 80
    %v1671 = vpop.permute.xlu0 %1670
    %v1672 = vsel %vm707, %v1657, 0
    %v1674 = vsel %vm707, %v1659, 0
    %v1676 = vsel %vm707, %v1661, 0
    %v1678 = vsel %vm707, %v1663, 0
    %v1680 = vsel %vm707, %v1665, 0
    %v1682 = vsel %vm707, %v1667, 0
    %v1684 = vsel %vm707, %v1669, 0
    %v1686 = vsel %vm707, %v1671, 0
    %1688 = vmatpush.xpose.msra.mxu0 0.0
    %1689 = vmatpush.xpose.msra.mxu0 0.0
    %1690 = vmatpush.xpose.msra.mxu0 0.0
    %1691 = vmatpush.xpose.msra.mxu0 0.0
    %1692 = vmatpush.xpose.msra.mxu0 0.0
    %1693 = vmatpush.xpose.msra.mxu0 0.0
    %1694 = vmatpush.xpose.msra.mxu0 0.0
    %1695 = vmatpush.xpose.msra.mxu0 0.0
    %1696 = vmatpush.xpose.msra.mxu0 0.0
    %1697 = vmatpush.xpose.msra.mxu0 0.0
    %1698 = vmatpush.xpose.msra.mxu0 0.0
    %1699 = vmatpush.xpose.msra.mxu0 0.0
    %1700 = vmatpush.xpose.msra.mxu0 %v1686
    %1701 = vmatpush.xpose.msra.mxu0 %v1684
    %1702 = vmatpush.xpose.msra.mxu0 %v1682
    %1703 = vmatpush.xpose.msra.mxu0 %v1680
    %1704 = vmatmul.f32.gmra.mxu0 %v1672
    %v1705 = vpop.f32.mrf.mxu0
    %v1706 = vadd.f32 %v1652, %v1705
    %1707 = vmatmul.f32.gmra.mxu0 %v1674
    %v1708 = vpop.f32.mrf.mxu0
    %v1709 = vadd.f32 %v1653, %v1708
    %1710 = vmatmul.f32.gmra.mxu0 %v1676
    %v1711 = vpop.f32.mrf.mxu0
    %v1712 = vadd.f32 %v1654, %v1711
    %1713 = vmatmul.f32.gmra.mxu0 %v1678
    %v1714 = vpop.f32.mrf.mxu0
    %v1715 = vadd.f32 %v1655, %v1714
    %1716 = vdwg.mxu0
    %v1717 = vadd.f32 %v1706, %v221
    %v1718 = vadd.f32 %v1709, %v222
    %v1719 = vadd.f32 %v1712, %v223
    %v1720 = vadd.f32 %v1715, %v224
    %v1721 = vsel %vm142, %v1717, -inf
    %1722 = vmax.xlane.f32.xlu0 %v1721
    %v1723 = vpop.xlane.xlu0 %1722
    %v1724 = vsel %vm142, %v1718, -inf
    %1725 = vmax.xlane.f32.xlu0 %v1724
    %v1726 = vpop.xlane.xlu0 %1725
    %v1727 = vsel %vm142, %v1719, -inf
    %1728 = vmax.xlane.f32.xlu0 %v1727
    %v1729 = vpop.xlane.xlu0 %1728
    %v1730 = vsel %vm142, %v1720, -inf
    %1731 = vmax.xlane.f32.xlu0 %v1730
    %v1732 = vpop.xlane.xlu0 %1731
    %v1733 = vsub.f32 %v1717, %v1723
    %v1734 = vsub.f32 %v1718, %v1726
    %v1735 = vsub.f32 %v1719, %v1729
    %v1736 = vsub.f32 %v1720, %v1732
    %v1737 = vmul.f32 %v1733, 1.442695
    %v1738 = vpow.pop %v1737
    %v1739 = vmul.f32 %v1734, 1.442695
    %v1740 = vpow.pop %v1739
    %v1741 = vmul.f32 %v1735, 1.442695
    %v1742 = vpow.pop %v1741
    %v1743 = vmul.f32 %v1736, 1.442695
    %v1744 = vpow.pop %v1743
    %v1745 = vsel %vm142, %v1738, 0.0
    %1746 = vadd.xlane.f32.xlu0 %v1745
    %v1747 = vpop.xlane.xlu0 %1746
    %v1748 = vsel %vm142, %v1740, 0.0
    %1749 = vadd.xlane.f32.xlu0 %v1748
    %v1750 = vpop.xlane.xlu0 %1749
    %v1751 = vsel %vm142, %v1742, 0.0
    %1752 = vadd.xlane.f32.xlu0 %v1751
    %v1753 = vpop.xlane.xlu0 %1752
    %v1754 = vsel %vm142, %v1744, 0.0
    %1755 = vadd.xlane.f32.xlu0 %v1754
    %v1756 = vpop.xlane.xlu0 %1755
    %v1757 = vrcp.pop %v1747
    %v1758 = vrcp.pop %v1750
    %v1759 = vrcp.pop %v1753
    %v1760 = vrcp.pop %v1756
    %v1761 = vmul.f32 %v1738, %v1757
    %v1762 = vmul.f32 %v1740, %v1758
    %v1763 = vmul.f32 %v1742, %v1759
    %v1764 = vmul.f32 %v1744, %v1760
    %1765 = vrot.lane.b32.xlu0 %v364, 48
    %v1766 = vpop.permute.xlu0 %1765
    %1767 = vrot.lane.b32.xlu0 %v367, 48
    %v1768 = vpop.permute.xlu0 %1767
    %1769 = vrot.lane.b32.xlu0 %v370, 48
    %v1770 = vpop.permute.xlu0 %1769
    %1771 = vrot.lane.b32.xlu0 %v373, 48
    %v1772 = vpop.permute.xlu0 %1771
    %v1778 = vsel %vm142, %v1761, 0
    %v1781 = vsel %vm142, %v1762, 0
    %v1784 = vsel %vm142, %v1763, 0
    %v1787 = vsel %vm142, %v1764, 0
    %1789 = vmatpush.msra.mxu0 0.0
    %1790 = vmatpush.msra.mxu0 0.0
    %1791 = vmatpush.msra.mxu0 0.0
    %1792 = vmatpush.msra.mxu0 0.0
    %1793 = vmatpush.msra.mxu0 0.0
    %1794 = vmatpush.msra.mxu0 0.0
    %1795 = vmatpush.msra.mxu0 0.0
    %1796 = vmatpush.msra.mxu0 0.0
    %1797 = vmatpush.msra.mxu0 0.0
    %1798 = vmatpush.msra.mxu0 0.0
    %1799 = vmatpush.msra.mxu0 0.0
    %1800 = vmatpush.msra.mxu0 0.0
    %1801 = vmatpush.msra.mxu0 %v1772
    %1802 = vmatpush.msra.mxu0 %v1770
    %1803 = vmatpush.msra.mxu0 %v1768
    %1804 = vmatpush.msra.mxu0 %v1766
    %1805 = vmatmul.f32.gmra.mxu0 %v1778
    %v1806 = vpop.f32.mrf.mxu0
    %v1807 = vadd.f32 0.0, %v1806
    %1808 = vmatmul.f32.gmra.mxu0 %v1781
    %v1809 = vpop.f32.mrf.mxu0
    %v1810 = vadd.f32 0.0, %v1809
    %1811 = vmatmul.f32.gmra.mxu0 %v1784
    %v1812 = vpop.f32.mrf.mxu0
    %v1813 = vadd.f32 0.0, %v1812
    %1814 = vmatmul.f32.gmra.mxu0 %v1787
    %v1815 = vpop.f32.mrf.mxu0
    %v1816 = vadd.f32 0.0, %v1815
    %1817 = vdwg.mxu0
    %1818 = vset.pattern.permute.xlu0 24
    %1819 = vperm.xlu0 %1818, %v364
    %v1820 = vpop.permute.xlu0 %1819
    %1822 = vset.pattern.permute.xlu0 24
    %1823 = vperm.xlu0 %1822, %v367
    %v1824 = vpop.permute.xlu0 %1823
    %1826 = vset.pattern.permute.xlu0 24
    %1827 = vperm.xlu0 %1826, %v370
    %v1828 = vpop.permute.xlu0 %1827
    %1830 = vset.pattern.permute.xlu0 24
    %1831 = vperm.xlu0 %1830, %v373
    %v1832 = vpop.permute.xlu0 %1831
    %v1834 = vmul.f32 %v1820, %v217
    %v1835 = vmul.f32 %v1824, %v218
    %v1836 = vmul.f32 %v1828, %v219
    %v1837 = vmul.f32 %v1832, %v220
    %1838 = vset.pattern.permute.xlu0 25
    %1839 = vperm.xlu0 %1838, %v364
    %v1840 = vpop.permute.xlu0 %1839
    %1842 = vset.pattern.permute.xlu0 25
    %1843 = vperm.xlu0 %1842, %v367
    %v1844 = vpop.permute.xlu0 %1843
    %1846 = vset.pattern.permute.xlu0 25
    %1847 = vperm.xlu0 %1846, %v370
    %v1848 = vpop.permute.xlu0 %1847
    %1850 = vset.pattern.permute.xlu0 25
    %1851 = vperm.xlu0 %1850, %v373
    %v1852 = vpop.permute.xlu0 %1851
    %v1854 = vmul.f32 %v1840, %v217
    %v1855 = vmul.f32 %v1844, %v218
    %v1856 = vmul.f32 %v1848, %v219
    %v1857 = vmul.f32 %v1852, %v220
    %1862 = vrot.lane.b32.xlu0 %v1854, 112
    %v1863 = vpop.permute.xlu0 %1862
    %1864 = vrot.lane.b32.xlu0 %v1855, 112
    %v1865 = vpop.permute.xlu0 %1864
    %1866 = vrot.lane.b32.xlu0 %v1856, 112
    %v1867 = vpop.permute.xlu0 %1866
    %1868 = vrot.lane.b32.xlu0 %v1857, 112
    %v1869 = vpop.permute.xlu0 %1868
    %v1874 = vadd.f32 %v1834, %v1863
    %v1875 = vadd.f32 %v1835, %v1865
    %v1876 = vadd.f32 %v1836, %v1867
    %v1877 = vadd.f32 %v1837, %v1869
    %1878 = vset.pattern.permute.xlu0 26
    %1879 = vperm.xlu0 %1878, %v364
    %v1880 = vpop.permute.xlu0 %1879
    %1882 = vset.pattern.permute.xlu0 26
    %1883 = vperm.xlu0 %1882, %v367
    %v1884 = vpop.permute.xlu0 %1883
    %1886 = vset.pattern.permute.xlu0 26
    %1887 = vperm.xlu0 %1886, %v370
    %v1888 = vpop.permute.xlu0 %1887
    %1890 = vset.pattern.permute.xlu0 26
    %1891 = vperm.xlu0 %1890, %v373
    %v1892 = vpop.permute.xlu0 %1891
    %v1894 = vmul.f32 %v1880, %v217
    %v1895 = vmul.f32 %v1884, %v218
    %v1896 = vmul.f32 %v1888, %v219
    %v1897 = vmul.f32 %v1892, %v220
    %1902 = vrot.lane.b32.xlu0 %v1894, 96
    %v1903 = vpop.permute.xlu0 %1902
    %1904 = vrot.lane.b32.xlu0 %v1895, 96
    %v1905 = vpop.permute.xlu0 %1904
    %1906 = vrot.lane.b32.xlu0 %v1896, 96
    %v1907 = vpop.permute.xlu0 %1906
    %1908 = vrot.lane.b32.xlu0 %v1897, 96
    %v1909 = vpop.permute.xlu0 %1908
    %v1914 = vadd.f32 %v1874, %v1903
    %v1915 = vadd.f32 %v1875, %v1905
    %v1916 = vadd.f32 %v1876, %v1907
    %v1917 = vadd.f32 %v1877, %v1909
    %1918 = vset.pattern.permute.xlu0 27
    %1919 = vperm.xlu0 %1918, %v364
    %v1920 = vpop.permute.xlu0 %1919
    %1922 = vset.pattern.permute.xlu0 27
    %1923 = vperm.xlu0 %1922, %v367
    %v1924 = vpop.permute.xlu0 %1923
    %1926 = vset.pattern.permute.xlu0 27
    %1927 = vperm.xlu0 %1926, %v370
    %v1928 = vpop.permute.xlu0 %1927
    %1930 = vset.pattern.permute.xlu0 27
    %1931 = vperm.xlu0 %1930, %v373
    %v1932 = vpop.permute.xlu0 %1931
    %v1934 = vmul.f32 %v1920, %v217
    %v1935 = vmul.f32 %v1924, %v218
    %v1936 = vmul.f32 %v1928, %v219
    %v1937 = vmul.f32 %v1932, %v220
    %1942 = vrot.lane.b32.xlu0 %v1934, 80
    %v1943 = vpop.permute.xlu0 %1942
    %1944 = vrot.lane.b32.xlu0 %v1935, 80
    %v1945 = vpop.permute.xlu0 %1944
    %1946 = vrot.lane.b32.xlu0 %v1936, 80
    %v1947 = vpop.permute.xlu0 %1946
    %1948 = vrot.lane.b32.xlu0 %v1937, 80
    %v1949 = vpop.permute.xlu0 %1948
    %v1954 = vadd.f32 %v1914, %v1943
    %v1955 = vadd.f32 %v1915, %v1945
    %v1956 = vadd.f32 %v1916, %v1947
    %v1957 = vadd.f32 %v1917, %v1949
    %1958 = vset.pattern.permute.xlu0 28
    %1959 = vperm.xlu0 %1958, %v364
    %v1960 = vpop.permute.xlu0 %1959
    %1962 = vset.pattern.permute.xlu0 28
    %1963 = vperm.xlu0 %1962, %v367
    %v1964 = vpop.permute.xlu0 %1963
    %1966 = vset.pattern.permute.xlu0 28
    %1967 = vperm.xlu0 %1966, %v370
    %v1968 = vpop.permute.xlu0 %1967
    %1970 = vset.pattern.permute.xlu0 28
    %1971 = vperm.xlu0 %1970, %v373
    %v1972 = vpop.permute.xlu0 %1971
    %v1974 = vmul.f32 %v1960, %v217
    %v1975 = vmul.f32 %v1964, %v218
    %v1976 = vmul.f32 %v1968, %v219
    %v1977 = vmul.f32 %v1972, %v220
    %1982 = vrot.lane.b32.xlu0 %v1974, 64
    %v1983 = vpop.permute.xlu0 %1982
    %1984 = vrot.lane.b32.xlu0 %v1975, 64
    %v1985 = vpop.permute.xlu0 %1984
    %1986 = vrot.lane.b32.xlu0 %v1976, 64
    %v1987 = vpop.permute.xlu0 %1986
    %1988 = vrot.lane.b32.xlu0 %v1977, 64
    %v1989 = vpop.permute.xlu0 %1988
    %v1994 = vadd.f32 %v1954, %v1983
    %v1995 = vadd.f32 %v1955, %v1985
    %v1996 = vadd.f32 %v1956, %v1987
    %v1997 = vadd.f32 %v1957, %v1989
    %1998 = vset.pattern.permute.xlu0 29
    %1999 = vperm.xlu0 %1998, %v364
    %v2000 = vpop.permute.xlu0 %1999
    %2002 = vset.pattern.permute.xlu0 29
    %2003 = vperm.xlu0 %2002, %v367
    %v2004 = vpop.permute.xlu0 %2003
    %2006 = vset.pattern.permute.xlu0 29
    %2007 = vperm.xlu0 %2006, %v370
    %v2008 = vpop.permute.xlu0 %2007
    %2010 = vset.pattern.permute.xlu0 29
    %2011 = vperm.xlu0 %2010, %v373
    %v2012 = vpop.permute.xlu0 %2011
    %v2014 = vmul.f32 %v2000, %v217
    %v2015 = vmul.f32 %v2004, %v218
    %v2016 = vmul.f32 %v2008, %v219
    %v2017 = vmul.f32 %v2012, %v220
    %2022 = vrot.lane.b32.xlu0 %v2014, 48
    %v2023 = vpop.permute.xlu0 %2022
    %2024 = vrot.lane.b32.xlu0 %v2015, 48
    %v2025 = vpop.permute.xlu0 %2024
    %2026 = vrot.lane.b32.xlu0 %v2016, 48
    %v2027 = vpop.permute.xlu0 %2026
    %2028 = vrot.lane.b32.xlu0 %v2017, 48
    %v2029 = vpop.permute.xlu0 %2028
    %v2034 = vadd.f32 %v1994, %v2023
    %v2035 = vadd.f32 %v1995, %v2025
    %v2036 = vadd.f32 %v1996, %v2027
    %v2037 = vadd.f32 %v1997, %v2029
    %2038 = vset.pattern.permute.xlu0 30
    %2039 = vperm.xlu0 %2038, %v364
    %v2040 = vpop.permute.xlu0 %2039
    %2042 = vset.pattern.permute.xlu0 30
    %2043 = vperm.xlu0 %2042, %v367
    %v2044 = vpop.permute.xlu0 %2043
    %2046 = vset.pattern.permute.xlu0 30
    %2047 = vperm.xlu0 %2046, %v370
    %v2048 = vpop.permute.xlu0 %2047
    %2050 = vset.pattern.permute.xlu0 30
    %2051 = vperm.xlu0 %2050, %v373
    %v2052 = vpop.permute.xlu0 %2051
    %v2054 = vmul.f32 %v2040, %v217
    %v2055 = vmul.f32 %v2044, %v218
    %v2056 = vmul.f32 %v2048, %v219
    %v2057 = vmul.f32 %v2052, %v220
    %2062 = vrot.lane.b32.xlu0 %v2054, 32
    %v2063 = vpop.permute.xlu0 %2062
    %2064 = vrot.lane.b32.xlu0 %v2055, 32
    %v2065 = vpop.permute.xlu0 %2064
    %2066 = vrot.lane.b32.xlu0 %v2056, 32
    %v2067 = vpop.permute.xlu0 %2066
    %2068 = vrot.lane.b32.xlu0 %v2057, 32
    %v2069 = vpop.permute.xlu0 %2068
    %v2074 = vadd.f32 %v2034, %v2063
    %v2075 = vadd.f32 %v2035, %v2065
    %v2076 = vadd.f32 %v2036, %v2067
    %v2077 = vadd.f32 %v2037, %v2069
    %2078 = vset.pattern.permute.xlu0 31
    %2079 = vperm.xlu0 %2078, %v364
    %v2080 = vpop.permute.xlu0 %2079
    %2082 = vset.pattern.permute.xlu0 31
    %2083 = vperm.xlu0 %2082, %v367
    %v2084 = vpop.permute.xlu0 %2083
    %2086 = vset.pattern.permute.xlu0 31
    %2087 = vperm.xlu0 %2086, %v370
    %v2088 = vpop.permute.xlu0 %2087
    %2090 = vset.pattern.permute.xlu0 31
    %2091 = vperm.xlu0 %2090, %v373
    %v2092 = vpop.permute.xlu0 %2091
    %v2094 = vmul.f32 %v2080, %v217
    %v2095 = vmul.f32 %v2084, %v218
    %v2096 = vmul.f32 %v2088, %v219
    %v2097 = vmul.f32 %v2092, %v220
    %2102 = vrot.lane.b32.xlu0 %v2094, 16
    %v2103 = vpop.permute.xlu0 %2102
    %2104 = vrot.lane.b32.xlu0 %v2095, 16
    %v2105 = vpop.permute.xlu0 %2104
    %2106 = vrot.lane.b32.xlu0 %v2096, 16
    %v2107 = vpop.permute.xlu0 %2106
    %2108 = vrot.lane.b32.xlu0 %v2097, 16
    %v2109 = vpop.permute.xlu0 %2108
    %v2114 = vadd.f32 %v2074, %v2103
    %v2115 = vadd.f32 %v2075, %v2105
    %v2116 = vadd.f32 %v2076, %v2107
    %v2117 = vadd.f32 %v2077, %v2109
    %2122 = vrot.lane.b32.xlu0 %v2114, 16
    %v2123 = vpop.permute.xlu0 %2122
    %2124 = vrot.lane.b32.xlu0 %v2115, 16
    %v2125 = vpop.permute.xlu0 %2124
    %2126 = vrot.lane.b32.xlu0 %v2116, 16
    %v2127 = vpop.permute.xlu0 %2126
    %2128 = vrot.lane.b32.xlu0 %v2117, 16
    %v2129 = vpop.permute.xlu0 %2128
    %v2134 = vsel %vm78, %v2114, %v2123
    %v2135 = vsel %vm78, %v2115, %v2125
    %v2136 = vsel %vm78, %v2116, %v2127
    %v2137 = vsel %vm78, %v2117, %v2129
    %2138 = vrot.lane.b32.xlu0 %v364, 104
    %v2139 = vpop.permute.xlu0 %2138
    %2140 = vrot.lane.b32.xlu0 %v367, 104
    %v2141 = vpop.permute.xlu0 %2140
    %2142 = vrot.lane.b32.xlu0 %v370, 104
    %v2143 = vpop.permute.xlu0 %2142
    %2144 = vrot.lane.b32.xlu0 %v373, 104
    %v2145 = vpop.permute.xlu0 %2144
    %2146 = vrot.lane.b32.xlu0 %v364, 72
    %v2147 = vpop.permute.xlu0 %2146
    %2148 = vrot.lane.b32.xlu0 %v367, 72
    %v2149 = vpop.permute.xlu0 %2148
    %2150 = vrot.lane.b32.xlu0 %v370, 72
    %v2151 = vpop.permute.xlu0 %2150
    %2152 = vrot.lane.b32.xlu0 %v373, 72
    %v2153 = vpop.permute.xlu0 %2152
    %v2154 = vsel %vm707, %v2139, 0
    %v2156 = vsel %vm707, %v2141, 0
    %v2158 = vsel %vm707, %v2143, 0
    %v2160 = vsel %vm707, %v2145, 0
    %v2162 = vsel %vm707, %v2147, 0
    %v2164 = vsel %vm707, %v2149, 0
    %v2166 = vsel %vm707, %v2151, 0
    %v2168 = vsel %vm707, %v2153, 0
    %2170 = vmatpush.xpose.msra.mxu0 0.0
    %2171 = vmatpush.xpose.msra.mxu0 0.0
    %2172 = vmatpush.xpose.msra.mxu0 0.0
    %2173 = vmatpush.xpose.msra.mxu0 0.0
    %2174 = vmatpush.xpose.msra.mxu0 0.0
    %2175 = vmatpush.xpose.msra.mxu0 0.0
    %2176 = vmatpush.xpose.msra.mxu0 0.0
    %2177 = vmatpush.xpose.msra.mxu0 0.0
    %2178 = vmatpush.xpose.msra.mxu0 0.0
    %2179 = vmatpush.xpose.msra.mxu0 0.0
    %2180 = vmatpush.xpose.msra.mxu0 0.0
    %2181 = vmatpush.xpose.msra.mxu0 0.0
    %2182 = vmatpush.xpose.msra.mxu0 %v2168
    %2183 = vmatpush.xpose.msra.mxu0 %v2166
    %2184 = vmatpush.xpose.msra.mxu0 %v2164
    %2185 = vmatpush.xpose.msra.mxu0 %v2162
    %2186 = vmatmul.f32.gmra.mxu0 %v2154
    %v2187 = vpop.f32.mrf.mxu0
    %v2188 = vadd.f32 %v2134, %v2187
    %2189 = vmatmul.f32.gmra.mxu0 %v2156
    %v2190 = vpop.f32.mrf.mxu0
    %v2191 = vadd.f32 %v2135, %v2190
    %2192 = vmatmul.f32.gmra.mxu0 %v2158
    %v2193 = vpop.f32.mrf.mxu0
    %v2194 = vadd.f32 %v2136, %v2193
    %2195 = vmatmul.f32.gmra.mxu0 %v2160
    %v2196 = vpop.f32.mrf.mxu0
    %v2197 = vadd.f32 %v2137, %v2196
    %2198 = vdwg.mxu0
    %v2199 = vadd.f32 %v2188, %v221
    %v2200 = vadd.f32 %v2191, %v222
    %v2201 = vadd.f32 %v2194, %v223
    %v2202 = vadd.f32 %v2197, %v224
    %v2203 = vsel %vm142, %v2199, -inf
    %2204 = vmax.xlane.f32.xlu0 %v2203
    %v2205 = vpop.xlane.xlu0 %2204
    %v2206 = vsel %vm142, %v2200, -inf
    %2207 = vmax.xlane.f32.xlu0 %v2206
    %v2208 = vpop.xlane.xlu0 %2207
    %v2209 = vsel %vm142, %v2201, -inf
    %2210 = vmax.xlane.f32.xlu0 %v2209
    %v2211 = vpop.xlane.xlu0 %2210
    %v2212 = vsel %vm142, %v2202, -inf
    %2213 = vmax.xlane.f32.xlu0 %v2212
    %v2214 = vpop.xlane.xlu0 %2213
    %v2215 = vsub.f32 %v2199, %v2205
    %v2216 = vsub.f32 %v2200, %v2208
    %v2217 = vsub.f32 %v2201, %v2211
    %v2218 = vsub.f32 %v2202, %v2214
    %v2219 = vmul.f32 %v2215, 1.442695
    %v2220 = vpow.pop %v2219
    %v2221 = vmul.f32 %v2216, 1.442695
    %v2222 = vpow.pop %v2221
    %v2223 = vmul.f32 %v2217, 1.442695
    %v2224 = vpow.pop %v2223
    %v2225 = vmul.f32 %v2218, 1.442695
    %v2226 = vpow.pop %v2225
    %v2227 = vsel %vm142, %v2220, 0.0
    %2228 = vadd.xlane.f32.xlu0 %v2227
    %v2229 = vpop.xlane.xlu0 %2228
    %v2230 = vsel %vm142, %v2222, 0.0
    %2231 = vadd.xlane.f32.xlu0 %v2230
    %v2232 = vpop.xlane.xlu0 %2231
    %v2233 = vsel %vm142, %v2224, 0.0
    %2234 = vadd.xlane.f32.xlu0 %v2233
    %v2235 = vpop.xlane.xlu0 %2234
    %v2236 = vsel %vm142, %v2226, 0.0
    %2237 = vadd.xlane.f32.xlu0 %v2236
    %v2238 = vpop.xlane.xlu0 %2237
    %v2239 = vrcp.pop %v2229
    %v2240 = vrcp.pop %v2232
    %v2241 = vrcp.pop %v2235
    %v2242 = vrcp.pop %v2238
    %v2243 = vmul.f32 %v2220, %v2239
    %v2244 = vmul.f32 %v2222, %v2240
    %v2245 = vmul.f32 %v2224, %v2241
    %v2246 = vmul.f32 %v2226, %v2242
    %2247 = vrot.lane.b32.xlu0 %v364, 40
    %v2248 = vpop.permute.xlu0 %2247
    %2249 = vrot.lane.b32.xlu0 %v367, 40
    %v2250 = vpop.permute.xlu0 %2249
    %2251 = vrot.lane.b32.xlu0 %v370, 40
    %v2252 = vpop.permute.xlu0 %2251
    %2253 = vrot.lane.b32.xlu0 %v373, 40
    %v2254 = vpop.permute.xlu0 %2253
    %v2260 = vsel %vm142, %v2243, 0
    %v2263 = vsel %vm142, %v2244, 0
    %v2266 = vsel %vm142, %v2245, 0
    %v2269 = vsel %vm142, %v2246, 0
    %2271 = vmatpush.msra.mxu0 0.0
    %2272 = vmatpush.msra.mxu0 0.0
    %2273 = vmatpush.msra.mxu0 0.0
    %2274 = vmatpush.msra.mxu0 0.0
    %2275 = vmatpush.msra.mxu0 0.0
    %2276 = vmatpush.msra.mxu0 0.0
    %2277 = vmatpush.msra.mxu0 0.0
    %2278 = vmatpush.msra.mxu0 0.0
    %2279 = vmatpush.msra.mxu0 0.0
    %2280 = vmatpush.msra.mxu0 0.0
    %2281 = vmatpush.msra.mxu0 0.0
    %2282 = vmatpush.msra.mxu0 0.0
    %2283 = vmatpush.msra.mxu0 %v2254
    %2284 = vmatpush.msra.mxu0 %v2252
    %2285 = vmatpush.msra.mxu0 %v2250
    %2286 = vmatpush.msra.mxu0 %v2248
    %2287 = vmatmul.f32.gmra.mxu0 %v2260
    %v2288 = vpop.f32.mrf.mxu0
    %v2289 = vadd.f32 0.0, %v2288
    %2290 = vmatmul.f32.gmra.mxu0 %v2263
    %v2291 = vpop.f32.mrf.mxu0
    %v2292 = vadd.f32 0.0, %v2291
    %2293 = vmatmul.f32.gmra.mxu0 %v2266
    %v2294 = vpop.f32.mrf.mxu0
    %v2295 = vadd.f32 0.0, %v2294
    %2296 = vmatmul.f32.gmra.mxu0 %v2269
    %v2297 = vpop.f32.mrf.mxu0
    %v2298 = vadd.f32 0.0, %v2297
    %2299 = vdwg.mxu0
    %2304 = vrot.lane.b32.xlu0 %v1325, 8
    %v2305 = vpop.permute.xlu0 %2304
    %2306 = vrot.lane.b32.xlu0 %v1328, 8
    %v2307 = vpop.permute.xlu0 %2306
    %2308 = vrot.lane.b32.xlu0 %v1331, 8
    %v2309 = vpop.permute.xlu0 %2308
    %2310 = vrot.lane.b32.xlu0 %v1334, 8
    %v2311 = vpop.permute.xlu0 %2310
    %2320 = vrot.lane.b32.xlu0 %v1807, 16
    %v2321 = vpop.permute.xlu0 %2320
    %2322 = vrot.lane.b32.xlu0 %v1810, 16
    %v2323 = vpop.permute.xlu0 %2322
    %2324 = vrot.lane.b32.xlu0 %v1813, 16
    %v2325 = vpop.permute.xlu0 %2324
    %2326 = vrot.lane.b32.xlu0 %v1816, 16
    %v2327 = vpop.permute.xlu0 %2326
    %2336 = vrot.lane.b32.xlu0 %v2289, 24
    %v2337 = vpop.permute.xlu0 %2336
    %2338 = vrot.lane.b32.xlu0 %v2292, 24
    %v2339 = vpop.permute.xlu0 %2338
    %2340 = vrot.lane.b32.xlu0 %v2295, 24
    %v2341 = vpop.permute.xlu0 %2340
    %2342 = vrot.lane.b32.xlu0 %v2298, 24
    %v2343 = vpop.permute.xlu0 %2342
    %v2348 = vsel %vm707, %v843, %v2305
    %v2349 = vsel %vm707, %v846, %v2307
    %v2350 = vsel %vm707, %v849, %v2309
    %v2351 = vsel %vm707, %v852, %v2311
    %v2352 = vsel %vm78, %v2348, %v2321
    %v2353 = vsel %vm78, %v2349, %v2323
    %v2354 = vsel %vm78, %v2350, %v2325
    %v2355 = vsel %vm78, %v2351, %v2327
    %vm2356 = vcmask 195584
    %v2357 = vsel %vm2356, %v2352, %v2337
    %v2358 = vsel %vm2356, %v2353, %v2339
    %v2359 = vsel %vm2356, %v2354, %v2341
    %v2360 = vsel %vm2356, %v2355, %v2343
    %v2361 = vld [vmem:[#allocation5 + $0x50] sm:$0xff]
    %v2362 = vld [vmem:[#allocation5 + $0x58] sm:$0xff]
    %v2363 = vld [vmem:[#allocation5 + $0x60] sm:$0xff]
    %v2364 = vld [vmem:[#allocation5 + $0x68] sm:$0xff]
    %v2366 = vsel %vm142, %v2357, 0
    %v2369 = vsel %vm142, %v2358, 0
    %v2372 = vsel %vm142, %v2359, 0
    %v2375 = vsel %vm142, %v2360, 0
    %2377 = vmatpush.msra.mxu0 0.0
    %2378 = vmatpush.msra.mxu0 0.0
    %2379 = vmatpush.msra.mxu0 0.0
    %2380 = vmatpush.msra.mxu0 0.0
    %2381 = vmatpush.msra.mxu0 0.0
    %2382 = vmatpush.msra.mxu0 0.0
    %2383 = vmatpush.msra.mxu0 0.0
    %2384 = vmatpush.msra.mxu0 0.0
    %2385 = vmatpush.msra.mxu0 0.0
    %2386 = vmatpush.msra.mxu0 0.0
    %2387 = vmatpush.msra.mxu0 0.0
    %2388 = vmatpush.msra.mxu0 0.0
    %2389 = vmatpush.msra.mxu0 %v2364
    %2390 = vmatpush.msra.mxu0 %v2363
    %2391 = vmatpush.msra.mxu0 %v2362
    %2392 = vmatpush.msra.mxu0 %v2361
    %2393 = vmatmul.f32.gmra.mxu0 %v2366
    %v2394 = vpop.f32.mrf.mxu0
    %v2395 = vadd.f32 0.0, %v2394
    %2396 = vmatmul.f32.gmra.mxu0 %v2369
    %v2397 = vpop.f32.mrf.mxu0
    %v2398 = vadd.f32 0.0, %v2397
    %2399 = vmatmul.f32.gmra.mxu0 %v2372
    %v2400 = vpop.f32.mrf.mxu0
    %v2401 = vadd.f32 0.0, %v2400
    %2402 = vmatmul.f32.gmra.mxu0 %v2375
    %v2403 = vpop.f32.mrf.mxu0
    %v2404 = vadd.f32 0.0, %v2403
    %2405 = vdwg.mxu0
    %v2406 = vadd.f32 %v213, %v2395
    %v2407 = vadd.f32 %v214, %v2398
    %v2408 = vadd.f32 %v215, %v2401
    %v2409 = vadd.f32 %v216, %v2404
    %v2410 = vsel %vm142, %v2406, 0.0
    %2411 = vadd.xlane.f32.xlu0 %v2410
    %v2412 = vpop.xlane.xlu0 %2411
    %v2413 = vsel %vm142, %v2407, 0.0
    %2414 = vadd.xlane.f32.xlu0 %v2413
    %v2415 = vpop.xlane.xlu0 %2414
    %v2416 = vsel %vm142, %v2408, 0.0
    %2417 = vadd.xlane.f32.xlu0 %v2416
    %v2418 = vpop.xlane.xlu0 %2417
    %v2419 = vsel %vm142, %v2409, 0.0
    %2420 = vadd.xlane.f32.xlu0 %v2419
    %v2421 = vpop.xlane.xlu0 %2420
    %v2422 = vmul.f32 %v2412, %v243
    %v2423 = vmul.f32 %v2415, %v243
    %v2424 = vmul.f32 %v2418, %v243
    %v2425 = vmul.f32 %v2421, %v243
    %v2426 = vsub.f32 %v2406, %v2422
    %v2427 = vsub.f32 %v2407, %v2423
    %v2428 = vsub.f32 %v2408, %v2424
    %v2429 = vsub.f32 %v2409, %v2425
    %v2430 = vmul.f32 %v2426, %v2426
    %v2431 = vmul.f32 %v2427, %v2427
    %v2432 = vmul.f32 %v2428, %v2428
    %v2433 = vmul.f32 %v2429, %v2429
    %v2434 = vsel %vm142, %v2430, 0.0
    %2435 = vadd.xlane.f32.xlu0 %v2434
    %v2436 = vpop.xlane.xlu0 %2435
    %v2437 = vsel %vm142, %v2431, 0.0
    %2438 = vadd.xlane.f32.xlu0 %v2437
    %v2439 = vpop.xlane.xlu0 %2438
    %v2440 = vsel %vm142, %v2432, 0.0
    %2441 = vadd.xlane.f32.xlu0 %v2440
    %v2442 = vpop.xlane.xlu0 %2441
    %v2443 = vsel %vm142, %v2433, 0.0
    %2444 = vadd.xlane.f32.xlu0 %v2443
    %v2445 = vpop.xlane.xlu0 %2444
    %v2446 = vmul.f32 %v2436, %v243
    %v2447 = vmul.f32 %v2439, %v243
    %v2448 = vmul.f32 %v2442, %v243
    %v2449 = vmul.f32 %v2445, %v243
    %v2450 = vadd.f32 %v2446, 1e-05
    %v2451 = vadd.f32 %v2447, 1e-05
    %v2452 = vadd.f32 %v2448, 1e-05
    %v2453 = vadd.f32 %v2449, 1e-05
    %v2454 = vrsqrt.pop %v2450
    %v2455 = vmul.f32 %v2454, %v2450
    %v2456 = vmul.f32 %v2455, %v2454
    %v2457 = vmul.f32 0.5, %v2456
    %v2458 = vsub.f32 1.5, %v2457
    %v2459 = vmul.f32 %v2454, %v2458
    %vm2460 = vweird.f32 %v2450
    %vm2461 = vweird.f32 %v2454
    %vm2462 = vmor %vm2460, %vm2461
    %v2463 = vsel %vm2462, %v2454, %v2459
    %v2464 = vrsqrt.pop %v2451
    %v2465 = vmul.f32 %v2464, %v2451
    %v2466 = vmul.f32 %v2465, %v2464
    %v2467 = vmul.f32 0.5, %v2466
    %v2468 = vsub.f32 1.5, %v2467
    %v2469 = vmul.f32 %v2464, %v2468
    %vm2470 = vweird.f32 %v2451
    %vm2471 = vweird.f32 %v2464
    %vm2472 = vmor %vm2470, %vm2471
    %v2473 = vsel %vm2472, %v2464, %v2469
    %v2474 = vrsqrt.pop %v2452
    %v2475 = vmul.f32 %v2474, %v2452
    %v2476 = vmul.f32 %v2475, %v2474
    %v2477 = vmul.f32 0.5, %v2476
    %v2478 = vsub.f32 1.5, %v2477
    %v2479 = vmul.f32 %v2474, %v2478
    %vm2480 = vweird.f32 %v2452
    %vm2481 = vweird.f32 %v2474
    %vm2482 = vmor %vm2480, %vm2481
    %v2483 = vsel %vm2482, %v2474, %v2479
    %v2484 = vrsqrt.pop %v2453
    %v2485 = vmul.f32 %v2484, %v2453
    %v2486 = vmul.f32 %v2485, %v2484
    %v2487 = vmul.f32 0.5, %v2486
    %v2488 = vsub.f32 1.5, %v2487
    %v2489 = vmul.f32 %v2484, %v2488
    %vm2490 = vweird.f32 %v2453
    %vm2491 = vweird.f32 %v2484
    %vm2492 = vmor %vm2490, %vm2491
    %v2493 = vsel %vm2492, %v2484, %v2489
    %v2494 = vmul.f32 %v2426, %v2463
    %v2495 = vmul.f32 %v2427, %v2473
    %v2496 = vmul.f32 %v2428, %v2483
    %v2497 = vmul.f32 %v2429, %v2493
    %v2498 = vperm.slane %v44, 6
    %v2499 = vmul.f32 %v2494, %v2498
    %v2500 = vmul.f32 %v2495, %v2498
    %v2501 = vmul.f32 %v2496, %v2498
    %v2502 = vmul.f32 %v2497, %v2498
    %v2503 = vperm.slane %v45, 0
    %v2504 = vadd.f32 %v2499, %v2503
    %v2505 = vadd.f32 %v2500, %v2503
    %v2506 = vadd.f32 %v2501, %v2503
    %v2507 = vadd.f32 %v2502, %v2503
    %v2508 = vld [vmem:[#allocation5 + $0x70] sm:$0xff]
    %v2509 = vld [vmem:[#allocation5 + $0x78] sm:$0xff]
    %v2510 = vld [vmem:[#allocation5 + $0x80] sm:$0xff]
    %v2511 = vld [vmem:[#allocation5 + $0x88] sm:$0xff]
    %v2512 = vperm.slane %v45, 2
    %v2514 = vsel %vm142, %v2504, 0
    %v2517 = vsel %vm142, %v2505, 0
    %v2520 = vsel %vm142, %v2506, 0
    %v2523 = vsel %vm142, %v2507, 0
    %2525 = vmatpush.msra.mxu0 0.0
    %2526 = vmatpush.msra.mxu0 0.0
    %2527 = vmatpush.msra.mxu0 0.0
    %2528 = vmatpush.msra.mxu0 0.0
    %2529 = vmatpush.msra.mxu0 0.0
    %2530 = vmatpush.msra.mxu0 0.0
    %2531 = vmatpush.msra.mxu0 0.0
    %2532 = vmatpush.msra.mxu0 0.0
    %2533 = vmatpush.msra.mxu0 0.0
    %2534 = vmatpush.msra.mxu0 0.0
    %2535 = vmatpush.msra.mxu0 0.0
    %2536 = vmatpush.msra.mxu0 0.0
    %2537 = vmatpush.msra.mxu0 %v2511
    %2538 = vmatpush.msra.mxu0 %v2510
    %2539 = vmatpush.msra.mxu0 %v2509
    %2540 = vmatpush.msra.mxu0 %v2508
    %2541 = vmatmul.f32.gmra.mxu0 %v2514
    %v2542 = vpop.f32.mrf.mxu0
    %v2543 = vadd.f32 %v2512, %v2542
    %2544 = vmatmul.f32.gmra.mxu0 %v2517
    %v2545 = vpop.f32.mrf.mxu0
    %v2546 = vadd.f32 %v2512, %v2545
    %2547 = vmatmul.f32.gmra.mxu0 %v2520
    %v2548 = vpop.f32.mrf.mxu0
    %v2549 = vadd.f32 %v2512, %v2548
    %2550 = vmatmul.f32.gmra.mxu0 %v2523
    %v2551 = vpop.f32.mrf.mxu0
    %v2552 = vadd.f32 %v2512, %v2551
    %2553 = vdwg.mxu0
    %v2554 = vmax.f32 %v2543, 0.0
    %v2555 = vmax.f32 %v2546, 0.0
    %v2556 = vmax.f32 %v2549, 0.0
    %v2557 = vmax.f32 %v2552, 0.0
    %v2558 = vld [vmem:[#allocation5 + $0x90] sm:$0xff]
    %v2559 = vld [vmem:[#allocation5 + $0x98] sm:$0xff]
    %v2560 = vld [vmem:[#allocation5 + $0xa0] sm:$0xff]
    %v2561 = vld [vmem:[#allocation5 + $0xa8] sm:$0xff]
    %v2562 = vld [vmem:[#allocation5 + $0xb0] sm:$0xff]
    %v2563 = vld [vmem:[#allocation5 + $0xb8] sm:$0xff]
    %v2564 = vld [vmem:[#allocation5 + $0xc0] sm:$0xff]
    %v2565 = vld [vmem:[#allocation5 + $0xc8] sm:$0xff]
    %vm2566 = vcmask 523264
    %v2568 = vsel %vm2566, %v2554, 0
    %v2571 = vsel %vm2566, %v2555, 0
    %v2574 = vsel %vm2566, %v2556, 0
    %v2577 = vsel %vm2566, %v2557, 0
    %2579 = vmatpush.msra.mxu0 0.0
    %2580 = vmatpush.msra.mxu0 0.0
    %2581 = vmatpush.msra.mxu0 0.0
    %2582 = vmatpush.msra.mxu0 0.0
    %2583 = vmatpush.msra.mxu0 0.0
    %2584 = vmatpush.msra.mxu0 0.0
    %2585 = vmatpush.msra.mxu0 0.0
    %2586 = vmatpush.msra.mxu0 0.0
    %2587 = vmatpush.msra.mxu0 %v2565
    %2588 = vmatpush.msra.mxu0 %v2564
    %2589 = vmatpush.msra.mxu0 %v2563
    %2590 = vmatpush.msra.mxu0 %v2562
    %2591 = vmatpush.msra.mxu0 %v2561
    %2592 = vmatpush.msra.mxu0 %v2560
    %2593 = vmatpush.msra.mxu0 %v2559
    %2594 = vmatpush.msra.mxu0 %v2558
    %2595 = vmatmul.f32.gmra.mxu0 %v2568
    %v2596 = vpop.f32.mrf.mxu0
    %v2597 = vadd.f32 0.0, %v2596
    %2598 = vmatmul.f32.gmra.mxu0 %v2571
    %v2599 = vpop.f32.mrf.mxu0
    %v2600 = vadd.f32 0.0, %v2599
    %2601 = vmatmul.f32.gmra.mxu0 %v2574
    %v2602 = vpop.f32.mrf.mxu0
    %v2603 = vadd.f32 0.0, %v2602
    %2604 = vmatmul.f32.gmra.mxu0 %v2577
    %v2605 = vpop.f32.mrf.mxu0
    %v2606 = vadd.f32 0.0, %v2605
    %2607 = vdwg.mxu0
    %v2608 = vadd.f32 %v2406, %v2597
    %v2609 = vadd.f32 %v2407, %v2600
    %v2610 = vadd.f32 %v2408, %v2603
    %v2611 = vadd.f32 %v2409, %v2606
    %v2612 = vperm.slane %v45, 4
    %v2613 = vadd.f32 %v2608, %v2612
    %v2614 = vadd.f32 %v2609, %v2612
    %v2615 = vadd.f32 %v2610, %v2612
    %v2616 = vadd.f32 %v2611, %v2612
    %v2617 = vsel %vm142, %v2613, 0.0
    %2618 = vadd.xlane.f32.xlu0 %v2617
    %v2619 = vpop.xlane.xlu0 %2618
    %v2620 = vsel %vm142, %v2614, 0.0
    %2621 = vadd.xlane.f32.xlu0 %v2620
    %v2622 = vpop.xlane.xlu0 %2621
    %v2623 = vsel %vm142, %v2615, 0.0
    %2624 = vadd.xlane.f32.xlu0 %v2623
    %v2625 = vpop.xlane.xlu0 %2624
    %v2626 = vsel %vm142, %v2616, 0.0
    %2627 = vadd.xlane.f32.xlu0 %v2626
    %v2628 = vpop.xlane.xlu0 %2627
    %v2629 = vmul.f32 %v2619, %v243
    %v2630 = vmul.f32 %v2622, %v243
    %v2631 = vmul.f32 %v2625, %v243
    %v2632 = vmul.f32 %v2628, %v243
    %v2633 = vsub.f32 %v2613, %v2629
    %v2634 = vsub.f32 %v2614, %v2630
    %v2635 = vsub.f32 %v2615, %v2631
    %v2636 = vsub.f32 %v2616, %v2632
    %v2637 = vmul.f32 %v2633, %v2633
    %v2638 = vmul.f32 %v2634, %v2634
    %v2639 = vmul.f32 %v2635, %v2635
    %v2640 = vmul.f32 %v2636, %v2636
    %v2641 = vsel %vm142, %v2637, 0.0
    %2642 = vadd.xlane.f32.xlu0 %v2641
    %v2643 = vpop.xlane.xlu0 %2642
    %v2644 = vsel %vm142, %v2638, 0.0
    %2645 = vadd.xlane.f32.xlu0 %v2644
    %v2646 = vpop.xlane.xlu0 %2645
    %v2647 = vsel %vm142, %v2639, 0.0
    %2648 = vadd.xlane.f32.xlu0 %v2647
    %v2649 = vpop.xlane.xlu0 %2648
    %v2650 = vsel %vm142, %v2640, 0.0
    %2651 = vadd.xlane.f32.xlu0 %v2650
    %v2652 = vpop.xlane.xlu0 %2651
    %v2653 = vmul.f32 %v2643, %v243
    %v2654 = vmul.f32 %v2646, %v243
    %v2655 = vmul.f32 %v2649, %v243
    %v2656 = vmul.f32 %v2652, %v243
    %v2657 = vadd.f32 %v2653, 1e-05
    %v2658 = vadd.f32 %v2654, 1e-05
    %v2659 = vadd.f32 %v2655, 1e-05
    %v2660 = vadd.f32 %v2656, 1e-05
    %v2661 = vrsqrt.pop %v2657
    %v2662 = vmul.f32 %v2661, %v2657
    %v2663 = vmul.f32 %v2662, %v2661
    %v2664 = vmul.f32 0.5, %v2663
    %v2665 = vsub.f32 1.5, %v2664
    %v2666 = vmul.f32 %v2661, %v2665
    %vm2667 = vweird.f32 %v2657
    %vm2668 = vweird.f32 %v2661
    %vm2669 = vmor %vm2667, %vm2668
    %v2670 = vsel %vm2669, %v2661, %v2666
    %v2671 = vrsqrt.pop %v2658
    %v2672 = vmul.f32 %v2671, %v2658
    %v2673 = vmul.f32 %v2672, %v2671
    %v2674 = vmul.f32 0.5, %v2673
    %v2675 = vsub.f32 1.5, %v2674
    %v2676 = vmul.f32 %v2671, %v2675
    %vm2677 = vweird.f32 %v2658
    %vm2678 = vweird.f32 %v2671
    %vm2679 = vmor %vm2677, %vm2678
    %v2680 = vsel %vm2679, %v2671, %v2676
    %v2681 = vrsqrt.pop %v2659
    %v2682 = vmul.f32 %v2681, %v2659
    %v2683 = vmul.f32 %v2682, %v2681
    %v2684 = vmul.f32 0.5, %v2683
    %v2685 = vsub.f32 1.5, %v2684
    %v2686 = vmul.f32 %v2681, %v2685
    %vm2687 = vweird.f32 %v2659
    %vm2688 = vweird.f32 %v2681
    %vm2689 = vmor %vm2687, %vm2688
    %v2690 = vsel %vm2689, %v2681, %v2686
    %v2691 = vrsqrt.pop %v2660
    %v2692 = vmul.f32 %v2691, %v2660
    %v2693 = vmul.f32 %v2692, %v2691
    %v2694 = vmul.f32 0.5, %v2693
    %v2695 = vsub.f32 1.5, %v2694
    %v2696 = vmul.f32 %v2691, %v2695
    %vm2697 = vweird.f32 %v2660
    %vm2698 = vweird.f32 %v2691
    %vm2699 = vmor %vm2697, %vm2698
    %v2700 = vsel %vm2699, %v2691, %v2696
    %v2701 = vmul.f32 %v2633, %v2670
    %v2702 = vmul.f32 %v2634, %v2680
    %v2703 = vmul.f32 %v2635, %v2690
    %v2704 = vmul.f32 %v2636, %v2700
    %v2705 = vperm.slane %v44, 3
    %v2706 = vmul.f32 %v2701, %v2705
    %v2707 = vmul.f32 %v2702, %v2705
    %v2708 = vmul.f32 %v2703, %v2705
    %v2709 = vmul.f32 %v2704, %v2705
    %v2710 = vperm.slane %v44, 5
    %v2711 = vadd.f32 %v2706, %v2710
    %v2712 = vadd.f32 %v2707, %v2710
    %v2713 = vadd.f32 %v2708, %v2710
    %v2714 = vadd.f32 %v2709, %v2710
    %v2715 = vld [vmem:[#allocation5 + $0xd0] sm:$0xff]
    %v2716 = vld [vmem:[#allocation5 + $0xd8] sm:$0xff]
    %v2717 = vld [vmem:[#allocation5 + $0xe0] sm:$0xff]
    %v2718 = vld [vmem:[#allocation5 + $0xe8] sm:$0xff]
    %v2720 = vsel %vm142, %v2711, 0
    %v2723 = vsel %vm142, %v2712, 0
    %v2726 = vsel %vm142, %v2713, 0
    %v2729 = vsel %vm142, %v2714, 0
    %2731 = vmatpush.msra.mxu0 0.0
    %2732 = vmatpush.msra.mxu0 0.0
    %2733 = vmatpush.msra.mxu0 0.0
    %2734 = vmatpush.msra.mxu0 0.0
    %2735 = vmatpush.msra.mxu0 0.0
    %2736 = vmatpush.msra.mxu0 0.0
    %2737 = vmatpush.msra.mxu0 0.0
    %2738 = vmatpush.msra.mxu0 0.0
    %2739 = vmatpush.msra.mxu0 0.0
    %2740 = vmatpush.msra.mxu0 0.0
    %2741 = vmatpush.msra.mxu0 0.0
    %2742 = vmatpush.msra.mxu0 0.0
    %2743 = vmatpush.msra.mxu0 %v2718
    %2744 = vmatpush.msra.mxu0 %v2717
    %2745 = vmatpush.msra.mxu0 %v2716
    %2746 = vmatpush.msra.mxu0 %v2715
    %2747 = vmatmul.f32.gmra.mxu0 %v2720
    %v2748 = vpop.f32.mrf.mxu0
    %v2749 = vadd.f32 0.0, %v2748
    %2750 = vmatmul.f32.gmra.mxu0 %v2723
    %v2751 = vpop.f32.mrf.mxu0
    %v2752 = vadd.f32 0.0, %v2751
    %2753 = vmatmul.f32.gmra.mxu0 %v2726
    %v2754 = vpop.f32.mrf.mxu0
    %v2755 = vadd.f32 0.0, %v2754
    %2756 = vmatmul.f32.gmra.mxu0 %v2729
    %v2757 = vpop.f32.mrf.mxu0
    %v2758 = vadd.f32 0.0, %v2757
    %2759 = vdwg.mxu0
    %2761 = vset.pattern.permute.xlu0 0
    %2762 = vperm.xlu0 %2761, %v2749
    %v2763 = vpop.permute.xlu0 %2762
    %2766 = vset.pattern.permute.xlu0 0
    %2767 = vperm.xlu0 %2766, %v2752
    %v2768 = vpop.permute.xlu0 %2767
    %2771 = vset.pattern.permute.xlu0 0
    %2772 = vperm.xlu0 %2771, %v2755
    %v2773 = vpop.permute.xlu0 %2772
    %2776 = vset.pattern.permute.xlu0 0
    %2777 = vperm.xlu0 %2776, %v2758
    %v2778 = vpop.permute.xlu0 %2777
    %v2780 = vmul.f32 %v2763, %v217
    %v2781 = vmul.f32 %v2768, %v218
    %v2782 = vmul.f32 %v2773, %v219
    %v2783 = vmul.f32 %v2778, %v220
    %2784 = vset.pattern.permute.xlu0 1
    %2785 = vperm.xlu0 %2784, %v2749
    %v2786 = vpop.permute.xlu0 %2785
    %2788 = vset.pattern.permute.xlu0 1
    %2789 = vperm.xlu0 %2788, %v2752
    %v2790 = vpop.permute.xlu0 %2789
    %2792 = vset.pattern.permute.xlu0 1
    %2793 = vperm.xlu0 %2792, %v2755
    %v2794 = vpop.permute.xlu0 %2793
    %2796 = vset.pattern.permute.xlu0 1
    %2797 = vperm.xlu0 %2796, %v2758
    %v2798 = vpop.permute.xlu0 %2797
    %v2800 = vmul.f32 %v2786, %v217
    %v2801 = vmul.f32 %v2790, %v218
    %v2802 = vmul.f32 %v2794, %v219
    %v2803 = vmul.f32 %v2798, %v220
    %2808 = vrot.lane.b32.xlu0 %v2800, 112
    %v2809 = vpop.permute.xlu0 %2808
    %2810 = vrot.lane.b32.xlu0 %v2801, 112
    %v2811 = vpop.permute.xlu0 %2810
    %2812 = vrot.lane.b32.xlu0 %v2802, 112
    %v2813 = vpop.permute.xlu0 %2812
    %2814 = vrot.lane.b32.xlu0 %v2803, 112
    %v2815 = vpop.permute.xlu0 %2814
    %v2820 = vadd.f32 %v2780, %v2809
    %v2821 = vadd.f32 %v2781, %v2811
    %v2822 = vadd.f32 %v2782, %v2813
    %v2823 = vadd.f32 %v2783, %v2815
    %2824 = vset.pattern.permute.xlu0 2
    %2825 = vperm.xlu0 %2824, %v2749
    %v2826 = vpop.permute.xlu0 %2825
    %2828 = vset.pattern.permute.xlu0 2
    %2829 = vperm.xlu0 %2828, %v2752
    %v2830 = vpop.permute.xlu0 %2829
    %2832 = vset.pattern.permute.xlu0 2
    %2833 = vperm.xlu0 %2832, %v2755
    %v2834 = vpop.permute.xlu0 %2833
    %2836 = vset.pattern.permute.xlu0 2
    %2837 = vperm.xlu0 %2836, %v2758
    %v2838 = vpop.permute.xlu0 %2837
    %v2840 = vmul.f32 %v2826, %v217
    %v2841 = vmul.f32 %v2830, %v218
    %v2842 = vmul.f32 %v2834, %v219
    %v2843 = vmul.f32 %v2838, %v220
    %2848 = vrot.lane.b32.xlu0 %v2840, 96
    %v2849 = vpop.permute.xlu0 %2848
    %2850 = vrot.lane.b32.xlu0 %v2841, 96
    %v2851 = vpop.permute.xlu0 %2850
    %2852 = vrot.lane.b32.xlu0 %v2842, 96
    %v2853 = vpop.permute.xlu0 %2852
    %2854 = vrot.lane.b32.xlu0 %v2843, 96
    %v2855 = vpop.permute.xlu0 %2854
    %v2860 = vadd.f32 %v2820, %v2849
    %v2861 = vadd.f32 %v2821, %v2851
    %v2862 = vadd.f32 %v2822, %v2853
    %v2863 = vadd.f32 %v2823, %v2855
    %2864 = vset.pattern.permute.xlu0 3
    %2865 = vperm.xlu0 %2864, %v2749
    %v2866 = vpop.permute.xlu0 %2865
    %2868 = vset.pattern.permute.xlu0 3
    %2869 = vperm.xlu0 %2868, %v2752
    %v2870 = vpop.permute.xlu0 %2869
    %2872 = vset.pattern.permute.xlu0 3
    %2873 = vperm.xlu0 %2872, %v2755
    %v2874 = vpop.permute.xlu0 %2873
    %2876 = vset.pattern.permute.xlu0 3
    %2877 = vperm.xlu0 %2876, %v2758
    %v2878 = vpop.permute.xlu0 %2877
    %v2880 = vmul.f32 %v2866, %v217
    %v2881 = vmul.f32 %v2870, %v218
    %v2882 = vmul.f32 %v2874, %v219
    %v2883 = vmul.f32 %v2878, %v220
    %2888 = vrot.lane.b32.xlu0 %v2880, 80
    %v2889 = vpop.permute.xlu0 %2888
    %2890 = vrot.lane.b32.xlu0 %v2881, 80
    %v2891 = vpop.permute.xlu0 %2890
    %2892 = vrot.lane.b32.xlu0 %v2882, 80
    %v2893 = vpop.permute.xlu0 %2892
    %2894 = vrot.lane.b32.xlu0 %v2883, 80
    %v2895 = vpop.permute.xlu0 %2894
    %v2900 = vadd.f32 %v2860, %v2889
    %v2901 = vadd.f32 %v2861, %v2891
    %v2902 = vadd.f32 %v2862, %v2893
    %v2903 = vadd.f32 %v2863, %v2895
    %2904 = vset.pattern.permute.xlu0 4
    %2905 = vperm.xlu0 %2904, %v2749
    %v2906 = vpop.permute.xlu0 %2905
    %2908 = vset.pattern.permute.xlu0 4
    %2909 = vperm.xlu0 %2908, %v2752
    %v2910 = vpop.permute.xlu0 %2909
    %2912 = vset.pattern.permute.xlu0 4
    %2913 = vperm.xlu0 %2912, %v2755
    %v2914 = vpop.permute.xlu0 %2913
    %2916 = vset.pattern.permute.xlu0 4
    %2917 = vperm.xlu0 %2916, %v2758
    %v2918 = vpop.permute.xlu0 %2917
    %v2920 = vmul.f32 %v2906, %v217
    %v2921 = vmul.f32 %v2910, %v218
    %v2922 = vmul.f32 %v2914, %v219
    %v2923 = vmul.f32 %v2918, %v220
    %2928 = vrot.lane.b32.xlu0 %v2920, 64
    %v2929 = vpop.permute.xlu0 %2928
    %2930 = vrot.lane.b32.xlu0 %v2921, 64
    %v2931 = vpop.permute.xlu0 %2930
    %2932 = vrot.lane.b32.xlu0 %v2922, 64
    %v2933 = vpop.permute.xlu0 %2932
    %2934 = vrot.lane.b32.xlu0 %v2923, 64
    %v2935 = vpop.permute.xlu0 %2934
    %v2940 = vadd.f32 %v2900, %v2929
    %v2941 = vadd.f32 %v2901, %v2931
    %v2942 = vadd.f32 %v2902, %v2933
    %v2943 = vadd.f32 %v2903, %v2935
    %2944 = vset.pattern.permute.xlu0 5
    %2945 = vperm.xlu0 %2944, %v2749
    %v2946 = vpop.permute.xlu0 %2945
    %2948 = vset.pattern.permute.xlu0 5
    %2949 = vperm.xlu0 %2948, %v2752
    %v2950 = vpop.permute.xlu0 %2949
    %2952 = vset.pattern.permute.xlu0 5
    %2953 = vperm.xlu0 %2952, %v2755
    %v2954 = vpop.permute.xlu0 %2953
    %2956 = vset.pattern.permute.xlu0 5
    %2957 = vperm.xlu0 %2956, %v2758
    %v2958 = vpop.permute.xlu0 %2957
    %v2960 = vmul.f32 %v2946, %v217
    %v2961 = vmul.f32 %v2950, %v218
    %v2962 = vmul.f32 %v2954, %v219
    %v2963 = vmul.f32 %v2958, %v220
    %2968 = vrot.lane.b32.xlu0 %v2960, 48
    %v2969 = vpop.permute.xlu0 %2968
    %2970 = vrot.lane.b32.xlu0 %v2961, 48
    %v2971 = vpop.permute.xlu0 %2970
    %2972 = vrot.lane.b32.xlu0 %v2962, 48
    %v2973 = vpop.permute.xlu0 %2972
    %2974 = vrot.lane.b32.xlu0 %v2963, 48
    %v2975 = vpop.permute.xlu0 %2974
    %v2980 = vadd.f32 %v2940, %v2969
    %v2981 = vadd.f32 %v2941, %v2971
    %v2982 = vadd.f32 %v2942, %v2973
    %v2983 = vadd.f32 %v2943, %v2975
    %2984 = vset.pattern.permute.xlu0 6
    %2985 = vperm.xlu0 %2984, %v2749
    %v2986 = vpop.permute.xlu0 %2985
    %2988 = vset.pattern.permute.xlu0 6
    %2989 = vperm.xlu0 %2988, %v2752
    %v2990 = vpop.permute.xlu0 %2989
    %2992 = vset.pattern.permute.xlu0 6
    %2993 = vperm.xlu0 %2992, %v2755
    %v2994 = vpop.permute.xlu0 %2993
    %2996 = vset.pattern.permute.xlu0 6
    %2997 = vperm.xlu0 %2996, %v2758
    %v2998 = vpop.permute.xlu0 %2997
    %v3000 = vmul.f32 %v2986, %v217
    %v3001 = vmul.f32 %v2990, %v218
    %v3002 = vmul.f32 %v2994, %v219
    %v3003 = vmul.f32 %v2998, %v220
    %3008 = vrot.lane.b32.xlu0 %v3000, 32
    %v3009 = vpop.permute.xlu0 %3008
    %3010 = vrot.lane.b32.xlu0 %v3001, 32
    %v3011 = vpop.permute.xlu0 %3010
    %3012 = vrot.lane.b32.xlu0 %v3002, 32
    %v3013 = vpop.permute.xlu0 %3012
    %3014 = vrot.lane.b32.xlu0 %v3003, 32
    %v3015 = vpop.permute.xlu0 %3014
    %v3020 = vadd.f32 %v2980, %v3009
    %v3021 = vadd.f32 %v2981, %v3011
    %v3022 = vadd.f32 %v2982, %v3013
    %v3023 = vadd.f32 %v2983, %v3015
    %3024 = vset.pattern.permute.xlu0 7
    %3025 = vperm.xlu0 %3024, %v2749
    %v3026 = vpop.permute.xlu0 %3025
    %3028 = vset.pattern.permute.xlu0 7
    %3029 = vperm.xlu0 %3028, %v2752
    %v3030 = vpop.permute.xlu0 %3029
    %3032 = vset.pattern.permute.xlu0 7
    %3033 = vperm.xlu0 %3032, %v2755
    %v3034 = vpop.permute.xlu0 %3033
    %3036 = vset.pattern.permute.xlu0 7
    %3037 = vperm.xlu0 %3036, %v2758
    %v3038 = vpop.permute.xlu0 %3037
    %v3040 = vmul.f32 %v3026, %v217
    %v3041 = vmul.f32 %v3030, %v218
    %v3042 = vmul.f32 %v3034, %v219
    %v3043 = vmul.f32 %v3038, %v220
    %3048 = vrot.lane.b32.xlu0 %v3040, 16
    %v3049 = vpop.permute.xlu0 %3048
    %3050 = vrot.lane.b32.xlu0 %v3041, 16
    %v3051 = vpop.permute.xlu0 %3050
    %3052 = vrot.lane.b32.xlu0 %v3042, 16
    %v3053 = vpop.permute.xlu0 %3052
    %3054 = vrot.lane.b32.xlu0 %v3043, 16
    %v3055 = vpop.permute.xlu0 %3054
    %v3060 = vadd.f32 %v3020, %v3049
    %v3061 = vadd.f32 %v3021, %v3051
    %v3062 = vadd.f32 %v3022, %v3053
    %v3063 = vadd.f32 %v3023, %v3055
    %3068 = vrot.lane.b32.xlu0 %v3060, 16
    %v3069 = vpop.permute.xlu0 %3068
    %3070 = vrot.lane.b32.xlu0 %v3061, 16
    %v3071 = vpop.permute.xlu0 %3070
    %3072 = vrot.lane.b32.xlu0 %v3062, 16
    %v3073 = vpop.permute.xlu0 %3072
    %3074 = vrot.lane.b32.xlu0 %v3063, 16
    %v3075 = vpop.permute.xlu0 %3074
    %v3080 = vsel %vm78, %v3060, %v3069
    %v3081 = vsel %vm78, %v3061, %v3071
    %v3082 = vsel %vm78, %v3062, %v3073
    %v3083 = vsel %vm78, %v3063, %v3075
    %3084 = vrot.lane.b32.xlu0 %v2749, 96
    %v3085 = vpop.permute.xlu0 %3084
    %3086 = vrot.lane.b32.xlu0 %v2752, 96
    %v3087 = vpop.permute.xlu0 %3086
    %3088 = vrot.lane.b32.xlu0 %v2755, 96
    %v3089 = vpop.permute.xlu0 %3088
    %3090 = vrot.lane.b32.xlu0 %v2758, 96
    %v3091 = vpop.permute.xlu0 %3090
    %v3092 = vsel %vm707, %v2749, 0
    %v3094 = vsel %vm707, %v2752, 0
    %v3096 = vsel %vm707, %v2755, 0
    %v3098 = vsel %vm707, %v2758, 0
    %v3100 = vsel %vm707, %v3085, 0
    %v3102 = vsel %vm707, %v3087, 0
    %v3104 = vsel %vm707, %v3089, 0
    %v3106 = vsel %vm707, %v3091, 0
    %3108 = vmatpush.xpose.msra.mxu0 0.0
    %3109 = vmatpush.xpose.msra.mxu0 0.0
    %3110 = vmatpush.xpose.msra.mxu0 0.0
    %3111 = vmatpush.xpose.msra.mxu0 0.0
    %3112 = vmatpush.xpose.msra.mxu0 0.0
    %3113 = vmatpush.xpose.msra.mxu0 0.0
    %3114 = vmatpush.xpose.msra.mxu0 0.0
    %3115 = vmatpush.xpose.msra.mxu0 0.0
    %3116 = vmatpush.xpose.msra.mxu0 0.0
    %3117 = vmatpush.xpose.msra.mxu0 0.0
    %3118 = vmatpush.xpose.msra.mxu0 0.0
    %3119 = vmatpush.xpose.msra.mxu0 0.0
    %3120 = vmatpush.xpose.msra.mxu0 %v3106
    %3121 = vmatpush.xpose.msra.mxu0 %v3104
    %3122 = vmatpush.xpose.msra.mxu0 %v3102
    %3123 = vmatpush.xpose.msra.mxu0 %v3100
    %3124 = vmatmul.f32.gmra.mxu0 %v3092
    %v3125 = vpop.f32.mrf.mxu0
    %v3126 = vadd.f32 %v3080, %v3125
    %3127 = vmatmul.f32.gmra.mxu0 %v3094
    %v3128 = vpop.f32.mrf.mxu0
    %v3129 = vadd.f32 %v3081, %v3128
    %3130 = vmatmul.f32.gmra.mxu0 %v3096
    %v3131 = vpop.f32.mrf.mxu0
    %v3132 = vadd.f32 %v3082, %v3131
    %3133 = vmatmul.f32.gmra.mxu0 %v3098
    %v3134 = vpop.f32.mrf.mxu0
    %v3135 = vadd.f32 %v3083, %v3134
    %3136 = vdwg.mxu0
    %v3137 = vadd.f32 %v3126, %v221
    %v3138 = vadd.f32 %v3129, %v222
    %v3139 = vadd.f32 %v3132, %v223
    %v3140 = vadd.f32 %v3135, %v224
    %v3141 = vsel %vm142, %v3137, -inf
    %3142 = vmax.xlane.f32.xlu0 %v3141
    %v3143 = vpop.xlane.xlu0 %3142
    %v3144 = vsel %vm142, %v3138, -inf
    %3145 = vmax.xlane.f32.xlu0 %v3144
    %v3146 = vpop.xlane.xlu0 %3145
    %v3147 = vsel %vm142, %v3139, -inf
    %3148 = vmax.xlane.f32.xlu0 %v3147
    %v3149 = vpop.xlane.xlu0 %3148
    %v3150 = vsel %vm142, %v3140, -inf
    %3151 = vmax.xlane.f32.xlu0 %v3150
    %v3152 = vpop.xlane.xlu0 %3151
    %v3153 = vsub.f32 %v3137, %v3143
    %v3154 = vsub.f32 %v3138, %v3146
    %v3155 = vsub.f32 %v3139, %v3149
    %v3156 = vsub.f32 %v3140, %v3152
    %v3157 = vmul.f32 %v3153, 1.442695
    %v3158 = vpow.pop %v3157
    %v3159 = vmul.f32 %v3154, 1.442695
    %v3160 = vpow.pop %v3159
    %v3161 = vmul.f32 %v3155, 1.442695
    %v3162 = vpow.pop %v3161
    %v3163 = vmul.f32 %v3156, 1.442695
    %v3164 = vpow.pop %v3163
    %v3165 = vsel %vm142, %v3158, 0.0
    %3166 = vadd.xlane.f32.xlu0 %v3165
    %v3167 = vpop.xlane.xlu0 %3166
    %v3168 = vsel %vm142, %v3160, 0.0
    %3169 = vadd.xlane.f32.xlu0 %v3168
    %v3170 = vpop.xlane.xlu0 %3169
    %v3171 = vsel %vm142, %v3162, 0.0
    %3172 = vadd.xlane.f32.xlu0 %v3171
    %v3173 = vpop.xlane.xlu0 %3172
    %v3174 = vsel %vm142, %v3164, 0.0
    %3175 = vadd.xlane.f32.xlu0 %v3174
    %v3176 = vpop.xlane.xlu0 %3175
    %v3177 = vrcp.pop %v3167
    %v3178 = vrcp.pop %v3170
    %v3179 = vrcp.pop %v3173
    %v3180 = vrcp.pop %v3176
    %v3181 = vmul.f32 %v3158, %v3177
    %v3182 = vmul.f32 %v3160, %v3178
    %v3183 = vmul.f32 %v3162, %v3179
    %v3184 = vmul.f32 %v3164, %v3180
    %3185 = vrot.lane.b32.xlu0 %v2749, 64
    %v3186 = vpop.permute.xlu0 %3185
    %3187 = vrot.lane.b32.xlu0 %v2752, 64
    %v3188 = vpop.permute.xlu0 %3187
    %3189 = vrot.lane.b32.xlu0 %v2755, 64
    %v3190 = vpop.permute.xlu0 %3189
    %3191 = vrot.lane.b32.xlu0 %v2758, 64
    %v3192 = vpop.permute.xlu0 %3191
    %v3198 = vsel %vm142, %v3181, 0
    %v3201 = vsel %vm142, %v3182, 0
    %v3204 = vsel %vm142, %v3183, 0
    %v3207 = vsel %vm142, %v3184, 0
    %3209 = vmatpush.msra.mxu0 0.0
    %3210 = vmatpush.msra.mxu0 0.0
    %3211 = vmatpush.msra.mxu0 0.0
    %3212 = vmatpush.msra.mxu0 0.0
    %3213 = vmatpush.msra.mxu0 0.0
    %3214 = vmatpush.msra.mxu0 0.0
    %3215 = vmatpush.msra.mxu0 0.0
    %3216 = vmatpush.msra.mxu0 0.0
    %3217 = vmatpush.msra.mxu0 0.0
    %3218 = vmatpush.msra.mxu0 0.0
    %3219 = vmatpush.msra.mxu0 0.0
    %3220 = vmatpush.msra.mxu0 0.0
    %3221 = vmatpush.msra.mxu0 %v3192
    %3222 = vmatpush.msra.mxu0 %v3190
    %3223 = vmatpush.msra.mxu0 %v3188
    %3224 = vmatpush.msra.mxu0 %v3186
    %3225 = vmatmul.f32.gmra.mxu0 %v3198
    %v3226 = vpop.f32.mrf.mxu0
    %v3227 = vadd.f32 0.0, %v3226
    %3228 = vmatmul.f32.gmra.mxu0 %v3201
    %v3229 = vpop.f32.mrf.mxu0
    %v3230 = vadd.f32 0.0, %v3229
    %3231 = vmatmul.f32.gmra.mxu0 %v3204
    %v3232 = vpop.f32.mrf.mxu0
    %v3233 = vadd.f32 0.0, %v3232
    %3234 = vmatmul.f32.gmra.mxu0 %v3207
    %v3235 = vpop.f32.mrf.mxu0
    %v3236 = vadd.f32 0.0, %v3235
    %3237 = vdwg.mxu0
    %3238 = vset.pattern.permute.xlu0 8
    %3239 = vperm.xlu0 %3238, %v2749
    %v3240 = vpop.permute.xlu0 %3239
    %3242 = vset.pattern.permute.xlu0 8
    %3243 = vperm.xlu0 %3242, %v2752
    %v3244 = vpop.permute.xlu0 %3243
    %3246 = vset.pattern.permute.xlu0 8
    %3247 = vperm.xlu0 %3246, %v2755
    %v3248 = vpop.permute.xlu0 %3247
    %3250 = vset.pattern.permute.xlu0 8
    %3251 = vperm.xlu0 %3250, %v2758
    %v3252 = vpop.permute.xlu0 %3251
    %v3254 = vmul.f32 %v3240, %v217
    %v3255 = vmul.f32 %v3244, %v218
    %v3256 = vmul.f32 %v3248, %v219
    %v3257 = vmul.f32 %v3252, %v220
    %3258 = vset.pattern.permute.xlu0 9
    %3259 = vperm.xlu0 %3258, %v2749
    %v3260 = vpop.permute.xlu0 %3259
    %3262 = vset.pattern.permute.xlu0 9
    %3263 = vperm.xlu0 %3262, %v2752
    %v3264 = vpop.permute.xlu0 %3263
    %3266 = vset.pattern.permute.xlu0 9
    %3267 = vperm.xlu0 %3266, %v2755
    %v3268 = vpop.permute.xlu0 %3267
    %3270 = vset.pattern.permute.xlu0 9
    %3271 = vperm.xlu0 %3270, %v2758
    %v3272 = vpop.permute.xlu0 %3271
    %v3274 = vmul.f32 %v3260, %v217
    %v3275 = vmul.f32 %v3264, %v218
    %v3276 = vmul.f32 %v3268, %v219
    %v3277 = vmul.f32 %v3272, %v220
    %3282 = vrot.lane.b32.xlu0 %v3274, 112
    %v3283 = vpop.permute.xlu0 %3282
    %3284 = vrot.lane.b32.xlu0 %v3275, 112
    %v3285 = vpop.permute.xlu0 %3284
    %3286 = vrot.lane.b32.xlu0 %v3276, 112
    %v3287 = vpop.permute.xlu0 %3286
    %3288 = vrot.lane.b32.xlu0 %v3277, 112
    %v3289 = vpop.permute.xlu0 %3288
    %v3294 = vadd.f32 %v3254, %v3283
    %v3295 = vadd.f32 %v3255, %v3285
    %v3296 = vadd.f32 %v3256, %v3287
    %v3297 = vadd.f32 %v3257, %v3289
    %3298 = vset.pattern.permute.xlu0 10
    %3299 = vperm.xlu0 %3298, %v2749
    %v3300 = vpop.permute.xlu0 %3299
    %3302 = vset.pattern.permute.xlu0 10
    %3303 = vperm.xlu0 %3302, %v2752
    %v3304 = vpop.permute.xlu0 %3303
    %3306 = vset.pattern.permute.xlu0 10
    %3307 = vperm.xlu0 %3306, %v2755
    %v3308 = vpop.permute.xlu0 %3307
    %3310 = vset.pattern.permute.xlu0 10
    %3311 = vperm.xlu0 %3310, %v2758
    %v3312 = vpop.permute.xlu0 %3311
    %v3314 = vmul.f32 %v3300, %v217
    %v3315 = vmul.f32 %v3304, %v218
    %v3316 = vmul.f32 %v3308, %v219
    %v3317 = vmul.f32 %v3312, %v220
    %3322 = vrot.lane.b32.xlu0 %v3314, 96
    %v3323 = vpop.permute.xlu0 %3322
    %3324 = vrot.lane.b32.xlu0 %v3315, 96
    %v3325 = vpop.permute.xlu0 %3324
    %3326 = vrot.lane.b32.xlu0 %v3316, 96
    %v3327 = vpop.permute.xlu0 %3326
    %3328 = vrot.lane.b32.xlu0 %v3317, 96
    %v3329 = vpop.permute.xlu0 %3328
    %v3334 = vadd.f32 %v3294, %v3323
    %v3335 = vadd.f32 %v3295, %v3325
    %v3336 = vadd.f32 %v3296, %v3327
    %v3337 = vadd.f32 %v3297, %v3329
    %3338 = vset.pattern.permute.xlu0 11
    %3339 = vperm.xlu0 %3338, %v2749
    %v3340 = vpop.permute.xlu0 %3339
    %3342 = vset.pattern.permute.xlu0 11
    %3343 = vperm.xlu0 %3342, %v2752
    %v3344 = vpop.permute.xlu0 %3343
    %3346 = vset.pattern.permute.xlu0 11
    %3347 = vperm.xlu0 %3346, %v2755
    %v3348 = vpop.permute.xlu0 %3347
    %3350 = vset.pattern.permute.xlu0 11
    %3351 = vperm.xlu0 %3350, %v2758
    %v3352 = vpop.permute.xlu0 %3351
    %v3354 = vmul.f32 %v3340, %v217
    %v3355 = vmul.f32 %v3344, %v218
    %v3356 = vmul.f32 %v3348, %v219
    %v3357 = vmul.f32 %v3352, %v220
    %3362 = vrot.lane.b32.xlu0 %v3354, 80
    %v3363 = vpop.permute.xlu0 %3362
    %3364 = vrot.lane.b32.xlu0 %v3355, 80
    %v3365 = vpop.permute.xlu0 %3364
    %3366 = vrot.lane.b32.xlu0 %v3356, 80
    %v3367 = vpop.permute.xlu0 %3366
    %3368 = vrot.lane.b32.xlu0 %v3357, 80
    %v3369 = vpop.permute.xlu0 %3368
    %v3374 = vadd.f32 %v3334, %v3363
    %v3375 = vadd.f32 %v3335, %v3365
    %v3376 = vadd.f32 %v3336, %v3367
    %v3377 = vadd.f32 %v3337, %v3369
    %3378 = vset.pattern.permute.xlu0 12
    %3379 = vperm.xlu0 %3378, %v2749
    %v3380 = vpop.permute.xlu0 %3379
    %3382 = vset.pattern.permute.xlu0 12
    %3383 = vperm.xlu0 %3382, %v2752
    %v3384 = vpop.permute.xlu0 %3383
    %3386 = vset.pattern.permute.xlu0 12
    %3387 = vperm.xlu0 %3386, %v2755
    %v3388 = vpop.permute.xlu0 %3387
    %3390 = vset.pattern.permute.xlu0 12
    %3391 = vperm.xlu0 %3390, %v2758
    %v3392 = vpop.permute.xlu0 %3391
    %v3394 = vmul.f32 %v3380, %v217
    %v3395 = vmul.f32 %v3384, %v218
    %v3396 = vmul.f32 %v3388, %v219
    %v3397 = vmul.f32 %v3392, %v220
    %3402 = vrot.lane.b32.xlu0 %v3394, 64
    %v3403 = vpop.permute.xlu0 %3402
    %3404 = vrot.lane.b32.xlu0 %v3395, 64
    %v3405 = vpop.permute.xlu0 %3404
    %3406 = vrot.lane.b32.xlu0 %v3396, 64
    %v3407 = vpop.permute.xlu0 %3406
    %3408 = vrot.lane.b32.xlu0 %v3397, 64
    %v3409 = vpop.permute.xlu0 %3408
    %v3414 = vadd.f32 %v3374, %v3403
    %v3415 = vadd.f32 %v3375, %v3405
    %v3416 = vadd.f32 %v3376, %v3407
    %v3417 = vadd.f32 %v3377, %v3409
    %3418 = vset.pattern.permute.xlu0 13
    %3419 = vperm.xlu0 %3418, %v2749
    %v3420 = vpop.permute.xlu0 %3419
    %3422 = vset.pattern.permute.xlu0 13
    %3423 = vperm.xlu0 %3422, %v2752
    %v3424 = vpop.permute.xlu0 %3423
    %3426 = vset.pattern.permute.xlu0 13
    %3427 = vperm.xlu0 %3426, %v2755
    %v3428 = vpop.permute.xlu0 %3427
    %3430 = vset.pattern.permute.xlu0 13
    %3431 = vperm.xlu0 %3430, %v2758
    %v3432 = vpop.permute.xlu0 %3431
    %v3434 = vmul.f32 %v3420, %v217
    %v3435 = vmul.f32 %v3424, %v218
    %v3436 = vmul.f32 %v3428, %v219
    %v3437 = vmul.f32 %v3432, %v220
    %3442 = vrot.lane.b32.xlu0 %v3434, 48
    %v3443 = vpop.permute.xlu0 %3442
    %3444 = vrot.lane.b32.xlu0 %v3435, 48
    %v3445 = vpop.permute.xlu0 %3444
    %3446 = vrot.lane.b32.xlu0 %v3436, 48
    %v3447 = vpop.permute.xlu0 %3446
    %3448 = vrot.lane.b32.xlu0 %v3437, 48
    %v3449 = vpop.permute.xlu0 %3448
    %v3454 = vadd.f32 %v3414, %v3443
    %v3455 = vadd.f32 %v3415, %v3445
    %v3456 = vadd.f32 %v3416, %v3447
    %v3457 = vadd.f32 %v3417, %v3449
    %3458 = vset.pattern.permute.xlu0 14
    %3459 = vperm.xlu0 %3458, %v2749
    %v3460 = vpop.permute.xlu0 %3459
    %3462 = vset.pattern.permute.xlu0 14
    %3463 = vperm.xlu0 %3462, %v2752
    %v3464 = vpop.permute.xlu0 %3463
    %3466 = vset.pattern.permute.xlu0 14
    %3467 = vperm.xlu0 %3466, %v2755
    %v3468 = vpop.permute.xlu0 %3467
    %3470 = vset.pattern.permute.xlu0 14
    %3471 = vperm.xlu0 %3470, %v2758
    %v3472 = vpop.permute.xlu0 %3471
    %v3474 = vmul.f32 %v3460, %v217
    %v3475 = vmul.f32 %v3464, %v218
    %v3476 = vmul.f32 %v3468, %v219
    %v3477 = vmul.f32 %v3472, %v220
    %3482 = vrot.lane.b32.xlu0 %v3474, 32
    %v3483 = vpop.permute.xlu0 %3482
    %3484 = vrot.lane.b32.xlu0 %v3475, 32
    %v3485 = vpop.permute.xlu0 %3484
    %3486 = vrot.lane.b32.xlu0 %v3476, 32
    %v3487 = vpop.permute.xlu0 %3486
    %3488 = vrot.lane.b32.xlu0 %v3477, 32
    %v3489 = vpop.permute.xlu0 %3488
    %v3494 = vadd.f32 %v3454, %v3483
    %v3495 = vadd.f32 %v3455, %v3485
    %v3496 = vadd.f32 %v3456, %v3487
    %v3497 = vadd.f32 %v3457, %v3489
    %3498 = vset.pattern.permute.xlu0 15
    %3499 = vperm.xlu0 %3498, %v2749
    %v3500 = vpop.permute.xlu0 %3499
    %3502 = vset.pattern.permute.xlu0 15
    %3503 = vperm.xlu0 %3502, %v2752
    %v3504 = vpop.permute.xlu0 %3503
    %3506 = vset.pattern.permute.xlu0 15
    %3507 = vperm.xlu0 %3506, %v2755
    %v3508 = vpop.permute.xlu0 %3507
    %3510 = vset.pattern.permute.xlu0 15
    %3511 = vperm.xlu0 %3510, %v2758
    %v3512 = vpop.permute.xlu0 %3511
    %v3514 = vmul.f32 %v3500, %v217
    %v3515 = vmul.f32 %v3504, %v218
    %v3516 = vmul.f32 %v3508, %v219
    %v3517 = vmul.f32 %v3512, %v220
    %3522 = vrot.lane.b32.xlu0 %v3514, 16
    %v3523 = vpop.permute.xlu0 %3522
    %3524 = vrot.lane.b32.xlu0 %v3515, 16
    %v3525 = vpop.permute.xlu0 %3524
    %3526 = vrot.lane.b32.xlu0 %v3516, 16
    %v3527 = vpop.permute.xlu0 %3526
    %3528 = vrot.lane.b32.xlu0 %v3517, 16
    %v3529 = vpop.permute.xlu0 %3528
    %v3534 = vadd.f32 %v3494, %v3523
    %v3535 = vadd.f32 %v3495, %v3525
    %v3536 = vadd.f32 %v3496, %v3527
    %v3537 = vadd.f32 %v3497, %v3529
    %3542 = vrot.lane.b32.xlu0 %v3534, 16
    %v3543 = vpop.permute.xlu0 %3542
    %3544 = vrot.lane.b32.xlu0 %v3535, 16
    %v3545 = vpop.permute.xlu0 %3544
    %3546 = vrot.lane.b32.xlu0 %v3536, 16
    %v3547 = vpop.permute.xlu0 %3546
    %3548 = vrot.lane.b32.xlu0 %v3537, 16
    %v3549 = vpop.permute.xlu0 %3548
    %v3554 = vsel %vm78, %v3534, %v3543
    %v3555 = vsel %vm78, %v3535, %v3545
    %v3556 = vsel %vm78, %v3536, %v3547
    %v3557 = vsel %vm78, %v3537, %v3549
    %3558 = vrot.lane.b32.xlu0 %v2749, 120
    %v3559 = vpop.permute.xlu0 %3558
    %3560 = vrot.lane.b32.xlu0 %v2752, 120
    %v3561 = vpop.permute.xlu0 %3560
    %3562 = vrot.lane.b32.xlu0 %v2755, 120
    %v3563 = vpop.permute.xlu0 %3562
    %3564 = vrot.lane.b32.xlu0 %v2758, 120
    %v3565 = vpop.permute.xlu0 %3564
    %3566 = vrot.lane.b32.xlu0 %v2749, 88
    %v3567 = vpop.permute.xlu0 %3566
    %3568 = vrot.lane.b32.xlu0 %v2752, 88
    %v3569 = vpop.permute.xlu0 %3568
    %3570 = vrot.lane.b32.xlu0 %v2755, 88
    %v3571 = vpop.permute.xlu0 %3570
    %3572 = vrot.lane.b32.xlu0 %v2758, 88
    %v3573 = vpop.permute.xlu0 %3572
    %v3574 = vsel %vm707, %v3559, 0
    %v3576 = vsel %vm707, %v3561, 0
    %v3578 = vsel %vm707, %v3563, 0
    %v3580 = vsel %vm707, %v3565, 0
    %v3582 = vsel %vm707, %v3567, 0
    %v3584 = vsel %vm707, %v3569, 0
    %v3586 = vsel %vm707, %v3571, 0
    %v3588 = vsel %vm707, %v3573, 0
    %3590 = vmatpush.xpose.msra.mxu0 0.0
    %3591 = vmatpush.xpose.msra.mxu0 0.0
    %3592 = vmatpush.xpose.msra.mxu0 0.0
    %3593 = vmatpush.xpose.msra.mxu0 0.0
    %3594 = vmatpush.xpose.msra.mxu0 0.0
    %3595 = vmatpush.xpose.msra.mxu0 0.0
    %3596 = vmatpush.xpose.msra.mxu0 0.0
    %3597 = vmatpush.xpose.msra.mxu0 0.0
    %3598 = vmatpush.xpose.msra.mxu0 0.0
    %3599 = vmatpush.xpose.msra.mxu0 0.0
    %3600 = vmatpush.xpose.msra.mxu0 0.0
    %3601 = vmatpush.xpose.msra.mxu0 0.0
    %3602 = vmatpush.xpose.msra.mxu0 %v3588
    %3603 = vmatpush.xpose.msra.mxu0 %v3586
    %3604 = vmatpush.xpose.msra.mxu0 %v3584
    %3605 = vmatpush.xpose.msra.mxu0 %v3582
    %3606 = vmatmul.f32.gmra.mxu0 %v3574
    %v3607 = vpop.f32.mrf.mxu0
    %v3608 = vadd.f32 %v3554, %v3607
    %3609 = vmatmul.f32.gmra.mxu0 %v3576
    %v3610 = vpop.f32.mrf.mxu0
    %v3611 = vadd.f32 %v3555, %v3610
    %3612 = vmatmul.f32.gmra.mxu0 %v3578
    %v3613 = vpop.f32.mrf.mxu0
    %v3614 = vadd.f32 %v3556, %v3613
    %3615 = vmatmul.f32.gmra.mxu0 %v3580
    %v3616 = vpop.f32.mrf.mxu0
    %v3617 = vadd.f32 %v3557, %v3616
    %3618 = vdwg.mxu0
    %v3619 = vadd.f32 %v3608, %v221
    %v3620 = vadd.f32 %v3611, %v222
    %v3621 = vadd.f32 %v3614, %v223
    %v3622 = vadd.f32 %v3617, %v224
    %v3623 = vsel %vm142, %v3619, -inf
    %3624 = vmax.xlane.f32.xlu0 %v3623
    %v3625 = vpop.xlane.xlu0 %3624
    %v3626 = vsel %vm142, %v3620, -inf
    %3627 = vmax.xlane.f32.xlu0 %v3626
    %v3628 = vpop.xlane.xlu0 %3627
    %v3629 = vsel %vm142, %v3621, -inf
    %3630 = vmax.xlane.f32.xlu0 %v3629
    %v3631 = vpop.xlane.xlu0 %3630
    %v3632 = vsel %vm142, %v3622, -inf
    %3633 = vmax.xlane.f32.xlu0 %v3632
    %v3634 = vpop.xlane.xlu0 %3633
    %v3635 = vsub.f32 %v3619, %v3625
    %v3636 = vsub.f32 %v3620, %v3628
    %v3637 = vsub.f32 %v3621, %v3631
    %v3638 = vsub.f32 %v3622, %v3634
    %v3639 = vmul.f32 %v3635, 1.442695
    %v3640 = vpow.pop %v3639
    %v3641 = vmul.f32 %v3636, 1.442695
    %v3642 = vpow.pop %v3641
    %v3643 = vmul.f32 %v3637, 1.442695
    %v3644 = vpow.pop %v3643
    %v3645 = vmul.f32 %v3638, 1.442695
    %v3646 = vpow.pop %v3645
    %v3647 = vsel %vm142, %v3640, 0.0
    %3648 = vadd.xlane.f32.xlu0 %v3647
    %v3649 = vpop.xlane.xlu0 %3648
    %v3650 = vsel %vm142, %v3642, 0.0
    %3651 = vadd.xlane.f32.xlu0 %v3650
    %v3652 = vpop.xlane.xlu0 %3651
    %v3653 = vsel %vm142, %v3644, 0.0
    %3654 = vadd.xlane.f32.xlu0 %v3653
    %v3655 = vpop.xlane.xlu0 %3654
    %v3656 = vsel %vm142, %v3646, 0.0
    %3657 = vadd.xlane.f32.xlu0 %v3656
    %v3658 = vpop.xlane.xlu0 %3657
    %v3659 = vrcp.pop %v3649
    %v3660 = vrcp.pop %v3652
    %v3661 = vrcp.pop %v3655
    %v3662 = vrcp.pop %v3658
    %v3663 = vmul.f32 %v3640, %v3659
    %v3664 = vmul.f32 %v3642, %v3660
    %v3665 = vmul.f32 %v3644, %v3661
    %v3666 = vmul.f32 %v3646, %v3662
    %3667 = vrot.lane.b32.xlu0 %v2749, 56
    %v3668 = vpop.permute.xlu0 %3667
    %3669 = vrot.lane.b32.xlu0 %v2752, 56
    %v3670 = vpop.permute.xlu0 %3669
    %3671 = vrot.lane.b32.xlu0 %v2755, 56
    %v3672 = vpop.permute.xlu0 %3671
    %3673 = vrot.lane.b32.xlu0 %v2758, 56
    %v3674 = vpop.permute.xlu0 %3673
    %v3680 = vsel %vm142, %v3663, 0
    %v3683 = vsel %vm142, %v3664, 0
    %v3686 = vsel %vm142, %v3665, 0
    %v3689 = vsel %vm142, %v3666, 0
    %3691 = vmatpush.msra.mxu0 0.0
    %3692 = vmatpush.msra.mxu0 0.0
    %3693 = vmatpush.msra.mxu0 0.0
    %3694 = vmatpush.msra.mxu0 0.0
    %3695 = vmatpush.msra.mxu0 0.0
    %3696 = vmatpush.msra.mxu0 0.0
    %3697 = vmatpush.msra.mxu0 0.0
    %3698 = vmatpush.msra.mxu0 0.0
    %3699 = vmatpush.msra.mxu0 0.0
    %3700 = vmatpush.msra.mxu0 0.0
    %3701 = vmatpush.msra.mxu0 0.0
    %3702 = vmatpush.msra.mxu0 0.0
    %3703 = vmatpush.msra.mxu0 %v3674
    %3704 = vmatpush.msra.mxu0 %v3672
    %3705 = vmatpush.msra.mxu0 %v3670
    %3706 = vmatpush.msra.mxu0 %v3668
    %3707 = vmatmul.f32.gmra.mxu0 %v3680
    %v3708 = vpop.f32.mrf.mxu0
    %v3709 = vadd.f32 0.0, %v3708
    %3710 = vmatmul.f32.gmra.mxu0 %v3683
    %v3711 = vpop.f32.mrf.mxu0
    %v3712 = vadd.f32 0.0, %v3711
    %3713 = vmatmul.f32.gmra.mxu0 %v3686
    %v3714 = vpop.f32.mrf.mxu0
    %v3715 = vadd.f32 0.0, %v3714
    %3716 = vmatmul.f32.gmra.mxu0 %v3689
    %v3717 = vpop.f32.mrf.mxu0
    %v3718 = vadd.f32 0.0, %v3717
    %3719 = vdwg.mxu0
    %3720 = vset.pattern.permute.xlu0 16
    %3721 = vperm.xlu0 %3720, %v2749
    %v3722 = vpop.permute.xlu0 %3721
    %3724 = vset.pattern.permute.xlu0 16
    %3725 = vperm.xlu0 %3724, %v2752
    %v3726 = vpop.permute.xlu0 %3725
    %3728 = vset.pattern.permute.xlu0 16
    %3729 = vperm.xlu0 %3728, %v2755
    %v3730 = vpop.permute.xlu0 %3729
    %3732 = vset.pattern.permute.xlu0 16
    %3733 = vperm.xlu0 %3732, %v2758
    %v3734 = vpop.permute.xlu0 %3733
    %v3736 = vmul.f32 %v3722, %v217
    %v3737 = vmul.f32 %v3726, %v218
    %v3738 = vmul.f32 %v3730, %v219
    %v3739 = vmul.f32 %v3734, %v220
    %3740 = vset.pattern.permute.xlu0 17
    %3741 = vperm.xlu0 %3740, %v2749
    %v3742 = vpop.permute.xlu0 %3741
    %3744 = vset.pattern.permute.xlu0 17
    %3745 = vperm.xlu0 %3744, %v2752
    %v3746 = vpop.permute.xlu0 %3745
    %3748 = vset.pattern.permute.xlu0 17
    %3749 = vperm.xlu0 %3748, %v2755
    %v3750 = vpop.permute.xlu0 %3749
    %3752 = vset.pattern.permute.xlu0 17
    %3753 = vperm.xlu0 %3752, %v2758
    %v3754 = vpop.permute.xlu0 %3753
    %v3756 = vmul.f32 %v3742, %v217
    %v3757 = vmul.f32 %v3746, %v218
    %v3758 = vmul.f32 %v3750, %v219
    %v3759 = vmul.f32 %v3754, %v220
    %3764 = vrot.lane.b32.xlu0 %v3756, 112
    %v3765 = vpop.permute.xlu0 %3764
    %3766 = vrot.lane.b32.xlu0 %v3757, 112
    %v3767 = vpop.permute.xlu0 %3766
    %3768 = vrot.lane.b32.xlu0 %v3758, 112
    %v3769 = vpop.permute.xlu0 %3768
    %3770 = vrot.lane.b32.xlu0 %v3759, 112
    %v3771 = vpop.permute.xlu0 %3770
    %v3776 = vadd.f32 %v3736, %v3765
    %v3777 = vadd.f32 %v3737, %v3767
    %v3778 = vadd.f32 %v3738, %v3769
    %v3779 = vadd.f32 %v3739, %v3771
    %3780 = vset.pattern.permute.xlu0 18
    %3781 = vperm.xlu0 %3780, %v2749
    %v3782 = vpop.permute.xlu0 %3781
    %3784 = vset.pattern.permute.xlu0 18
    %3785 = vperm.xlu0 %3784, %v2752
    %v3786 = vpop.permute.xlu0 %3785
    %3788 = vset.pattern.permute.xlu0 18
    %3789 = vperm.xlu0 %3788, %v2755
    %v3790 = vpop.permute.xlu0 %3789
    %3792 = vset.pattern.permute.xlu0 18
    %3793 = vperm.xlu0 %3792, %v2758
    %v3794 = vpop.permute.xlu0 %3793
    %v3796 = vmul.f32 %v3782, %v217
    %v3797 = vmul.f32 %v3786, %v218
    %v3798 = vmul.f32 %v3790, %v219
    %v3799 = vmul.f32 %v3794, %v220
    %3804 = vrot.lane.b32.xlu0 %v3796, 96
    %v3805 = vpop.permute.xlu0 %3804
    %3806 = vrot.lane.b32.xlu0 %v3797, 96
    %v3807 = vpop.permute.xlu0 %3806
    %3808 = vrot.lane.b32.xlu0 %v3798, 96
    %v3809 = vpop.permute.xlu0 %3808
    %3810 = vrot.lane.b32.xlu0 %v3799, 96
    %v3811 = vpop.permute.xlu0 %3810
    %v3816 = vadd.f32 %v3776, %v3805
    %v3817 = vadd.f32 %v3777, %v3807
    %v3818 = vadd.f32 %v3778, %v3809
    %v3819 = vadd.f32 %v3779, %v3811
    %3820 = vset.pattern.permute.xlu0 19
    %3821 = vperm.xlu0 %3820, %v2749
    %v3822 = vpop.permute.xlu0 %3821
    %3824 = vset.pattern.permute.xlu0 19
    %3825 = vperm.xlu0 %3824, %v2752
    %v3826 = vpop.permute.xlu0 %3825
    %3828 = vset.pattern.permute.xlu0 19
    %3829 = vperm.xlu0 %3828, %v2755
    %v3830 = vpop.permute.xlu0 %3829
    %3832 = vset.pattern.permute.xlu0 19
    %3833 = vperm.xlu0 %3832, %v2758
    %v3834 = vpop.permute.xlu0 %3833
    %v3836 = vmul.f32 %v3822, %v217
    %v3837 = vmul.f32 %v3826, %v218
    %v3838 = vmul.f32 %v3830, %v219
    %v3839 = vmul.f32 %v3834, %v220
    %3844 = vrot.lane.b32.xlu0 %v3836, 80
    %v3845 = vpop.permute.xlu0 %3844
    %3846 = vrot.lane.b32.xlu0 %v3837, 80
    %v3847 = vpop.permute.xlu0 %3846
    %3848 = vrot.lane.b32.xlu0 %v3838, 80
    %v3849 = vpop.permute.xlu0 %3848
    %3850 = vrot.lane.b32.xlu0 %v3839, 80
    %v3851 = vpop.permute.xlu0 %3850
    %v3856 = vadd.f32 %v3816, %v3845
    %v3857 = vadd.f32 %v3817, %v3847
    %v3858 = vadd.f32 %v3818, %v3849
    %v3859 = vadd.f32 %v3819, %v3851
    %3860 = vset.pattern.permute.xlu0 20
    %3861 = vperm.xlu0 %3860, %v2749
    %v3862 = vpop.permute.xlu0 %3861
    %3864 = vset.pattern.permute.xlu0 20
    %3865 = vperm.xlu0 %3864, %v2752
    %v3866 = vpop.permute.xlu0 %3865
    %3868 = vset.pattern.permute.xlu0 20
    %3869 = vperm.xlu0 %3868, %v2755
    %v3870 = vpop.permute.xlu0 %3869
    %3872 = vset.pattern.permute.xlu0 20
    %3873 = vperm.xlu0 %3872, %v2758
    %v3874 = vpop.permute.xlu0 %3873
    %v3876 = vmul.f32 %v3862, %v217
    %v3877 = vmul.f32 %v3866, %v218
    %v3878 = vmul.f32 %v3870, %v219
    %v3879 = vmul.f32 %v3874, %v220
    %3884 = vrot.lane.b32.xlu0 %v3876, 64
    %v3885 = vpop.permute.xlu0 %3884
    %3886 = vrot.lane.b32.xlu0 %v3877, 64
    %v3887 = vpop.permute.xlu0 %3886
    %3888 = vrot.lane.b32.xlu0 %v3878, 64
    %v3889 = vpop.permute.xlu0 %3888
    %3890 = vrot.lane.b32.xlu0 %v3879, 64
    %v3891 = vpop.permute.xlu0 %3890
    %v3896 = vadd.f32 %v3856, %v3885
    %v3897 = vadd.f32 %v3857, %v3887
    %v3898 = vadd.f32 %v3858, %v3889
    %v3899 = vadd.f32 %v3859, %v3891
    %3900 = vset.pattern.permute.xlu0 21
    %3901 = vperm.xlu0 %3900, %v2749
    %v3902 = vpop.permute.xlu0 %3901
    %3904 = vset.pattern.permute.xlu0 21
    %3905 = vperm.xlu0 %3904, %v2752
    %v3906 = vpop.permute.xlu0 %3905
    %3908 = vset.pattern.permute.xlu0 21
    %3909 = vperm.xlu0 %3908, %v2755
    %v3910 = vpop.permute.xlu0 %3909
    %3912 = vset.pattern.permute.xlu0 21
    %3913 = vperm.xlu0 %3912, %v2758
    %v3914 = vpop.permute.xlu0 %3913
    %v3916 = vmul.f32 %v3902, %v217
    %v3917 = vmul.f32 %v3906, %v218
    %v3918 = vmul.f32 %v3910, %v219
    %v3919 = vmul.f32 %v3914, %v220
    %3924 = vrot.lane.b32.xlu0 %v3916, 48
    %v3925 = vpop.permute.xlu0 %3924
    %3926 = vrot.lane.b32.xlu0 %v3917, 48
    %v3927 = vpop.permute.xlu0 %3926
    %3928 = vrot.lane.b32.xlu0 %v3918, 48
    %v3929 = vpop.permute.xlu0 %3928
    %3930 = vrot.lane.b32.xlu0 %v3919, 48
    %v3931 = vpop.permute.xlu0 %3930
    %v3936 = vadd.f32 %v3896, %v3925
    %v3937 = vadd.f32 %v3897, %v3927
    %v3938 = vadd.f32 %v3898, %v3929
    %v3939 = vadd.f32 %v3899, %v3931
    %3940 = vset.pattern.permute.xlu0 22
    %3941 = vperm.xlu0 %3940, %v2749
    %v3942 = vpop.permute.xlu0 %3941
    %3944 = vset.pattern.permute.xlu0 22
    %3945 = vperm.xlu0 %3944, %v2752
    %v3946 = vpop.permute.xlu0 %3945
    %3948 = vset.pattern.permute.xlu0 22
    %3949 = vperm.xlu0 %3948, %v2755
    %v3950 = vpop.permute.xlu0 %3949
    %3952 = vset.pattern.permute.xlu0 22
    %3953 = vperm.xlu0 %3952, %v2758
    %v3954 = vpop.permute.xlu0 %3953
    %v3956 = vmul.f32 %v3942, %v217
    %v3957 = vmul.f32 %v3946, %v218
    %v3958 = vmul.f32 %v3950, %v219
    %v3959 = vmul.f32 %v3954, %v220
    %3964 = vrot.lane.b32.xlu0 %v3956, 32
    %v3965 = vpop.permute.xlu0 %3964
    %3966 = vrot.lane.b32.xlu0 %v3957, 32
    %v3967 = vpop.permute.xlu0 %3966
    %3968 = vrot.lane.b32.xlu0 %v3958, 32
    %v3969 = vpop.permute.xlu0 %3968
    %3970 = vrot.lane.b32.xlu0 %v3959, 32
    %v3971 = vpop.permute.xlu0 %3970
    %v3976 = vadd.f32 %v3936, %v3965
    %v3977 = vadd.f32 %v3937, %v3967
    %v3978 = vadd.f32 %v3938, %v3969
    %v3979 = vadd.f32 %v3939, %v3971
    %3980 = vset.pattern.permute.xlu0 23
    %3981 = vperm.xlu0 %3980, %v2749
    %v3982 = vpop.permute.xlu0 %3981
    %3984 = vset.pattern.permute.xlu0 23
    %3985 = vperm.xlu0 %3984, %v2752
    %v3986 = vpop.permute.xlu0 %3985
    %3988 = vset.pattern.permute.xlu0 23
    %3989 = vperm.xlu0 %3988, %v2755
    %v3990 = vpop.permute.xlu0 %3989
    %3992 = vset.pattern.permute.xlu0 23
    %3993 = vperm.xlu0 %3992, %v2758
    %v3994 = vpop.permute.xlu0 %3993
    %v3996 = vmul.f32 %v3982, %v217
    %v3997 = vmul.f32 %v3986, %v218
    %v3998 = vmul.f32 %v3990, %v219
    %v3999 = vmul.f32 %v3994, %v220
    %4004 = vrot.lane.b32.xlu0 %v3996, 16
    %v4005 = vpop.permute.xlu0 %4004
    %4006 = vrot.lane.b32.xlu0 %v3997, 16
    %v4007 = vpop.permute.xlu0 %4006
    %4008 = vrot.lane.b32.xlu0 %v3998, 16
    %v4009 = vpop.permute.xlu0 %4008
    %4010 = vrot.lane.b32.xlu0 %v3999, 16
    %v4011 = vpop.permute.xlu0 %4010
    %v4016 = vadd.f32 %v3976, %v4005
    %v4017 = vadd.f32 %v3977, %v4007
    %v4018 = vadd.f32 %v3978, %v4009
    %v4019 = vadd.f32 %v3979, %v4011
    %4024 = vrot.lane.b32.xlu0 %v4016, 16
    %v4025 = vpop.permute.xlu0 %4024
    %4026 = vrot.lane.b32.xlu0 %v4017, 16
    %v4027 = vpop.permute.xlu0 %4026
    %4028 = vrot.lane.b32.xlu0 %v4018, 16
    %v4029 = vpop.permute.xlu0 %4028
    %4030 = vrot.lane.b32.xlu0 %v4019, 16
    %v4031 = vpop.permute.xlu0 %4030
    %v4036 = vsel %vm78, %v4016, %v4025
    %v4037 = vsel %vm78, %v4017, %v4027
    %v4038 = vsel %vm78, %v4018, %v4029
    %v4039 = vsel %vm78, %v4019, %v4031
    %4040 = vrot.lane.b32.xlu0 %v2749, 112
    %v4041 = vpop.permute.xlu0 %4040
    %4042 = vrot.lane.b32.xlu0 %v2752, 112
    %v4043 = vpop.permute.xlu0 %4042
    %4044 = vrot.lane.b32.xlu0 %v2755, 112
    %v4045 = vpop.permute.xlu0 %4044
    %4046 = vrot.lane.b32.xlu0 %v2758, 112
    %v4047 = vpop.permute.xlu0 %4046
    %4048 = vrot.lane.b32.xlu0 %v2749, 80
    %v4049 = vpop.permute.xlu0 %4048
    %4050 = vrot.lane.b32.xlu0 %v2752, 80
    %v4051 = vpop.permute.xlu0 %4050
    %4052 = vrot.lane.b32.xlu0 %v2755, 80
    %v4053 = vpop.permute.xlu0 %4052
    %4054 = vrot.lane.b32.xlu0 %v2758, 80
    %v4055 = vpop.permute.xlu0 %4054
    %v4056 = vsel %vm707, %v4041, 0
    %v4058 = vsel %vm707, %v4043, 0
    %v4060 = vsel %vm707, %v4045, 0
    %v4062 = vsel %vm707, %v4047, 0
    %v4064 = vsel %vm707, %v4049, 0
    %v4066 = vsel %vm707, %v4051, 0
    %v4068 = vsel %vm707, %v4053, 0
    %v4070 = vsel %vm707, %v4055, 0
    %4072 = vmatpush.xpose.msra.mxu0 0.0
    %4073 = vmatpush.xpose.msra.mxu0 0.0
    %4074 = vmatpush.xpose.msra.mxu0 0.0
    %4075 = vmatpush.xpose.msra.mxu0 0.0
    %4076 = vmatpush.xpose.msra.mxu0 0.0
    %4077 = vmatpush.xpose.msra.mxu0 0.0
    %4078 = vmatpush.xpose.msra.mxu0 0.0
    %4079 = vmatpush.xpose.msra.mxu0 0.0
    %4080 = vmatpush.xpose.msra.mxu0 0.0
    %4081 = vmatpush.xpose.msra.mxu0 0.0
    %4082 = vmatpush.xpose.msra.mxu0 0.0
    %4083 = vmatpush.xpose.msra.mxu0 0.0
    %4084 = vmatpush.xpose.msra.mxu0 %v4070
    %4085 = vmatpush.xpose.msra.mxu0 %v4068
    %4086 = vmatpush.xpose.msra.mxu0 %v4066
    %4087 = vmatpush.xpose.msra.mxu0 %v4064
    %4088 = vmatmul.f32.gmra.mxu0 %v4056
    %v4089 = vpop.f32.mrf.mxu0
    %v4090 = vadd.f32 %v4036, %v4089
    %4091 = vmatmul.f32.gmra.mxu0 %v4058
    %v4092 = vpop.f32.mrf.mxu0
    %v4093 = vadd.f32 %v4037, %v4092
    %4094 = vmatmul.f32.gmra.mxu0 %v4060
    %v4095 = vpop.f32.mrf.mxu0
    %v4096 = vadd.f32 %v4038, %v4095
    %4097 = vmatmul.f32.gmra.mxu0 %v4062
    %v4098 = vpop.f32.mrf.mxu0
    %v4099 = vadd.f32 %v4039, %v4098
    %4100 = vdwg.mxu0
    %v4101 = vadd.f32 %v4090, %v221
    %v4102 = vadd.f32 %v4093, %v222
    %v4103 = vadd.f32 %v4096, %v223
    %v4104 = vadd.f32 %v4099, %v224
    %v4105 = vsel %vm142, %v4101, -inf
    %4106 = vmax.xlane.f32.xlu0 %v4105
    %v4107 = vpop.xlane.xlu0 %4106
    %v4108 = vsel %vm142, %v4102, -inf
    %4109 = vmax.xlane.f32.xlu0 %v4108
    %v4110 = vpop.xlane.xlu0 %4109
    %v4111 = vsel %vm142, %v4103, -inf
    %4112 = vmax.xlane.f32.xlu0 %v4111
    %v4113 = vpop.xlane.xlu0 %4112
    %v4114 = vsel %vm142, %v4104, -inf
    %4115 = vmax.xlane.f32.xlu0 %v4114
    %v4116 = vpop.xlane.xlu0 %4115
    %v4117 = vsub.f32 %v4101, %v4107
    %v4118 = vsub.f32 %v4102, %v4110
    %v4119 = vsub.f32 %v4103, %v4113
    %v4120 = vsub.f32 %v4104, %v4116
    %v4121 = vmul.f32 %v4117, 1.442695
    %v4122 = vpow.pop %v4121
    %v4123 = vmul.f32 %v4118, 1.442695
    %v4124 = vpow.pop %v4123
    %v4125 = vmul.f32 %v4119, 1.442695
    %v4126 = vpow.pop %v4125
    %v4127 = vmul.f32 %v4120, 1.442695
    %v4128 = vpow.pop %v4127
    %v4129 = vsel %vm142, %v4122, 0.0
    %4130 = vadd.xlane.f32.xlu0 %v4129
    %v4131 = vpop.xlane.xlu0 %4130
    %v4132 = vsel %vm142, %v4124, 0.0
    %4133 = vadd.xlane.f32.xlu0 %v4132
    %v4134 = vpop.xlane.xlu0 %4133
    %v4135 = vsel %vm142, %v4126, 0.0
    %4136 = vadd.xlane.f32.xlu0 %v4135
    %v4137 = vpop.xlane.xlu0 %4136
    %v4138 = vsel %vm142, %v4128, 0.0
    %4139 = vadd.xlane.f32.xlu0 %v4138
    %v4140 = vpop.xlane.xlu0 %4139
    %v4141 = vrcp.pop %v4131
    %v4142 = vrcp.pop %v4134
    %v4143 = vrcp.pop %v4137
    %v4144 = vrcp.pop %v4140
    %v4145 = vmul.f32 %v4122, %v4141
    %v4146 = vmul.f32 %v4124, %v4142
    %v4147 = vmul.f32 %v4126, %v4143
    %v4148 = vmul.f32 %v4128, %v4144
    %4149 = vrot.lane.b32.xlu0 %v2749, 48
    %v4150 = vpop.permute.xlu0 %4149
    %4151 = vrot.lane.b32.xlu0 %v2752, 48
    %v4152 = vpop.permute.xlu0 %4151
    %4153 = vrot.lane.b32.xlu0 %v2755, 48
    %v4154 = vpop.permute.xlu0 %4153
    %4155 = vrot.lane.b32.xlu0 %v2758, 48
    %v4156 = vpop.permute.xlu0 %4155
    %v4162 = vsel %vm142, %v4145, 0
    %v4165 = vsel %vm142, %v4146, 0
    %v4168 = vsel %vm142, %v4147, 0
    %v4171 = vsel %vm142, %v4148, 0
    %4173 = vmatpush.msra.mxu0 0.0
    %4174 = vmatpush.msra.mxu0 0.0
    %4175 = vmatpush.msra.mxu0 0.0
    %4176 = vmatpush.msra.mxu0 0.0
    %4177 = vmatpush.msra.mxu0 0.0
    %4178 = vmatpush.msra.mxu0 0.0
    %4179 = vmatpush.msra.mxu0 0.0
    %4180 = vmatpush.msra.mxu0 0.0
    %4181 = vmatpush.msra.mxu0 0.0
    %4182 = vmatpush.msra.mxu0 0.0
    %4183 = vmatpush.msra.mxu0 0.0
    %4184 = vmatpush.msra.mxu0 0.0
    %4185 = vmatpush.msra.mxu0 %v4156
    %4186 = vmatpush.msra.mxu0 %v4154
    %4187 = vmatpush.msra.mxu0 %v4152
    %4188 = vmatpush.msra.mxu0 %v4150
    %4189 = vmatmul.f32.gmra.mxu0 %v4162
    %v4190 = vpop.f32.mrf.mxu0
    %v4191 = vadd.f32 0.0, %v4190
    %4192 = vmatmul.f32.gmra.mxu0 %v4165
    %v4193 = vpop.f32.mrf.mxu0
    %v4194 = vadd.f32 0.0, %v4193
    %4195 = vmatmul.f32.gmra.mxu0 %v4168
    %v4196 = vpop.f32.mrf.mxu0
    %v4197 = vadd.f32 0.0, %v4196
    %4198 = vmatmul.f32.gmra.mxu0 %v4171
    %v4199 = vpop.f32.mrf.mxu0
    %v4200 = vadd.f32 0.0, %v4199
    %4201 = vdwg.mxu0
    %4202 = vset.pattern.permute.xlu0 24
    %4203 = vperm.xlu0 %4202, %v2749
    %v4204 = vpop.permute.xlu0 %4203
    %4206 = vset.pattern.permute.xlu0 24
    %4207 = vperm.xlu0 %4206, %v2752
    %v4208 = vpop.permute.xlu0 %4207
    %4210 = vset.pattern.permute.xlu0 24
    %4211 = vperm.xlu0 %4210, %v2755
    %v4212 = vpop.permute.xlu0 %4211
    %4214 = vset.pattern.permute.xlu0 24
    %4215 = vperm.xlu0 %4214, %v2758
    %v4216 = vpop.permute.xlu0 %4215
    %v4218 = vmul.f32 %v4204, %v217
    %v4219 = vmul.f32 %v4208, %v218
    %v4220 = vmul.f32 %v4212, %v219
    %v4221 = vmul.f32 %v4216, %v220
    %4222 = vset.pattern.permute.xlu0 25
    %4223 = vperm.xlu0 %4222, %v2749
    %v4224 = vpop.permute.xlu0 %4223
    %4226 = vset.pattern.permute.xlu0 25
    %4227 = vperm.xlu0 %4226, %v2752
    %v4228 = vpop.permute.xlu0 %4227
    %4230 = vset.pattern.permute.xlu0 25
    %4231 = vperm.xlu0 %4230, %v2755
    %v4232 = vpop.permute.xlu0 %4231
    %4234 = vset.pattern.permute.xlu0 25
    %4235 = vperm.xlu0 %4234, %v2758
    %v4236 = vpop.permute.xlu0 %4235
    %v4238 = vmul.f32 %v4224, %v217
    %v4239 = vmul.f32 %v4228, %v218
    %v4240 = vmul.f32 %v4232, %v219
    %v4241 = vmul.f32 %v4236, %v220
    %4246 = vrot.lane.b32.xlu0 %v4238, 112
    %v4247 = vpop.permute.xlu0 %4246
    %4248 = vrot.lane.b32.xlu0 %v4239, 112
    %v4249 = vpop.permute.xlu0 %4248
    %4250 = vrot.lane.b32.xlu0 %v4240, 112
    %v4251 = vpop.permute.xlu0 %4250
    %4252 = vrot.lane.b32.xlu0 %v4241, 112
    %v4253 = vpop.permute.xlu0 %4252
    %v4258 = vadd.f32 %v4218, %v4247
    %v4259 = vadd.f32 %v4219, %v4249
    %v4260 = vadd.f32 %v4220, %v4251
    %v4261 = vadd.f32 %v4221, %v4253
    %4262 = vset.pattern.permute.xlu0 26
    %4263 = vperm.xlu0 %4262, %v2749
    %v4264 = vpop.permute.xlu0 %4263
    %4266 = vset.pattern.permute.xlu0 26
    %4267 = vperm.xlu0 %4266, %v2752
    %v4268 = vpop.permute.xlu0 %4267
    %4270 = vset.pattern.permute.xlu0 26
    %4271 = vperm.xlu0 %4270, %v2755
    %v4272 = vpop.permute.xlu0 %4271
    %4274 = vset.pattern.permute.xlu0 26
    %4275 = vperm.xlu0 %4274, %v2758
    %v4276 = vpop.permute.xlu0 %4275
    %v4278 = vmul.f32 %v4264, %v217
    %v4279 = vmul.f32 %v4268, %v218
    %v4280 = vmul.f32 %v4272, %v219
    %v4281 = vmul.f32 %v4276, %v220
    %4286 = vrot.lane.b32.xlu0 %v4278, 96
    %v4287 = vpop.permute.xlu0 %4286
    %4288 = vrot.lane.b32.xlu0 %v4279, 96
    %v4289 = vpop.permute.xlu0 %4288
    %4290 = vrot.lane.b32.xlu0 %v4280, 96
    %v4291 = vpop.permute.xlu0 %4290
    %4292 = vrot.lane.b32.xlu0 %v4281, 96
    %v4293 = vpop.permute.xlu0 %4292
    %v4298 = vadd.f32 %v4258, %v4287
    %v4299 = vadd.f32 %v4259, %v4289
    %v4300 = vadd.f32 %v4260, %v4291
    %v4301 = vadd.f32 %v4261, %v4293
    %4302 = vset.pattern.permute.xlu0 27
    %4303 = vperm.xlu0 %4302, %v2749
    %v4304 = vpop.permute.xlu0 %4303
    %4306 = vset.pattern.permute.xlu0 27
    %4307 = vperm.xlu0 %4306, %v2752
    %v4308 = vpop.permute.xlu0 %4307
    %4310 = vset.pattern.permute.xlu0 27
    %4311 = vperm.xlu0 %4310, %v2755
    %v4312 = vpop.permute.xlu0 %4311
    %4314 = vset.pattern.permute.xlu0 27
    %4315 = vperm.xlu0 %4314, %v2758
    %v4316 = vpop.permute.xlu0 %4315
    %v4318 = vmul.f32 %v4304, %v217
    %v4319 = vmul.f32 %v4308, %v218
    %v4320 = vmul.f32 %v4312, %v219
    %v4321 = vmul.f32 %v4316, %v220
    %4326 = vrot.lane.b32.xlu0 %v4318, 80
    %v4327 = vpop.permute.xlu0 %4326
    %4328 = vrot.lane.b32.xlu0 %v4319, 80
    %v4329 = vpop.permute.xlu0 %4328
    %4330 = vrot.lane.b32.xlu0 %v4320, 80
    %v4331 = vpop.permute.xlu0 %4330
    %4332 = vrot.lane.b32.xlu0 %v4321, 80
    %v4333 = vpop.permute.xlu0 %4332
    %v4338 = vadd.f32 %v4298, %v4327
    %v4339 = vadd.f32 %v4299, %v4329
    %v4340 = vadd.f32 %v4300, %v4331
    %v4341 = vadd.f32 %v4301, %v4333
    %4342 = vset.pattern.permute.xlu0 28
    %4343 = vperm.xlu0 %4342, %v2749
    %v4344 = vpop.permute.xlu0 %4343
    %4346 = vset.pattern.permute.xlu0 28
    %4347 = vperm.xlu0 %4346, %v2752
    %v4348 = vpop.permute.xlu0 %4347
    %4350 = vset.pattern.permute.xlu0 28
    %4351 = vperm.xlu0 %4350, %v2755
    %v4352 = vpop.permute.xlu0 %4351
    %4354 = vset.pattern.permute.xlu0 28
    %4355 = vperm.xlu0 %4354, %v2758
    %v4356 = vpop.permute.xlu0 %4355
    %v4358 = vmul.f32 %v4344, %v217
    %v4359 = vmul.f32 %v4348, %v218
    %v4360 = vmul.f32 %v4352, %v219
    %v4361 = vmul.f32 %v4356, %v220
    %4366 = vrot.lane.b32.xlu0 %v4358, 64
    %v4367 = vpop.permute.xlu0 %4366
    %4368 = vrot.lane.b32.xlu0 %v4359, 64
    %v4369 = vpop.permute.xlu0 %4368
    %4370 = vrot.lane.b32.xlu0 %v4360, 64
    %v4371 = vpop.permute.xlu0 %4370
    %4372 = vrot.lane.b32.xlu0 %v4361, 64
    %v4373 = vpop.permute.xlu0 %4372
    %v4378 = vadd.f32 %v4338, %v4367
    %v4379 = vadd.f32 %v4339, %v4369
    %v4380 = vadd.f32 %v4340, %v4371
    %v4381 = vadd.f32 %v4341, %v4373
    %4382 = vset.pattern.permute.xlu0 29
    %4383 = vperm.xlu0 %4382, %v2749
    %v4384 = vpop.permute.xlu0 %4383
    %4386 = vset.pattern.permute.xlu0 29
    %4387 = vperm.xlu0 %4386, %v2752
    %v4388 = vpop.permute.xlu0 %4387
    %4390 = vset.pattern.permute.xlu0 29
    %4391 = vperm.xlu0 %4390, %v2755
    %v4392 = vpop.permute.xlu0 %4391
    %4394 = vset.pattern.permute.xlu0 29
    %4395 = vperm.xlu0 %4394, %v2758
    %v4396 = vpop.permute.xlu0 %4395
    %v4398 = vmul.f32 %v4384, %v217
    %v4399 = vmul.f32 %v4388, %v218
    %v4400 = vmul.f32 %v4392, %v219
    %v4401 = vmul.f32 %v4396, %v220
    %4406 = vrot.lane.b32.xlu0 %v4398, 48
    %v4407 = vpop.permute.xlu0 %4406
    %4408 = vrot.lane.b32.xlu0 %v4399, 48
    %v4409 = vpop.permute.xlu0 %4408
    %4410 = vrot.lane.b32.xlu0 %v4400, 48
    %v4411 = vpop.permute.xlu0 %4410
    %4412 = vrot.lane.b32.xlu0 %v4401, 48
    %v4413 = vpop.permute.xlu0 %4412
    %v4418 = vadd.f32 %v4378, %v4407
    %v4419 = vadd.f32 %v4379, %v4409
    %v4420 = vadd.f32 %v4380, %v4411
    %v4421 = vadd.f32 %v4381, %v4413
    %4422 = vset.pattern.permute.xlu0 30
    %4423 = vperm.xlu0 %4422, %v2749
    %v4424 = vpop.permute.xlu0 %4423
    %4426 = vset.pattern.permute.xlu0 30
    %4427 = vperm.xlu0 %4426, %v2752
    %v4428 = vpop.permute.xlu0 %4427
    %4430 = vset.pattern.permute.xlu0 30
    %4431 = vperm.xlu0 %4430, %v2755
    %v4432 = vpop.permute.xlu0 %4431
    %4434 = vset.pattern.permute.xlu0 30
    %4435 = vperm.xlu0 %4434, %v2758
    %v4436 = vpop.permute.xlu0 %4435
    %v4438 = vmul.f32 %v4424, %v217
    %v4439 = vmul.f32 %v4428, %v218
    %v4440 = vmul.f32 %v4432, %v219
    %v4441 = vmul.f32 %v4436, %v220
    %4446 = vrot.lane.b32.xlu0 %v4438, 32
    %v4447 = vpop.permute.xlu0 %4446
    %4448 = vrot.lane.b32.xlu0 %v4439, 32
    %v4449 = vpop.permute.xlu0 %4448
    %4450 = vrot.lane.b32.xlu0 %v4440, 32
    %v4451 = vpop.permute.xlu0 %4450
    %4452 = vrot.lane.b32.xlu0 %v4441, 32
    %v4453 = vpop.permute.xlu0 %4452
    %v4458 = vadd.f32 %v4418, %v4447
    %v4459 = vadd.f32 %v4419, %v4449
    %v4460 = vadd.f32 %v4420, %v4451
    %v4461 = vadd.f32 %v4421, %v4453
    %4462 = vset.pattern.permute.xlu0 31
    %4463 = vperm.xlu0 %4462, %v2749
    %v4464 = vpop.permute.xlu0 %4463
    %4466 = vset.pattern.permute.xlu0 31
    %4467 = vperm.xlu0 %4466, %v2752
    %v4468 = vpop.permute.xlu0 %4467
    %4470 = vset.pattern.permute.xlu0 31
    %4471 = vperm.xlu0 %4470, %v2755
    %v4472 = vpop.permute.xlu0 %4471
    %4474 = vset.pattern.permute.xlu0 31
    %4475 = vperm.xlu0 %4474, %v2758
    %v4476 = vpop.permute.xlu0 %4475
    %v4478 = vmul.f32 %v4464, %v217
    %v4479 = vmul.f32 %v4468, %v218
    %v4480 = vmul.f32 %v4472, %v219
    %v4481 = vmul.f32 %v4476, %v220
    %4486 = vrot.lane.b32.xlu0 %v4478, 16
    %v4487 = vpop.permute.xlu0 %4486
    %4488 = vrot.lane.b32.xlu0 %v4479, 16
    %v4489 = vpop.permute.xlu0 %4488
    %4490 = vrot.lane.b32.xlu0 %v4480, 16
    %v4491 = vpop.permute.xlu0 %4490
    %4492 = vrot.lane.b32.xlu0 %v4481, 16
    %v4493 = vpop.permute.xlu0 %4492
    %v4498 = vadd.f32 %v4458, %v4487
    %v4499 = vadd.f32 %v4459, %v4489
    %v4500 = vadd.f32 %v4460, %v4491
    %v4501 = vadd.f32 %v4461, %v4493
    %4506 = vrot.lane.b32.xlu0 %v4498, 16
    %v4507 = vpop.permute.xlu0 %4506
    %4508 = vrot.lane.b32.xlu0 %v4499, 16
    %v4509 = vpop.permute.xlu0 %4508
    %4510 = vrot.lane.b32.xlu0 %v4500, 16
    %v4511 = vpop.permute.xlu0 %4510
    %4512 = vrot.lane.b32.xlu0 %v4501, 16
    %v4513 = vpop.permute.xlu0 %4512
    %v4518 = vsel %vm78, %v4498, %v4507
    %v4519 = vsel %vm78, %v4499, %v4509
    %v4520 = vsel %vm78, %v4500, %v4511
    %v4521 = vsel %vm78, %v4501, %v4513
    %4522 = vrot.lane.b32.xlu0 %v2749, 104
    %v4523 = vpop.permute.xlu0 %4522
    %4524 = vrot.lane.b32.xlu0 %v2752, 104
    %v4525 = vpop.permute.xlu0 %4524
    %4526 = vrot.lane.b32.xlu0 %v2755, 104
    %v4527 = vpop.permute.xlu0 %4526
    %4528 = vrot.lane.b32.xlu0 %v2758, 104
    %v4529 = vpop.permute.xlu0 %4528
    %4530 = vrot.lane.b32.xlu0 %v2749, 72
    %v4531 = vpop.permute.xlu0 %4530
    %4532 = vrot.lane.b32.xlu0 %v2752, 72
    %v4533 = vpop.permute.xlu0 %4532
    %4534 = vrot.lane.b32.xlu0 %v2755, 72
    %v4535 = vpop.permute.xlu0 %4534
    %4536 = vrot.lane.b32.xlu0 %v2758, 72
    %v4537 = vpop.permute.xlu0 %4536
    %v4538 = vsel %vm707, %v4523, 0
    %v4540 = vsel %vm707, %v4525, 0
    %v4542 = vsel %vm707, %v4527, 0
    %v4544 = vsel %vm707, %v4529, 0
    %v4546 = vsel %vm707, %v4531, 0
    %v4548 = vsel %vm707, %v4533, 0
    %v4550 = vsel %vm707, %v4535, 0
    %v4552 = vsel %vm707, %v4537, 0
    %4554 = vmatpush.xpose.msra.mxu0 0.0
    %4555 = vmatpush.xpose.msra.mxu0 0.0
    %4556 = vmatpush.xpose.msra.mxu0 0.0
    %4557 = vmatpush.xpose.msra.mxu0 0.0
    %4558 = vmatpush.xpose.msra.mxu0 0.0
    %4559 = vmatpush.xpose.msra.mxu0 0.0
    %4560 = vmatpush.xpose.msra.mxu0 0.0
    %4561 = vmatpush.xpose.msra.mxu0 0.0
    %4562 = vmatpush.xpose.msra.mxu0 0.0
    %4563 = vmatpush.xpose.msra.mxu0 0.0
    %4564 = vmatpush.xpose.msra.mxu0 0.0
    %4565 = vmatpush.xpose.msra.mxu0 0.0
    %4566 = vmatpush.xpose.msra.mxu0 %v4552
    %4567 = vmatpush.xpose.msra.mxu0 %v4550
    %4568 = vmatpush.xpose.msra.mxu0 %v4548
    %4569 = vmatpush.xpose.msra.mxu0 %v4546
    %4570 = vmatmul.f32.gmra.mxu0 %v4538
    %v4571 = vpop.f32.mrf.mxu0
    %v4572 = vadd.f32 %v4518, %v4571
    %4573 = vmatmul.f32.gmra.mxu0 %v4540
    %v4574 = vpop.f32.mrf.mxu0
    %v4575 = vadd.f32 %v4519, %v4574
    %4576 = vmatmul.f32.gmra.mxu0 %v4542
    %v4577 = vpop.f32.mrf.mxu0
    %v4578 = vadd.f32 %v4520, %v4577
    %4579 = vmatmul.f32.gmra.mxu0 %v4544
    %v4580 = vpop.f32.mrf.mxu0
    %v4581 = vadd.f32 %v4521, %v4580
    %4582 = vdwg.mxu0
    %v4583 = vadd.f32 %v4572, %v221
    %v4584 = vadd.f32 %v4575, %v222
    %v4585 = vadd.f32 %v4578, %v223
    %v4586 = vadd.f32 %v4581, %v224
    %v4587 = vsel %vm142, %v4583, -inf
    %4588 = vmax.xlane.f32.xlu0 %v4587
    %v4589 = vpop.xlane.xlu0 %4588
    %v4590 = vsel %vm142, %v4584, -inf
    %4591 = vmax.xlane.f32.xlu0 %v4590
    %v4592 = vpop.xlane.xlu0 %4591
    %v4593 = vsel %vm142, %v4585, -inf
    %4594 = vmax.xlane.f32.xlu0 %v4593
    %v4595 = vpop.xlane.xlu0 %4594
    %v4596 = vsel %vm142, %v4586, -inf
    %4597 = vmax.xlane.f32.xlu0 %v4596
    %v4598 = vpop.xlane.xlu0 %4597
    %v4599 = vsub.f32 %v4583, %v4589
    %v4600 = vsub.f32 %v4584, %v4592
    %v4601 = vsub.f32 %v4585, %v4595
    %v4602 = vsub.f32 %v4586, %v4598
    %v4603 = vmul.f32 %v4599, 1.442695
    %v4604 = vpow.pop %v4603
    %v4605 = vmul.f32 %v4600, 1.442695
    %v4606 = vpow.pop %v4605
    %v4607 = vmul.f32 %v4601, 1.442695
    %v4608 = vpow.pop %v4607
    %v4609 = vmul.f32 %v4602, 1.442695
    %v4610 = vpow.pop %v4609
    %v4611 = vsel %vm142, %v4604, 0.0
    %4612 = vadd.xlane.f32.xlu0 %v4611
    %v4613 = vpop.xlane.xlu0 %4612
    %v4614 = vsel %vm142, %v4606, 0.0
    %4615 = vadd.xlane.f32.xlu0 %v4614
    %v4616 = vpop.xlane.xlu0 %4615
    %v4617 = vsel %vm142, %v4608, 0.0
    %4618 = vadd.xlane.f32.xlu0 %v4617
    %v4619 = vpop.xlane.xlu0 %4618
    %v4620 = vsel %vm142, %v4610, 0.0
    %4621 = vadd.xlane.f32.xlu0 %v4620
    %v4622 = vpop.xlane.xlu0 %4621
    %v4623 = vrcp.pop %v4613
    %v4624 = vrcp.pop %v4616
    %v4625 = vrcp.pop %v4619
    %v4626 = vrcp.pop %v4622
    %v4627 = vmul.f32 %v4604, %v4623
    %v4628 = vmul.f32 %v4606, %v4624
    %v4629 = vmul.f32 %v4608, %v4625
    %v4630 = vmul.f32 %v4610, %v4626
    %4631 = vrot.lane.b32.xlu0 %v2749, 40
    %v4632 = vpop.permute.xlu0 %4631
    %4633 = vrot.lane.b32.xlu0 %v2752, 40
    %v4634 = vpop.permute.xlu0 %4633
    %4635 = vrot.lane.b32.xlu0 %v2755, 40
    %v4636 = vpop.permute.xlu0 %4635
    %4637 = vrot.lane.b32.xlu0 %v2758, 40
    %v4638 = vpop.permute.xlu0 %4637
    %v4644 = vsel %vm142, %v4627, 0
    %v4647 = vsel %vm142, %v4628, 0
    %v4650 = vsel %vm142, %v4629, 0
    %v4653 = vsel %vm142, %v4630, 0
    %4655 = vmatpush.msra.mxu0 0.0
    %4656 = vmatpush.msra.mxu0 0.0
    %4657 = vmatpush.msra.mxu0 0.0
    %4658 = vmatpush.msra.mxu0 0.0
    %4659 = vmatpush.msra.mxu0 0.0
    %4660 = vmatpush.msra.mxu0 0.0
    %4661 = vmatpush.msra.mxu0 0.0
    %4662 = vmatpush.msra.mxu0 0.0
    %4663 = vmatpush.msra.mxu0 0.0
    %4664 = vmatpush.msra.mxu0 0.0
    %4665 = vmatpush.msra.mxu0 0.0
    %4666 = vmatpush.msra.mxu0 0.0
    %4667 = vmatpush.msra.mxu0 %v4638
    %4668 = vmatpush.msra.mxu0 %v4636
    %4669 = vmatpush.msra.mxu0 %v4634
    %4670 = vmatpush.msra.mxu0 %v4632
    %4671 = vmatmul.f32.gmra.mxu0 %v4644
    %v4672 = vpop.f32.mrf.mxu0
    %v4673 = vadd.f32 0.0, %v4672
    %4674 = vmatmul.f32.gmra.mxu0 %v4647
    %v4675 = vpop.f32.mrf.mxu0
    %v4676 = vadd.f32 0.0, %v4675
    %4677 = vmatmul.f32.gmra.mxu0 %v4650
    %v4678 = vpop.f32.mrf.mxu0
    %v4679 = vadd.f32 0.0, %v4678
    %4680 = vmatmul.f32.gmra.mxu0 %v4653
    %v4681 = vpop.f32.mrf.mxu0
    %v4682 = vadd.f32 0.0, %v4681
    %4683 = vdwg.mxu0
    %4688 = vrot.lane.b32.xlu0 %v3709, 8
    %v4689 = vpop.permute.xlu0 %4688
    %4690 = vrot.lane.b32.xlu0 %v3712, 8
    %v4691 = vpop.permute.xlu0 %4690
    %4692 = vrot.lane.b32.xlu0 %v3715, 8
    %v4693 = vpop.permute.xlu0 %4692
    %4694 = vrot.lane.b32.xlu0 %v3718, 8
    %v4695 = vpop.permute.xlu0 %4694
    %4704 = vrot.lane.b32.xlu0 %v4191, 16
    %v4705 = vpop.permute.xlu0 %4704
    %4706 = vrot.lane.b32.xlu0 %v4194, 16
    %v4707 = vpop.permute.xlu0 %4706
    %4708 = vrot.lane.b32.xlu0 %v4197, 16
    %v4709 = vpop.permute.xlu0 %4708
    %4710 = vrot.lane.b32.xlu0 %v4200, 16
    %v4711 = vpop.permute.xlu0 %4710
    %4720 = vrot.lane.b32.xlu0 %v4673, 24
    %v4721 = vpop.permute.xlu0 %4720
    %4722 = vrot.lane.b32.xlu0 %v4676, 24
    %v4723 = vpop.permute.xlu0 %4722
    %4724 = vrot.lane.b32.xlu0 %v4679, 24
    %v4725 = vpop.permute.xlu0 %4724
    %4726 = vrot.lane.b32.xlu0 %v4682, 24
    %v4727 = vpop.permute.xlu0 %4726
    %v4732 = vsel %vm707, %v3227, %v4689
    %v4733 = vsel %vm707, %v3230, %v4691
    %v4734 = vsel %vm707, %v3233, %v4693
    %v4735 = vsel %vm707, %v3236, %v4695
    %v4736 = vsel %vm78, %v4732, %v4705
    %v4737 = vsel %vm78, %v4733, %v4707
    %v4738 = vsel %vm78, %v4734, %v4709
    %v4739 = vsel %vm78, %v4735, %v4711
    %v4740 = vsel %vm2356, %v4736, %v4721
    %v4741 = vsel %vm2356, %v4737, %v4723
    %v4742 = vsel %vm2356, %v4738, %v4725
    %v4743 = vsel %vm2356, %v4739, %v4727
    %v4744 = vld [vmem:[#allocation5 + $0xf0] sm:$0xff]
    %v4745 = vld [vmem:[#allocation5 + $0xf8] sm:$0xff]
    %v4746 = vld [vmem:[#allocation5 + $0x100] sm:$0xff]
    %v4747 = vld [vmem:[#allocation5 + $0x108] sm:$0xff]
    %v4749 = vsel %vm142, %v4740, 0
    %v4752 = vsel %vm142, %v4741, 0
    %v4755 = vsel %vm142, %v4742, 0
    %v4758 = vsel %vm142, %v4743, 0
    %4760 = vmatpush.msra.mxu0 0.0
    %4761 = vmatpush.msra.mxu0 0.0
    %4762 = vmatpush.msra.mxu0 0.0
    %4763 = vmatpush.msra.mxu0 0.0
    %4764 = vmatpush.msra.mxu0 0.0
    %4765 = vmatpush.msra.mxu0 0.0
    %4766 = vmatpush.msra.mxu0 0.0
    %4767 = vmatpush.msra.mxu0 0.0
    %4768 = vmatpush.msra.mxu0 0.0
    %4769 = vmatpush.msra.mxu0 0.0
    %4770 = vmatpush.msra.mxu0 0.0
    %4771 = vmatpush.msra.mxu0 0.0
    %4772 = vmatpush.msra.mxu0 %v4747
    %4773 = vmatpush.msra.mxu0 %v4746
    %4774 = vmatpush.msra.mxu0 %v4745
    %4775 = vmatpush.msra.mxu0 %v4744
    %4776 = vmatmul.f32.gmra.mxu0 %v4749
    %v4777 = vpop.f32.mrf.mxu0
    %v4778 = vadd.f32 0.0, %v4777
    %4779 = vmatmul.f32.gmra.mxu0 %v4752
    %v4780 = vpop.f32.mrf.mxu0
    %v4781 = vadd.f32 0.0, %v4780
    %4782 = vmatmul.f32.gmra.mxu0 %v4755
    %v4783 = vpop.f32.mrf.mxu0
    %v4784 = vadd.f32 0.0, %v4783
    %4785 = vmatmul.f32.gmra.mxu0 %v4758
    %v4786 = vpop.f32.mrf.mxu0
    %v4787 = vadd.f32 0.0, %v4786
    %4788 = vdwg.mxu0
    %v4789 = vadd.f32 %v2613, %v4778
    %v4790 = vadd.f32 %v2614, %v4781
    %v4791 = vadd.f32 %v2615, %v4784
    %v4792 = vadd.f32 %v2616, %v4787
    %v4793 = vsel %vm142, %v4789, 0.0
    %4794 = vadd.xlane.f32.xlu0 %v4793
    %v4795 = vpop.xlane.xlu0 %4794
    %v4796 = vsel %vm142, %v4790, 0.0
    %4797 = vadd.xlane.f32.xlu0 %v4796
    %v4798 = vpop.xlane.xlu0 %4797
    %v4799 = vsel %vm142, %v4791, 0.0
    %4800 = vadd.xlane.f32.xlu0 %v4799
    %v4801 = vpop.xlane.xlu0 %4800
    %v4802 = vsel %vm142, %v4792, 0.0
    %4803 = vadd.xlane.f32.xlu0 %v4802
    %v4804 = vpop.xlane.xlu0 %4803
    %v4805 = vmul.f32 %v4795, %v243
    %v4806 = vmul.f32 %v4798, %v243
    %v4807 = vmul.f32 %v4801, %v243
    %v4808 = vmul.f32 %v4804, %v243
    %v4809 = vsub.f32 %v4789, %v4805
    %v4810 = vsub.f32 %v4790, %v4806
    %v4811 = vsub.f32 %v4791, %v4807
    %v4812 = vsub.f32 %v4792, %v4808
    %v4813 = vmul.f32 %v4809, %v4809
    %v4814 = vmul.f32 %v4810, %v4810
    %v4815 = vmul.f32 %v4811, %v4811
    %v4816 = vmul.f32 %v4812, %v4812
    %v4817 = vsel %vm142, %v4813, 0.0
    %4818 = vadd.xlane.f32.xlu0 %v4817
    %v4819 = vpop.xlane.xlu0 %4818
    %v4820 = vsel %vm142, %v4814, 0.0
    %4821 = vadd.xlane.f32.xlu0 %v4820
    %v4822 = vpop.xlane.xlu0 %4821
    %v4823 = vsel %vm142, %v4815, 0.0
    %4824 = vadd.xlane.f32.xlu0 %v4823
    %v4825 = vpop.xlane.xlu0 %4824
    %v4826 = vsel %vm142, %v4816, 0.0
    %4827 = vadd.xlane.f32.xlu0 %v4826
    %v4828 = vpop.xlane.xlu0 %4827
    %v4829 = vmul.f32 %v4819, %v243
    %v4830 = vmul.f32 %v4822, %v243
    %v4831 = vmul.f32 %v4825, %v243
    %v4832 = vmul.f32 %v4828, %v243
    %v4833 = vadd.f32 %v4829, 1e-05
    %v4834 = vadd.f32 %v4830, 1e-05
    %v4835 = vadd.f32 %v4831, 1e-05
    %v4836 = vadd.f32 %v4832, 1e-05
    %v4837 = vrsqrt.pop %v4833
    %v4838 = vmul.f32 %v4837, %v4833
    %v4839 = vmul.f32 %v4838, %v4837
    %v4840 = vmul.f32 0.5, %v4839
    %v4841 = vsub.f32 1.5, %v4840
    %v4842 = vmul.f32 %v4837, %v4841
    %vm4843 = vweird.f32 %v4833
    %vm4844 = vweird.f32 %v4837
    %vm4845 = vmor %vm4843, %vm4844
    %v4846 = vsel %vm4845, %v4837, %v4842
    %v4847 = vrsqrt.pop %v4834
    %v4848 = vmul.f32 %v4847, %v4834
    %v4849 = vmul.f32 %v4848, %v4847
    %v4850 = vmul.f32 0.5, %v4849
    %v4851 = vsub.f32 1.5, %v4850
    %v4852 = vmul.f32 %v4847, %v4851
    %vm4853 = vweird.f32 %v4834
    %vm4854 = vweird.f32 %v4847
    %vm4855 = vmor %vm4853, %vm4854
    %v4856 = vsel %vm4855, %v4847, %v4852
    %v4857 = vrsqrt.pop %v4835
    %v4858 = vmul.f32 %v4857, %v4835
    %v4859 = vmul.f32 %v4858, %v4857
    %v4860 = vmul.f32 0.5, %v4859
    %v4861 = vsub.f32 1.5, %v4860
    %v4862 = vmul.f32 %v4857, %v4861
    %vm4863 = vweird.f32 %v4835
    %vm4864 = vweird.f32 %v4857
    %vm4865 = vmor %vm4863, %vm4864
    %v4866 = vsel %vm4865, %v4857, %v4862
    %v4867 = vrsqrt.pop %v4836
    %v4868 = vmul.f32 %v4867, %v4836
    %v4869 = vmul.f32 %v4868, %v4867
    %v4870 = vmul.f32 0.5, %v4869
    %v4871 = vsub.f32 1.5, %v4870
    %v4872 = vmul.f32 %v4867, %v4871
    %vm4873 = vweird.f32 %v4836
    %vm4874 = vweird.f32 %v4867
    %vm4875 = vmor %vm4873, %vm4874
    %v4876 = vsel %vm4875, %v4867, %v4872
    %v4877 = vmul.f32 %v4809, %v4846
    %v4878 = vmul.f32 %v4810, %v4856
    %v4879 = vmul.f32 %v4811, %v4866
    %v4880 = vmul.f32 %v4812, %v4876
    %v4881 = vperm.slane %v44, 7
    %v4882 = vmul.f32 %v4877, %v4881
    %v4883 = vmul.f32 %v4878, %v4881
    %v4884 = vmul.f32 %v4879, %v4881
    %v4885 = vmul.f32 %v4880, %v4881
    %v4886 = vperm.slane %v45, 1
    %v4887 = vadd.f32 %v4882, %v4886
    %v4888 = vadd.f32 %v4883, %v4886
    %v4889 = vadd.f32 %v4884, %v4886
    %v4890 = vadd.f32 %v4885, %v4886
    %v4891 = vld [vmem:[#allocation5 + $0x110] sm:$0xff]
    %v4892 = vld [vmem:[#allocation5 + $0x118] sm:$0xff]
    %v4893 = vld [vmem:[#allocation5 + $0x120] sm:$0xff]
    %v4894 = vld [vmem:[#allocation5 + $0x128] sm:$0xff]
    %v4895 = vperm.slane %v45, 3
    %v4897 = vsel %vm142, %v4887, 0
    %v4900 = vsel %vm142, %v4888, 0
    %v4903 = vsel %vm142, %v4889, 0
    %v4906 = vsel %vm142, %v4890, 0
    %4908 = vmatpush.msra.mxu0 0.0
    %4909 = vmatpush.msra.mxu0 0.0
    %4910 = vmatpush.msra.mxu0 0.0
    %4911 = vmatpush.msra.mxu0 0.0
    %4912 = vmatpush.msra.mxu0 0.0
    %4913 = vmatpush.msra.mxu0 0.0
    %4914 = vmatpush.msra.mxu0 0.0
    %4915 = vmatpush.msra.mxu0 0.0
    %4916 = vmatpush.msra.mxu0 0.0
    %4917 = vmatpush.msra.mxu0 0.0
    %4918 = vmatpush.msra.mxu0 0.0
    %4919 = vmatpush.msra.mxu0 0.0
    %4920 = vmatpush.msra.mxu0 %v4894
    %4921 = vmatpush.msra.mxu0 %v4893
    %4922 = vmatpush.msra.mxu0 %v4892
    %4923 = vmatpush.msra.mxu0 %v4891
    %4924 = vmatmul.f32.gmra.mxu0 %v4897
    %v4925 = vpop.f32.mrf.mxu0
    %v4926 = vadd.f32 %v4895, %v4925
    %4927 = vmatmul.f32.gmra.mxu0 %v4900
    %v4928 = vpop.f32.mrf.mxu0
    %v4929 = vadd.f32 %v4895, %v4928
    %4930 = vmatmul.f32.gmra.mxu0 %v4903
    %v4931 = vpop.f32.mrf.mxu0
    %v4932 = vadd.f32 %v4895, %v4931
    %4933 = vmatmul.f32.gmra.mxu0 %v4906
    %v4934 = vpop.f32.mrf.mxu0
    %v4935 = vadd.f32 %v4895, %v4934
    %4936 = vdwg.mxu0
    %v4937 = vmax.f32 %v4926, 0.0
    %v4938 = vmax.f32 %v4929, 0.0
    %v4939 = vmax.f32 %v4932, 0.0
    %v4940 = vmax.f32 %v4935, 0.0
    %v4941 = vld [vmem:[#allocation5 + $0x130] sm:$0xff]
    %v4942 = vld [vmem:[#allocation5 + $0x138] sm:$0xff]
    %v4943 = vld [vmem:[#allocation5 + $0x140] sm:$0xff]
    %v4944 = vld [vmem:[#allocation5 + $0x148] sm:$0xff]
    %v4945 = vld [vmem:[#allocation5 + $0x150] sm:$0xff]
    %v4946 = vld [vmem:[#allocation5 + $0x158] sm:$0xff]
    %v4947 = vld [vmem:[#allocation5 + $0x160] sm:$0xff]
    %v4948 = vld [vmem:[#allocation5 + $0x168] sm:$0xff]
    %v4950 = vsel %vm2566, %v4937, 0
    %v4953 = vsel %vm2566, %v4938, 0
    %v4956 = vsel %vm2566, %v4939, 0
    %v4959 = vsel %vm2566, %v4940, 0
    %4961 = vmatpush.msra.mxu0 0.0
    %4962 = vmatpush.msra.mxu0 0.0
    %4963 = vmatpush.msra.mxu0 0.0
    %4964 = vmatpush.msra.mxu0 0.0
    %4965 = vmatpush.msra.mxu0 0.0
    %4966 = vmatpush.msra.mxu0 0.0
    %4967 = vmatpush.msra.mxu0 0.0
    %4968 = vmatpush.msra.mxu0 0.0
    %4969 = vmatpush.msra.mxu0 %v4948
    %4970 = vmatpush.msra.mxu0 %v4947
    %4971 = vmatpush.msra.mxu0 %v4946
    %4972 = vmatpush.msra.mxu0 %v4945
    %4973 = vmatpush.msra.mxu0 %v4944
    %4974 = vmatpush.msra.mxu0 %v4943
    %4975 = vmatpush.msra.mxu0 %v4942
    %4976 = vmatpush.msra.mxu0 %v4941
    %4977 = vmatmul.f32.gmra.mxu0 %v4950
    %v4978 = vpop.f32.mrf.mxu0
    %v4979 = vadd.f32 0.0, %v4978
    %4980 = vmatmul.f32.gmra.mxu0 %v4953
    %v4981 = vpop.f32.mrf.mxu0
    %v4982 = vadd.f32 0.0, %v4981
    %4983 = vmatmul.f32.gmra.mxu0 %v4956
    %v4984 = vpop.f32.mrf.mxu0
    %v4985 = vadd.f32 0.0, %v4984
    %4986 = vmatmul.f32.gmra.mxu0 %v4959
    %v4987 = vpop.f32.mrf.mxu0
    %v4988 = vadd.f32 0.0, %v4987
    %4989 = vdwg.mxu0
    %v4990 = vadd.f32 %v4789, %v4979
    %v4991 = vadd.f32 %v4790, %v4982
    %v4992 = vadd.f32 %v4791, %v4985
    %v4993 = vadd.f32 %v4792, %v4988
    %v4994 = vperm.slane %v45, 5
    %v4995 = vadd.f32 %v4990, %v4994
    %v4996 = vadd.f32 %v4991, %v4994
    %v4997 = vadd.f32 %v4992, %v4994
    %v4998 = vadd.f32 %v4993, %v4994
    %v4999 = vsel %vm142, %v4995, 0.0
    %5000 = vadd.xlane.f32.xlu0 %v4999
    %v5001 = vpop.xlane.xlu0 %5000
    %v5002 = vsel %vm142, %v4996, 0.0
    %5003 = vadd.xlane.f32.xlu0 %v5002
    %v5004 = vpop.xlane.xlu0 %5003
    %v5005 = vsel %vm142, %v4997, 0.0
    %5006 = vadd.xlane.f32.xlu0 %v5005
    %v5007 = vpop.xlane.xlu0 %5006
    %v5008 = vsel %vm142, %v4998, 0.0
    %5009 = vadd.xlane.f32.xlu0 %v5008
    %v5010 = vpop.xlane.xlu0 %5009
    %v5011 = vmul.f32 %v5001, %v243
    %v5012 = vmul.f32 %v5004, %v243
    %v5013 = vmul.f32 %v5007, %v243
    %v5014 = vmul.f32 %v5010, %v243
    %v5015 = vsub.f32 %v4995, %v5011
    %v5016 = vsub.f32 %v4996, %v5012
    %v5017 = vsub.f32 %v4997, %v5013
    %v5018 = vsub.f32 %v4998, %v5014
    %v5019 = vmul.f32 %v5015, %v5015
    %v5020 = vmul.f32 %v5016, %v5016
    %v5021 = vmul.f32 %v5017, %v5017
    %v5022 = vmul.f32 %v5018, %v5018
    %v5023 = vsel %vm142, %v5019, 0.0
    %5024 = vadd.xlane.f32.xlu0 %v5023
    %v5025 = vpop.xlane.xlu0 %5024
    %v5026 = vsel %vm142, %v5020, 0.0
    %5027 = vadd.xlane.f32.xlu0 %v5026
    %v5028 = vpop.xlane.xlu0 %5027
    %v5029 = vsel %vm142, %v5021, 0.0
    %5030 = vadd.xlane.f32.xlu0 %v5029
    %v5031 = vpop.xlane.xlu0 %5030
    %v5032 = vsel %vm142, %v5022, 0.0
    %5033 = vadd.xlane.f32.xlu0 %v5032
    %v5034 = vpop.xlane.xlu0 %5033
    %v5035 = vmul.f32 %v5025, %v243
    %v5036 = vmul.f32 %v5028, %v243
    %v5037 = vmul.f32 %v5031, %v243
    %v5038 = vmul.f32 %v5034, %v243
    %v5039 = vadd.f32 %v5035, 1e-05
    %v5040 = vadd.f32 %v5036, 1e-05
    %v5041 = vadd.f32 %v5037, 1e-05
    %v5042 = vadd.f32 %v5038, 1e-05
    %v5043 = vrsqrt.pop %v5039
    %v5044 = vmul.f32 %v5043, %v5039
    %v5045 = vmul.f32 %v5044, %v5043
    %v5046 = vmul.f32 0.5, %v5045
    %v5047 = vsub.f32 1.5, %v5046
    %v5048 = vmul.f32 %v5043, %v5047
    %vm5049 = vweird.f32 %v5039
    %vm5050 = vweird.f32 %v5043
    %vm5051 = vmor %vm5049, %vm5050
    %v5052 = vsel %vm5051, %v5043, %v5048
    %v5053 = vrsqrt.pop %v5040
    %v5054 = vmul.f32 %v5053, %v5040
    %v5055 = vmul.f32 %v5054, %v5053
    %v5056 = vmul.f32 0.5, %v5055
    %v5057 = vsub.f32 1.5, %v5056
    %v5058 = vmul.f32 %v5053, %v5057
    %vm5059 = vweird.f32 %v5040
    %vm5060 = vweird.f32 %v5053
    %vm5061 = vmor %vm5059, %vm5060
    %v5062 = vsel %vm5061, %v5053, %v5058
    %v5063 = vrsqrt.pop %v5041
    %v5064 = vmul.f32 %v5063, %v5041
    %v5065 = vmul.f32 %v5064, %v5063
    %v5066 = vmul.f32 0.5, %v5065
    %v5067 = vsub.f32 1.5, %v5066
    %v5068 = vmul.f32 %v5063, %v5067
    %vm5069 = vweird.f32 %v5041
    %vm5070 = vweird.f32 %v5063
    %vm5071 = vmor %vm5069, %vm5070
    %v5072 = vsel %vm5071, %v5063, %v5068
    %v5073 = vrsqrt.pop %v5042
    %v5074 = vmul.f32 %v5073, %v5042
    %v5075 = vmul.f32 %v5074, %v5073
    %v5076 = vmul.f32 0.5, %v5075
    %v5077 = vsub.f32 1.5, %v5076
    %v5078 = vmul.f32 %v5073, %v5077
    %vm5079 = vweird.f32 %v5042
    %vm5080 = vweird.f32 %v5073
    %vm5081 = vmor %vm5079, %vm5080
    %v5082 = vsel %vm5081, %v5073, %v5078
    %v5083 = vmul.f32 %v5015, %v5052
    %v5084 = vmul.f32 %v5016, %v5062
    %v5085 = vmul.f32 %v5017, %v5072
    %v5086 = vmul.f32 %v5018, %v5082
    %v5087 = vperm.slane %v45, 6
    %v5088 = vmul.f32 %v5083, %v5087
    %v5089 = vmul.f32 %v5084, %v5087
    %v5090 = vmul.f32 %v5085, %v5087
    %v5091 = vmul.f32 %v5086, %v5087
    %v5092 = vperm.slane %v45, 7
    %v5093 = vadd.f32 %v5088, %v5092
    %v5094 = vadd.f32 %v5089, %v5092
    %v5095 = vadd.f32 %v5090, %v5092
    %v5096 = vadd.f32 %v5091, %v5092
    %v5097 = vld [vmem:[#allocation5 + $0x170] sm:$0xff]
    %v5098 = vld [vmem:[#allocation5 + $0x178] sm:$0xff]
    %v5099 = vld [vmem:[#allocation5 + $0x180] sm:$0xff]
    %v5100 = vld [vmem:[#allocation5 + $0x188] sm:$0xff]
    %v5101 = vperm.slane %v46, 0
    %v5103 = vsel %vm142, %v5093, 0
    %v5106 = vsel %vm142, %v5094, 0
    %v5109 = vsel %vm142, %v5095, 0
    %v5112 = vsel %vm142, %v5096, 0
    %5114 = vmatpush.msra.mxu0 0.0
    %5115 = vmatpush.msra.mxu0 0.0
    %5116 = vmatpush.msra.mxu0 0.0
    %5117 = vmatpush.msra.mxu0 0.0
    %5118 = vmatpush.msra.mxu0 0.0
    %5119 = vmatpush.msra.mxu0 0.0
    %5120 = vmatpush.msra.mxu0 0.0
    %5121 = vmatpush.msra.mxu0 0.0
    %5122 = vmatpush.msra.mxu0 0.0
    %5123 = vmatpush.msra.mxu0 0.0
    %5124 = vmatpush.msra.mxu0 0.0
    %5125 = vmatpush.msra.mxu0 0.0
    %5126 = vmatpush.msra.mxu0 %v5100
    %5127 = vmatpush.msra.mxu0 %v5099
    %5128 = vmatpush.msra.mxu0 %v5098
    %5129 = vmatpush.msra.mxu0 %v5097
    %5130 = vmatmul.f32.gmra.mxu0 %v5103
    %v5131 = vpop.f32.mrf.mxu0
    %v5132 = vadd.f32 %v5101, %v5131
    %5133 = vmatmul.f32.gmra.mxu0 %v5106
    %v5134 = vpop.f32.mrf.mxu0
    %v5135 = vadd.f32 %v5101, %v5134
    %5136 = vmatmul.f32.gmra.mxu0 %v5109
    %v5137 = vpop.f32.mrf.mxu0
    %v5138 = vadd.f32 %v5101, %v5137
    %5139 = vmatmul.f32.gmra.mxu0 %v5112
    %v5140 = vpop.f32.mrf.mxu0
    %v5141 = vadd.f32 %v5101, %v5140
    %5142 = vdwg.mxu0
    %vm5143 = vcmp.ge.f32.partialorder %v5132, 0.0
    %vm5144 = vcmp.ge.f32.partialorder %v5135, 0.0
    %vm5145 = vcmp.ge.f32.partialorder %v5138, 0.0
    %vm5146 = vcmp.ge.f32.partialorder %v5141, 0.0
    %5147 = vrot.lane.b32.xlu0 %v125, 124
    %v5148 = vpop.permute.xlu0 %5147
    %s5149 = vtos %v5148
    %v5150 = vstv %s5149
    %v5152 = vmul.f32 %v5150, %v5132
    %v5153 = vmul.f32 %v5150, %v5135
    %v5154 = vmul.f32 %v5150, %v5138
    %v5155 = vmul.f32 %v5150, %v5141
    %v5156 = vsel %vm5143, %v5132, %v5152
    %v5157 = vsel %vm5144, %v5135, %v5153
    %v5158 = vsel %vm5145, %v5138, %v5154
    %v5159 = vsel %vm5146, %v5141, %v5155
    %v5160 = vld [vmem:[#allocation5 + $0x190] sm:$0xff]
    %v5161 = vld [vmem:[#allocation5 + $0x198] sm:$0xff]
    %v5162 = vld [vmem:[#allocation5 + $0x1a0] sm:$0xff]
    %v5163 = vld [vmem:[#allocation5 + $0x1a8] sm:$0xff]
    %v5164 = vperm.slane %v46, 1
    %v5166 = vsel %vm142, %v5156, 0
    %v5169 = vsel %vm142, %v5157, 0
    %v5172 = vsel %vm142, %v5158, 0
    %v5175 = vsel %vm142, %v5159, 0
    %5177 = vmatpush.msra.mxu0 0.0
    %5178 = vmatpush.msra.mxu0 0.0
    %5179 = vmatpush.msra.mxu0 0.0
    %5180 = vmatpush.msra.mxu0 0.0
    %5181 = vmatpush.msra.mxu0 0.0
    %5182 = vmatpush.msra.mxu0 0.0
    %5183 = vmatpush.msra.mxu0 0.0
    %5184 = vmatpush.msra.mxu0 0.0
    %5185 = vmatpush.msra.mxu0 0.0
    %5186 = vmatpush.msra.mxu0 0.0
    %5187 = vmatpush.msra.mxu0 0.0
    %5188 = vmatpush.msra.mxu0 0.0
    %5189 = vmatpush.msra.mxu0 %v5163
    %5190 = vmatpush.msra.mxu0 %v5162
    %5191 = vmatpush.msra.mxu0 %v5161
    %5192 = vmatpush.msra.mxu0 %v5160
    %5193 = vmatmul.f32.gmra.mxu0 %v5166
    %v5194 = vpop.f32.mrf.mxu0
    %v5195 = vadd.f32 %v5164, %v5194
    %5196 = vmatmul.f32.gmra.mxu0 %v5169
    %v5197 = vpop.f32.mrf.mxu0
    %v5198 = vadd.f32 %v5164, %v5197
    %5199 = vmatmul.f32.gmra.mxu0 %v5172
    %v5200 = vpop.f32.mrf.mxu0
    %v5201 = vadd.f32 %v5164, %v5200
    %5202 = vmatmul.f32.gmra.mxu0 %v5175
    %v5203 = vpop.f32.mrf.mxu0
    %v5204 = vadd.f32 %v5164, %v5203
    %5205 = vdwg.mxu0
    %5206 = vst [vmem:[#allocation7] sm:$0xff] %v5195
    %5207 = vst [vmem:[#allocation7 + $0x8] sm:$0xff] %v5198
    %5208 = vst [vmem:[#allocation7 + $0x10] sm:$0xff] %v5201
    %5209 = vst [vmem:[#allocation7 + $0x18] sm:$0xff] %v5204
    // Predicated region
    $region18: #{tpu_custom_call.1} parent=1 // pred_check
      _
    $region19: #{tpu_custom_call.1} parent=1 // pred_check_branch
      %5211 = sbr.rel (0) target = $region21
    $region20: #{tpu_custom_call.1} parent=1 // pred_region
      %5213 = vsyncadd [#allocation4], 0
      %s5214 = sshll.u32 [#allocation7], 4
      %s5215 = int_to_ptr.vmem [resolvable:$true] %s5214
      %s5216 = sshll.u32 %s2, 4
      %s5217 = int_to_ptr.hbm [resolvable:$true] %s5216
      %5222 = dma.vmem_to_hbm [thread:$0]  %s5215, 512, %s5217, [#allocation4], 128, 128, 8
    $region21: #{tpu_custom_call.1} parent=1 // pred_fallthru
      _
    // Predicated region
    $region22: #{tpu_custom_call.1} parent=1 // pred_check
      _
    $region23: #{tpu_custom_call.1} parent=1 // pred_check_branch
      %5224 = sbr.rel (0) target = $region25
    $region24: #{tpu_custom_call.1} parent=1 // pred_region
      %5226 = dma.done [#allocation4], 512
    $region25: #{tpu_custom_call.1} parent=1 // pred_fallthru
      _
    %5227 = vsyncpa [#allocation3], 1
    %5228 = vsyncpa [#allocation6], 1
    %5229 = vsyncpa [#allocation4], 1

</llo_original>
